<compile_context>
chip_gen: v5e
topology: v5e:2x2
jax: 0.10.0
libtpu: 0.0.40
codegen_flags: <defaults>
</compile_context>

<pallas_src>
from functools import partial

import jax
import jax.numpy as jnp
from jax.experimental import pallas as pl
from jax.experimental.pallas import tpu as pltpu

EPS = 1e-6
LANES = 128
COMPUTE_DTYPE = jnp.bfloat16     # matmul operand dtype (accumulation is f32)


def _rmsnorm(x, g):
    # x: [..., D] (any float dtype), g: [1, D] f32 -> f32 result
    x = x.astype(jnp.float32)
    var = jnp.mean(x * x, axis=-1, keepdims=True)
    return x * jax.lax.rsqrt(var + EPS) * g


def _pick_tile(n, target, multiple=16):
    """Largest tile <= target that divides n and is a multiple of `multiple`
    (16 = bf16 sublane tile); falls back to the full extent."""
    if n <= target:
        return n
    start = target - (target % multiple)
    for t in range(start, multiple - 1, -multiple):
        if n % t == 0:
            return t
    return n


def _vmem_budget():
    # Physical VMEM per core: 128 MiB on v5e/v6e, 64 MiB on v7x.
    try:
        return int(pltpu.get_tpu_info().vmem_capacity_bytes)
    except Exception:
        return 64 << 20


def _vmem_limit(est_bytes, budget):
    # Explicit scoped-VMEM limit: cover the estimate with slack, never above
    # what the chip physically has.
    return int(min(max(2 * est_bytes, 32 << 20), max(32 << 20, budget - (8 << 20))))


# ------------------------------------------------------------------
# Kernel 1: RMSNorm(ln_1) + fused QKV projection, N-tiled over 3D
# ------------------------------------------------------------------
def ln1_qkv_kernel(x_ref, ln1w_ref, wqkv_ref, qkv_ref, xln_ref):
    # RMSNorm computed once per sequence tile (n == 0), cached in VMEM as bf16.
    @pl.when(pl.program_id(2) == 0)
    def _():
        xln_ref[...] = _rmsnorm(x_ref[0], ln1w_ref[...]).astype(xln_ref.dtype)

    # One [ts, D] @ [D, tn] MXU pass per output tile of the fused QKV weight.
    qkv_ref[0] = jnp.dot(xln_ref[...], wqkv_ref[...],
                         preferred_element_type=jnp.float32).astype(qkv_ref.dtype)


def ln1_qkv(x, ln1_w, wqkv):
    B, S, D = x.shape
    D3 = wqkv.shape[-1]
    budget = _vmem_budget()
    wb = wqkv.dtype.itemsize

    def est(ts, tn):
        return (2 * (ts * D * 4            # x block (f32), double-buffered
                     + D * tn * wb         # wqkv N-tile
                     + ts * tn * 2)        # qkv out block (bf16)
                + ts * D * 2               # xln scratch
                + 2 * D * 4)               # ln_1 weight

    cands = [(512, 1024), (512, 512), (256, 512), (256, 256), (128, 256), (128, 128)]
    ts = tn = None
    for ts_t, tn_t in cands:
        ts = _pick_tile(S, ts_t)
        tn = _pick_tile(D3, tn_t, LANES)
        if est(ts, tn) <= 0.7 * budget:
            break

    return pl.pallas_call(
        ln1_qkv_kernel,
        out_shape=jax.ShapeDtypeStruct((B, S, D3), COMPUTE_DTYPE),
        grid_spec=pltpu.PrefetchScalarGridSpec(
            num_scalar_prefetch=0,
            grid=(B, S // ts, D3 // tn),
            in_specs=[
                pl.BlockSpec((1, ts, D), lambda b, si, n: (b, si, 0)),   # x (fetched once per tile)
                pl.BlockSpec((1, D), lambda b, si, n: (0, 0)),           # ln_1 weight
                pl.BlockSpec((D, tn), lambda b, si, n: (0, n)),          # wqkv N-tile
            ],
            out_specs=pl.BlockSpec((1, ts, tn), lambda b, si, n: (b, si, n)),
            scratch_shapes=[pltpu.VMEM((ts, D), COMPUTE_DTYPE)],         # cached RMSNorm
        ),
        compiler_params=pltpu.CompilerParams(
            dimension_semantics=("parallel", "parallel", "arbitrary"),
            vmem_limit_bytes=_vmem_limit(est(ts, tn), budget)),
    )(x, ln1_w, wqkv)


# ------------------------------------------------------------------
# Kernel 2: flash attention + Wo + residual + fused ln_2 / router logits
# ------------------------------------------------------------------
def flash_attn_kernel(x_ref, q_ref, k_ref, v_ref, wo_ref, ln2w_ref, wr_ref,
                      out_ref, logits_ref, m_ref, l_ref, acc_ref,
                      *, n_head, head_dim):
    ki = pl.program_id(2)

    @pl.when(ki == 0)
    def _init():
        m_ref[...] = jnp.full_like(m_ref, -jnp.inf)
        l_ref[...] = jnp.zeros_like(l_ref)
        acc_ref[...] = jnp.zeros_like(acc_ref)

    q = q_ref[0]                       # [tq, D]  bf16, lane-dense
    k = k_ref[0]                       # [tk, D]
    v = v_ref[0]                       # [tk, D]
    scale = 1.0 / (head_dim ** 0.5)
    dnums = (((1,), (1,)), ((), ()))   # contract dim 1 of both operands: Q @ K^T, no .T

    for h in range(n_head):            # static unroll over heads
        sl = slice(h * head_dim, (h + 1) * head_dim)
        s = jax.lax.dot_general(q[:, sl], k[:, sl], dnums,
                                preferred_element_type=jnp.float32) * scale   # [tq, tk]
        m_prev = m_ref[h]                                         # [tq, 128] lane-broadcast
        m_new = jnp.maximum(m_prev, jnp.max(s, axis=-1, keepdims=True))
        alpha = jnp.exp(m_prev - m_new)                           # [tq, 128]
        p = jnp.exp(s - m_new[:, :1])                             # [tq, tk]
        l_ref[h] = alpha * l_ref[h] + jnp.sum(p, axis=-1, keepdims=True)
        a_h = alpha[:, :head_dim] if head_dim <= LANES else alpha[:, :1]
        acc_ref[:, sl] = a_h * acc_ref[:, sl] + jnp.dot(
            p.astype(v.dtype), v[:, sl], preferred_element_type=jnp.float32)
        m_ref[h] = m_new

    @pl.when(ki == pl.num_programs(2) - 1)
    def _finalize():
        # softmax normalization (EUP reciprocal), then ONE full-K=D Wo matmul
        for h in range(n_head):
            sl = slice(h * head_dim, (h + 1) * head_dim)
            inv = pl.reciprocal(l_ref[h], approx=True)
            i_h = inv[:, :head_dim] if head_dim <= LANES else inv[:, :1]
            acc_ref[:, sl] = acc_ref[:, sl] * i_h
        proj = jnp.dot(acc_ref[...].astype(wo_ref.dtype), wo_ref[...],
                       preferred_element_type=jnp.float32)        # [tq, D]
        x_attn = x_ref[0] + proj
        out_ref[0] = x_attn.astype(out_ref.dtype)
        # fused router logits: ln_2 + [tq, D] @ [D, E_pad]  (E padded to 128 lanes)
        x_ln2 = _rmsnorm(x_attn, ln2w_ref[...])
        logits_ref[0] = jnp.dot(x_ln2, wr_ref[...],
                                preferred_element_type=jnp.float32
                                ).astype(logits_ref.dtype)


def attention(x, qkv, wo, ln2_w, w_router_pad, n_head):
    B, S, D = x.shape
    hd = D // n_head
    e_pad = w_router_pad.shape[-1]
    budget = _vmem_budget()

    def est(tq, tk):
        return (2 * (tq * D * 4            # residual x (f32)
                     + tq * D * 2          # Q view (bf16)
                     + 2 * tk * D * 2      # K + V views
                     + D * D * 2           # Wo (bf16)
                     + D * e_pad * 4       # padded router weight (f32)
                     + D * 4               # ln_2 weight
                     + tq * D * 4          # x_attn out (f32)
                     + tq * e_pad * 4)     # logits out
                + 2 * n_head * tq * LANES * 4   # m/l stats (lane-dense)
                + tq * D * 4)                   # attention accumulator

    cands = [(512, 512), (256, 512), (256, 256), (128, 256), (128, 128)]
    tq = tk = None
    for tq_t, tk_t in cands:
        tq = _pick_tile(S, tq_t)
        tk = _pick_tile(S, tk_t)
        if est(tq, tk) <= 0.7 * budget:
            break

    kernel = partial(flash_attn_kernel, n_head=n_head, head_dim=hd)
    return pl.pallas_call(
        kernel,
        out_shape=(jax.ShapeDtypeStruct((B, S, D), x.dtype),        # x_attn (f32)
                   jax.ShapeDtypeStruct((B, S, e_pad), jnp.float32)),  # router logits
        grid_spec=pltpu.PrefetchScalarGridSpec(
            num_scalar_prefetch=0,
            grid=(B, S // tq, S // tk),
            in_specs=[
                pl.BlockSpec((1, tq, D), lambda b, qi, ki: (b, qi, 0)),   # residual x
                pl.BlockSpec((1, tq, D), lambda b, qi, ki: (b, qi, 0)),   # Q view of qkv
                pl.BlockSpec((1, tk, D), lambda b, qi, ki: (b, ki, 1)),   # K view of qkv
                pl.BlockSpec((1, tk, D), lambda b, qi, ki: (b, ki, 2)),   # V view of qkv
                pl.BlockSpec((D, D), lambda b, qi, ki: (0, 0)),           # Wo (bf16)
                pl.BlockSpec((1, D), lambda b, qi, ki: (0, 0)),           # ln_2 weight
                pl.BlockSpec((D, e_pad), lambda b, qi, ki: (0, 0)),       # router weight (padded)
            ],
            out_specs=[
                pl.BlockSpec((1, tq, D), lambda b, qi, ki: (b, qi, 0)),
                pl.BlockSpec((1, tq, e_pad), lambda b, qi, ki: (b, qi, 0)),
            ],
            scratch_shapes=[
                pltpu.VMEM((n_head, tq, LANES), jnp.float32),   # running max (lane-dense)
                pltpu.VMEM((n_head, tq, LANES), jnp.float32),   # running denom (lane-dense)
                pltpu.VMEM((tq, D), jnp.float32),               # lane-dense attn accumulator
            ],
        ),
        compiler_params=pltpu.CompilerParams(
            dimension_semantics=("parallel", "parallel", "arbitrary"),
            vmem_limit_bytes=_vmem_limit(est(tq, tk), budget)),
    )(x, qkv, qkv, qkv, wo, ln2_w, w_router_pad)


# ------------------------------------------------------------------
# Kernel 3: MoE expert group (expert / F-chunk inner axes) + residual
# ------------------------------------------------------------------
def moe_kernel(active_ref, fetch_ref, x_ref, disp_ref, ln2w_ref,
               w1_ref, b1_ref, w2_ref, b2_ref, out_ref, acc_ref, xln_ref):
    t = pl.program_id(0)
    e = pl.program_id(1)
    f = pl.program_id(2)

    @pl.when((e == 0) & (f == 0))
    def _init():
        acc_ref[...] = jnp.zeros_like(acc_ref)
        # ln_2 recomputed in-kernel (VPU work) -> no x_ln2 HBM round trip.
        xln_ref[...] = _rmsnorm(x_ref[...], ln2w_ref[...]).astype(xln_ref.dtype)

    @pl.when(active_ref[t, e] != 0)        # zero-gated experts: no MXU work and
    def _expert():                         # (via index_map) no W1/W2 DMA either
        h = jnp.dot(xln_ref[...], w1_ref[0],
                    preferred_element_type=jnp.float32) + b1_ref[0]    # [tt, ft]
        h = jax.nn.gelu(h, approximate=True)
        y = jnp.dot(h.astype(w2_ref.dtype), w2_ref[0],
                    preferred_element_type=jnp.float32)                # [tt, D]
        y = y + (f == 0).astype(jnp.float32) * b2_ref[0]               # bias once/expert
        disp = disp_ref[...]                                           # [tt, E]
        lane = jax.lax.broadcasted_iota(jnp.int32, disp.shape, 1)
        gate = jnp.sum(jnp.where(lane == e, disp, 0.0),
                       axis=-1, keepdims=True)                         # [tt, 1]
        acc_ref[...] += gate * y

    @pl.when((e == pl.num_programs(1) - 1) & (f == pl.num_programs(2) - 1))
    def _finalize():
        out_ref[...] = (x_ref[...] + acc_ref[...]).astype(out_ref.dtype)


def expert_group(x_attn, dispatch, ln2_w, w1, b1, w2, b2):
    B, S, D = x_attn.shape
    E, _, F = w1.shape
    T = B * S
    budget = _vmem_budget()
    wb = w1.dtype.itemsize

    def est(tt, ft):
        return (2 * (tt * D * 4                  # x tile (f32)
                     + tt * E * 4                # gates
                     + D * 4                     # ln_2 weight
                     + D * ft * wb + ft * 4      # W1 chunk + b1 chunk
                     + ft * D * wb + D * 4       # W2 chunk + b2
                     + tt * D * 4)               # out tile
                + tt * D * 4 + tt * D * 2)       # acc + xln scratch

    cands = [(512, 1024), (512, 512), (256, 512), (256, 256), (128, 256), (128, 128)]
    tt = ft = None
    for tt_t, ft_t in cands:
        tt = _pick_tile(T, tt_t)
        ft = _pick_tile(F, ft_t, LANES)
        if est(tt, ft) <= 0.7 * budget:
            break
    t_tiles = T // tt
    nf = F // ft

    x_flat = x_attn.reshape(T, D)
    disp = dispatch.reshape(T, E).astype(jnp.float32)        # dense [T, E] gates

    # per-(tile, expert) activity flag + carry-forward "resident expert" table,
    # so inactive (tile, expert) steps keep the weight block index unchanged
    # (Pallas skips the DMA when the index_map result does not change).
    active = (disp.reshape(t_tiles, tt, E).max(axis=1) > 0.0).astype(jnp.int32)
    ids = jnp.broadcast_to(jnp.arange(E, dtype=jnp.int32), (t_tiles, E)).reshape(-1)

    def _carry(c, ae):
        a, i = ae
        n = jnp.where(a != 0, i, c)
        return n, n

    _, fetch = jax.lax.scan(_carry, jnp.int32(0), (active.reshape(-1), ids))
    fetch = fetch.reshape(t_tiles, E)

    def w1_map(t, e, f, act, fch):
        a = act[t, e]
        return (fch[t, e], 0, f * a + (nf - 1) * (1 - a))

    def b1_map(t, e, f, act, fch):
        a = act[t, e]
        return (fch[t, e], 0, f * a + (nf - 1) * (1 - a))

    def w2_map(t, e, f, act, fch):
        a = act[t, e]
        return (fch[t, e], f * a + (nf - 1) * (1 - a), 0)

    def b2_map(t, e, f, act, fch):
        return (fch[t, e], 0, 0)

    out = pl.pallas_call(
        moe_kernel,
        out_shape=jax.ShapeDtypeStruct((T, D), x_attn.dtype),
        grid_spec=pltpu.PrefetchScalarGridSpec(
            num_scalar_prefetch=2,                            # active flags + fetch table
            grid=(t_tiles, E, nf),                            # expert / F chunks innermost
            in_specs=[
                pl.BlockSpec((tt, D), lambda t, e, f, act, fch: (t, 0)),   # x (+residual)
                pl.BlockSpec((tt, E), lambda t, e, f, act, fch: (t, 0)),   # all gates: 1 DMA/tile
                pl.BlockSpec((1, D), lambda t, e, f, act, fch: (0, 0)),    # ln_2 weight
                pl.BlockSpec((1, D, ft), w1_map),                          # W1[e] F-chunk (bf16)
                pl.BlockSpec((1, 1, ft), b1_map),                          # b1[e] F-chunk
                pl.BlockSpec((1, ft, D), w2_map),                          # W2[e] F-chunk (bf16)
                pl.BlockSpec((1, 1, D), b2_map),                           # b2[e]
            ],
            out_specs=pl.BlockSpec((tt, D), lambda t, e, f, act, fch: (t, 0)),
            scratch_shapes=[
                pltpu.VMEM((tt, D), jnp.float32),      # expert-sum accumulator
                pltpu.VMEM((tt, D), COMPUTE_DTYPE),    # RMSNorm(ln_2) of the tile
            ],
        ),
        compiler_params=pltpu.CompilerParams(
            dimension_semantics=("parallel", "arbitrary", "arbitrary"),
            vmem_limit_bytes=_vmem_limit(est(tt, ft), budget)),
    )(active, fetch, x_flat, disp, ln2_w, w1, b1, w2, b2)
    return out.reshape(B, S, D)


# ------------------------------------------------------------------
# Router glue (top-k selection / losses) — plain JAX, tiny work (E << 128).
# ------------------------------------------------------------------
def router(logits, num_experts, k, z_loss_coef=0.001):
    probs = jax.nn.softmax(logits, axis=-1)                     # [B, S, E]
    top_v, top_i = jax.lax.top_k(probs, k)
    top_v = top_v / jnp.sum(top_v, axis=-1, keepdims=True)
    one_hot = jax.nn.one_hot(top_i, num_experts, dtype=probs.dtype)
    dispatch = jnp.sum(one_hot * top_v[..., None], axis=-2)     # [B, S, E]
    frac = jnp.mean(jnp.sum(one_hot, axis=-2), axis=(0, 1)) / k
    pmean = jnp.mean(probs, axis=(0, 1))
    aux_loss = num_experts * jnp.sum(frac * pmean)
    z = jax.nn.logsumexp(logits, axis=-1)
    z_loss = z_loss_coef * jnp.mean(z * z)
    return probs, dispatch, aux_loss + z_loss


# ------------------------------------------------------------------
# Full block forward
# ------------------------------------------------------------------
def llada_block_forward(x, params, *, n_head, num_experts, top_k):
    B, S, D = x.shape
    hd = D // n_head
    e_pad = ((num_experts + LANES - 1) // LANES) * LANES

    # 1) ln_1 + fused QKV projection (N-tiled), bf16 lane-dense [B, S, 3D]
    qkv = ln1_qkv(x, params["ln1_w"], params["wqkv"])

    # router weight padded to a full 128-lane slab for the fused logits matmul
    wr_pad = jnp.zeros((D, e_pad), jnp.float32).at[:, :num_experts].set(
        params["w_router"])

    # 2) flash attention + Wo + residual + fused ln_2 / router logits (Pallas)
    x_attn, logits_pad = attention(x, qkv, params["wo"], params["ln2_w"],
                                   wr_pad, n_head)
    logits = logits_pad[..., :num_experts]

    # 3) router top-k / losses: tiny work, stays in plain JAX
    _, dispatch_mask, router_loss = router(logits, num_experts, top_k)

    # 4) MoE expert group + residual (Pallas; ln_2 recomputed in-kernel,
    #    inactive experts skip both MXU work and the weight DMA)
    out = expert_group(x_attn, dispatch_mask, params["ln2_w"],
                       params["w1"], params["b1"], params["w2"], params["b2"])

    # present_key_value in [B, n_head, S, head_dim]
    # TODO(synk): write K/V head-major directly from K1 to skip this HBM pass.
    k_cache = qkv[..., D:2 * D].reshape(B, S, n_head, hd).transpose(0, 2, 1, 3)
    v_cache = qkv[..., 2 * D:].reshape(B, S, n_head, hd).transpose(0, 2, 1, 3)
    return out, router_loss, (k_cache, v_cache)


# ------------------------------------------------------------------
# Pure-JAX reference (same math, direct softmax / dense experts) for sanity.
# ------------------------------------------------------------------
def llada_block_reference(x, params, *, n_head, num_experts, top_k):
    f32 = lambda a: a.astype(jnp.float32)
    B, S, D = x.shape
    hd = D // n_head
    x_ln1 = _rmsnorm(x, params["ln1_w"])
    qkv = jnp.dot(x_ln1, f32(params["wqkv"]))
    q, k, v = jnp.split(qkv, 3, axis=-1)
    qh = q.reshape(B, S, n_head, hd).transpose(0, 2, 1, 3)
    kh = k.reshape(B, S, n_head, hd).transpose(0, 2, 1, 3)
    vh = v.reshape(B, S, n_head, hd).transpose(0, 2, 1, 3)
    s = jnp.einsum("bhqd,bhkd->bhqk", qh, kh) / (hd ** 0.5)
    p = jax.nn.softmax(s, axis=-1)
    o = jnp.einsum("bhqk,bhkd->bhqd", p, vh)
    o = o.transpose(0, 2, 1, 3).reshape(B, S, D)
    x_attn = x + jnp.dot(o, f32(params["wo"]))

    x_ln2 = _rmsnorm(x_attn, params["ln2_w"])
    logits = jnp.dot(x_ln2, params["w_router"])
    _, dispatch, loss = router(logits, num_experts, top_k)

    expert_out = jnp.zeros_like(x_attn)
    for e in range(num_experts):
        h = jax.nn.gelu(jnp.dot(x_ln2, f32(params["w1"][e])) + params["b1"][e],
                        approximate=True)
        y = jnp.dot(h, f32(params["w2"][e])) + params["b2"][e]
        expert_out = expert_out + dispatch[..., e:e + 1] * y
    return x_attn + expert_out, loss, (kh, vh)


def init_params(key, D, n_head, num_experts, ffn_dim):
    ks = jax.random.split(key, 5)
    s = 0.02
    bf = COMPUTE_DTYPE
    return {
        "ln1_w": jnp.ones((1, D), jnp.float32),
        "ln2_w": jnp.ones((1, D), jnp.float32),
        # Wq | Wk | Wv fused into one [D, 3D] weight (single N-tiled MXU stream in K1)
        "wqkv": (s * jax.random.normal(ks[0], (D, 3 * D), jnp.float32)).astype(bf),
        "wo": (s * jax.random.normal(ks[1], (D, D), jnp.float32)).astype(bf),
        # larger router scale keeps top-k decisive (well-separated logits)
        "w_router": 0.2 * jax.random.normal(ks[2], (D, num_experts), jnp.float32),
        "w1": (s * jax.random.normal(ks[3], (num_experts, D, ffn_dim),
                                     jnp.float32)).astype(bf),
        "b1": jnp.zeros((num_experts, 1, ffn_dim), jnp.float32),
        "w2": (s * jax.random.normal(ks[4], (num_experts, ffn_dim, D),
                                     jnp.float32)).astype(bf),
        "b2": jnp.zeros((num_experts, 1, D), jnp.float32),
    }


if __name__ == "__main__":
    B, S, D = 2, 16, 128        # batch, seq_len, n_embd (D=128 keeps lane tiling exact)
    N_HEAD = 4                  # head_dim = 32
    NUM_EXPERTS, TOP_K = 4, 2
    FFN_DIM = 256

    key = jax.random.PRNGKey(0)
    k_x, k_p = jax.random.split(key)
    x = jax.random.normal(k_x, (B, S, D), jnp.float32)
    params = init_params(k_p, D, N_HEAD, NUM_EXPERTS, FFN_DIM)

    fwd = jax.jit(partial(llada_block_forward, n_head=N_HEAD,
                          num_experts=NUM_EXPERTS, top_k=TOP_K))
    out, router_loss, (k_cache, v_cache) = fwd(x, params)
    jax.block_until_ready((out, router_loss, k_cache, v_cache))

    # sanity vs pure-JAX reference (loose tol: bf16 operands with f32 accum,
    # flash-softmax reordering, approx reciprocal on the EUP)
    ref_out, ref_loss, (ref_k, ref_v) = llada_block_reference(
        x, params, n_head=N_HEAD, num_experts=NUM_EXPERTS, top_k=TOP_K)

    assert out.shape == (B, S, D)
    assert k_cache.shape == (B, N_HEAD, S, D // N_HEAD)
    assert jnp.isfinite(out).all() and jnp.isfinite(router_loss)
    assert jnp.allclose(out, ref_out, rtol=3e-2, atol=3e-2)
    assert jnp.allclose(k_cache.astype(jnp.float32), ref_k, rtol=5e-2, atol=1e-2)
    assert jnp.allclose(v_cache.astype(jnp.float32), ref_v, rtol=5e-2, atol=1e-2)
    assert jnp.allclose(router_loss, ref_loss, rtol=3e-2, atol=3e-2)
    print("KERNEL_OK")
</pallas_src>

<mosaic_0001>
module attributes {stable_mosaic.version = 11 : i64} {
  func.func @ln1_qkv_kernel(%arg0: i32, %arg1: i32, %arg2: i32, %arg3: memref<1x16x128xf32, #tpu.memory_space<vmem>>, %arg4: memref<1x128xf32, #tpu.memory_space<vmem>>, %arg5: memref<128x384xbf16, #tpu.memory_space<vmem>>, %arg6: memref<1x16x384xbf16, #tpu.memory_space<vmem>>, %arg7: memref<16x128xbf16, #tpu.memory_space<vmem>>) attributes {dimension_semantics = [#tpu.dimension_semantics<parallel>, #tpu.dimension_semantics<parallel>, #tpu.dimension_semantics<arbitrary>], iteration_bounds = array<i64: 2, 1, 1>, scalar_prefetch = 0 : i64, scratch_operands = 1 : i64, tpu.core_type = #tpu.core_type<tc>, window_params = [{transform_indices = @transform_0, window_bounds = array<i64: 1, 16, 128>}, {pipeline_mode = #tpu.pipeline_mode<synchronous>, transform_indices = @transform_1, window_bounds = array<i64: 1, 128>}, {transform_indices = @transform_2, window_bounds = array<i64: 128, 384>}, {transform_indices = @transform_3, window_bounds = array<i64: 1, 16, 384>}]} {
    %c0_i32 = arith.constant 0 : i32
    %0 = arith.cmpi eq, %arg2, %c0_i32 : i32
    %1 = arith.extui %0 : i1 to i32
    %c0_i32_0 = arith.constant 0 : i32
    %2 = arith.cmpi ne, %1, %c0_i32_0 : i32
    scf.if %2 {
      %c0_7 = arith.constant 0 : index
      %c0_8 = arith.constant 0 : index
      %c0_9 = arith.constant 0 : index
      %10 = vector.load %arg3[%c0_7, %c0_8, %c0_9] : memref<1x16x128xf32, #tpu.memory_space<vmem>>, vector<1x16x128xf32>
      %11 = vector.shape_cast %10 : vector<1x16x128xf32> to vector<16x128xf32>
      %c0_10 = arith.constant 0 : index
      %c0_11 = arith.constant 0 : index
      %12 = vector.load %arg4[%c0_10, %c0_11] : memref<1x128xf32, #tpu.memory_space<vmem>>, vector<1x128xf32>
      %13 = arith.mulf %11, %11 : vector<16x128xf32>
      %cst_12 = arith.constant dense<0.000000e+00> : vector<16xf32>
      %14 = vector.multi_reduction <add>, %13, %cst_12 [1] : vector<16x128xf32> to vector<16xf32>
      %15 = vector.shape_cast %14 : vector<16xf32> to vector<16x1xf32>
      %cst_13 = arith.constant 1.280000e+02 : f32
      %16 = vector.broadcast %cst_13 : f32 to vector<16x1xf32>
      %17 = arith.divf %15, %16 : vector<16x1xf32>
      %cst_14 = arith.constant 9.99999997E-7 : f32
      %18 = vector.broadcast %cst_14 : f32 to vector<16x1xf32>
      %19 = arith.addf %17, %18 : vector<16x1xf32>
      %20 = math.rsqrt %19 : vector<16x1xf32>
      %21 = vector.broadcast %20 : vector<16x1xf32> to vector<16x128xf32>
      %22 = arith.mulf %11, %21 : vector<16x128xf32>
      %23 = vector.broadcast %12 : vector<1x128xf32> to vector<16x128xf32>
      %24 = arith.mulf %22, %23 : vector<16x128xf32>
      %25 = arith.truncf %24 : vector<16x128xf32> to vector<16x128xbf16>
      %c0_15 = arith.constant 0 : index
      %c0_16 = arith.constant 0 : index
      %26 = vector.load %arg7[%c0_15, %c0_16] : memref<16x128xbf16, #tpu.memory_space<vmem>>, vector<16x128xbf16>
      tpu.vector_store %arg7[%c0_15, %c0_16], %25 {strides = array<i32>} : memref<16x128xbf16, #tpu.memory_space<vmem>>, vector<16x128xbf16>,
    } else {
    }
    %c0 = arith.constant 0 : index
    %c0_1 = arith.constant 0 : index
    %3 = vector.load %arg7[%c0, %c0_1] : memref<16x128xbf16, #tpu.memory_space<vmem>>, vector<16x128xbf16>
    %c0_2 = arith.constant 0 : index
    %c0_3 = arith.constant 0 : index
    %4 = vector.load %arg5[%c0_2, %c0_3] : memref<128x384xbf16, #tpu.memory_space<vmem>>, vector<128x384xbf16>
    %cst = arith.constant dense<0.000000e+00> : vector<16x384xf32>
    %5 = tpu.matmul %3, %4, %cst {dimension_numbers = #tpu.dot_dimension_numbers<[1], [0], [0], [1], [0, 0, 1, 1], [], []>} : vector<16x128xbf16>, vector<128x384xbf16>, vector<16x384xf32> -> vector<16x384xf32>
    %6 = arith.truncf %5 : vector<16x384xf32> to vector<16x384xbf16>
    %c0_4 = arith.constant 0 : index
    %c0_5 = arith.constant 0 : index
    %c0_6 = arith.constant 0 : index
    %7 = vector.load %arg6[%c0_4, %c0_5, %c0_6] : memref<1x16x384xbf16, #tpu.memory_space<vmem>>, vector<1x16x384xbf16>
    %8 = vector.shape_cast %7 : vector<1x16x384xbf16> to vector<16x384xbf16>
    %9 = vector.shape_cast %6 : vector<16x384xbf16> to vector<1x16x384xbf16>
    tpu.vector_store %arg6[%c0_4, %c0_5, %c0_6], %9 {strides = array<i32>} : memref<1x16x384xbf16, #tpu.memory_space<vmem>>, vector<1x16x384xbf16>,
    return
  }
  func.func @transform_0(%arg0: i32, %arg1: i32, %arg2: i32) -> (i32, i32, i32) {
    %c0_i32 = arith.constant 0 : i32
    %c0_i32_0 = arith.constant 0 : i32
    return %arg0, %arg1, %c0_i32 : i32, i32, i32
  }
  func.func @transform_1(%arg0: i32, %arg1: i32, %arg2: i32) -> (i32, i32) {
    %c0_i32 = arith.constant 0 : i32
    %c0_i32_0 = arith.constant 0 : i32
    %c0_i32_1 = arith.constant 0 : i32
    return %c0_i32, %c0_i32_0 : i32, i32
  }
  func.func @transform_2(%arg0: i32, %arg1: i32, %arg2: i32) -> (i32, i32) {
    %c0_i32 = arith.constant 0 : i32
    %c0_i32_0 = arith.constant 0 : i32
    return %c0_i32, %arg2 : i32, i32
  }
  func.func @transform_3(%arg0: i32, %arg1: i32, %arg2: i32) -> (i32, i32, i32) {
    %c0_i32 = arith.constant 0 : i32
    return %arg0, %arg1, %arg2 : i32, i32, i32
  }
}

module attributes {stable_mosaic.version = 11 : i64} {
  func.func @flash_attn_kernel(%arg0: i32, %arg1: i32, %arg2: i32, %arg3: memref<1x16x128xf32, #tpu.memory_space<vmem>>, %arg4: memref<1x16x128xbf16, #tpu.memory_space<vmem>>, %arg5: memref<1x16x128xbf16, #tpu.memory_space<vmem>>, %arg6: memref<1x16x128xbf16, #tpu.memory_space<vmem>>, %arg7: memref<128x128xbf16, #tpu.memory_space<vmem>>, %arg8: memref<1x128xf32, #tpu.memory_space<vmem>>, %arg9: memref<128x128xf32, #tpu.memory_space<vmem>>, %arg10: memref<1x16x128xf32, #tpu.memory_space<vmem>>, %arg11: memref<1x16x128xf32, #tpu.memory_space<vmem>>, %arg12: memref<4x16x128xf32, #tpu.memory_space<vmem>>, %arg13: memref<4x16x128xf32, #tpu.memory_space<vmem>>, %arg14: memref<16x128xf32, #tpu.memory_space<vmem>>) attributes {dimension_semantics = [#tpu.dimension_semantics<parallel>, #tpu.dimension_semantics<parallel>, #tpu.dimension_semantics<arbitrary>], iteration_bounds = array<i64: 2, 1, 1>, scalar_prefetch = 0 : i64, scratch_operands = 3 : i64, tpu.core_type = #tpu.core_type<tc>, window_params = [{transform_indices = @transform_0, window_bounds = array<i64: 1, 16, 128>}, {transform_indices = @transform_1, window_bounds = array<i64: 1, 16, 128>}, {transform_indices = @transform_2, window_bounds = array<i64: 1, 16, 128>}, {transform_indices = @transform_3, window_bounds = array<i64: 1, 16, 128>}, {pipeline_mode = #tpu.pipeline_mode<synchronous>, transform_indices = @transform_4, window_bounds = array<i64: 128, 128>}, {pipeline_mode = #tpu.pipeline_mode<synchronous>, transform_indices = @transform_5, window_bounds = array<i64: 1, 128>}, {pipeline_mode = #tpu.pipeline_mode<synchronous>, transform_indices = @transform_6, window_bounds = array<i64: 128, 128>}, {transform_indices = @transform_7, window_bounds = array<i64: 1, 16, 128>}, {transform_indices = @transform_8, window_bounds = array<i64: 1, 16, 128>}]} {
    %c0_i32 = arith.constant 0 : i32
    %0 = arith.cmpi eq, %arg2, %c0_i32 : i32
    %1 = arith.extui %0 : i1 to i32
    %c0_i32_0 = arith.constant 0 : i32
    %2 = arith.cmpi ne, %1, %c0_i32_0 : i32
    scf.if %2 {
      %cst_88 = arith.constant 0xFF800000 : f32
      %164 = vector.broadcast %cst_88 : f32 to vector<4x16x128xf32>
      %c0_89 = arith.constant 0 : index
      %c0_90 = arith.constant 0 : index
      %c0_91 = arith.constant 0 : index
      %165 = vector.load %arg12[%c0_89, %c0_90, %c0_91] : memref<4x16x128xf32, #tpu.memory_space<vmem>>, vector<4x16x128xf32>
      tpu.vector_store %arg12[%c0_89, %c0_90, %c0_91], %164 {strides = array<i32>} : memref<4x16x128xf32, #tpu.memory_space<vmem>>, vector<4x16x128xf32>,
      %cst_92 = arith.constant 0.000000e+00 : f32
      %166 = vector.broadcast %cst_92 : f32 to vector<4x16x128xf32>
      %c0_93 = arith.constant 0 : index
      %c0_94 = arith.constant 0 : index
      %c0_95 = arith.constant 0 : index
      %167 = vector.load %arg13[%c0_93, %c0_94, %c0_95] : memref<4x16x128xf32, #tpu.memory_space<vmem>>, vector<4x16x128xf32>
      tpu.vector_store %arg13[%c0_93, %c0_94, %c0_95], %166 {strides = array<i32>} : memref<4x16x128xf32, #tpu.memory_space<vmem>>, vector<4x16x128xf32>,
      %cst_96 = arith.constant 0.000000e+00 : f32
      %168 = vector.broadcast %cst_96 : f32 to vector<16x128xf32>
      %c0_97 = arith.constant 0 : index
      %c0_98 = arith.constant 0 : index
      %169 = vector.load %arg14[%c0_97, %c0_98] : memref<16x128xf32, #tpu.memory_space<vmem>>, vector<16x128xf32>
      tpu.vector_store %arg14[%c0_97, %c0_98], %168 {strides = array<i32>} : memref<16x128xf32, #tpu.memory_space<vmem>>, vector<16x128xf32>,
    } else {
    }
    %c0 = arith.constant 0 : index
    %c0_1 = arith.constant 0 : index
    %c0_2 = arith.constant 0 : index
    %3 = vector.load %arg4[%c0, %c0_1, %c0_2] : memref<1x16x128xbf16, #tpu.memory_space<vmem>>, vector<1x16x128xbf16>
    %4 = vector.shape_cast %3 : vector<1x16x128xbf16> to vector<16x128xbf16>
    %c0_3 = arith.constant 0 : index
    %c0_4 = arith.constant 0 : index
    %c0_5 = arith.constant 0 : index
    %5 = vector.load %arg5[%c0_3, %c0_4, %c0_5] : memref<1x16x128xbf16, #tpu.memory_space<vmem>>, vector<1x16x128xbf16>
    %6 = vector.shape_cast %5 : vector<1x16x128xbf16> to vector<16x128xbf16>
    %c0_6 = arith.constant 0 : index
    %c0_7 = arith.constant 0 : index
    %c0_8 = arith.constant 0 : index
    %7 = vector.load %arg6[%c0_6, %c0_7, %c0_8] : memref<1x16x128xbf16, #tpu.memory_space<vmem>>, vector<1x16x128xbf16>
    %8 = vector.shape_cast %7 : vector<1x16x128xbf16> to vector<16x128xbf16>
    %9 = vector.extract_strided_slice %4 {offsets = [0, 0], sizes = [16, 32], strides = [1, 1]} : vector<16x128xbf16> to vector<16x32xbf16>
    %10 = vector.extract_strided_slice %6 {offsets = [0, 0], sizes = [16, 32], strides = [1, 1]} : vector<16x128xbf16> to vector<16x32xbf16>
    %cst = arith.constant dense<0.000000e+00> : vector<16x16xf32>
    %11 = tpu.matmul %9, %10, %cst {dimension_numbers = #tpu.dot_dimension_numbers<[1], [1], [0], [0], [0, 0, 1, 0], [], []>} : vector<16x32xbf16>, vector<16x32xbf16>, vector<16x16xf32> -> vector<16x16xf32>
    %cst_9 = arith.constant 0.176776692 : f32
    %12 = vector.broadcast %cst_9 : f32 to vector<16x16xf32>
    %13 = arith.mulf %11, %12 : vector<16x16xf32>
    %c0_10 = arith.constant 0 : index
    %c0_11 = arith.constant 0 : index
    %c0_12 = arith.constant 0 : index
    %14 = vector.load %arg12[%c0_10, %c0_11, %c0_12] : memref<4x16x128xf32, #tpu.memory_space<vmem>>, vector<1x16x128xf32>
    %15 = vector.shape_cast %14 : vector<1x16x128xf32> to vector<16x128xf32>
    %cst_13 = arith.constant dense<0xFF800000> : vector<16xf32>
    %16 = vector.multi_reduction <maximumf>, %13, %cst_13 [1] : vector<16x16xf32> to vector<16xf32>
    %17 = vector.shape_cast %16 : vector<16xf32> to vector<16x1xf32>
    %18 = vector.broadcast %17 : vector<16x1xf32> to vector<16x128xf32>
    %19 = arith.maximumf %15, %18 : vector<16x128xf32>
    %20 = arith.subf %15, %19 : vector<16x128xf32>
    %21 = math.exp %20 : vector<16x128xf32>
    %22 = vector.extract_strided_slice %19 {offsets = [0, 0], sizes = [16, 1], strides = [1, 1]} : vector<16x128xf32> to vector<16x1xf32>
    %23 = vector.broadcast %22 : vector<16x1xf32> to vector<16x16xf32>
    %24 = arith.subf %13, %23 : vector<16x16xf32>
    %25 = math.exp %24 : vector<16x16xf32>
    %c0_14 = arith.constant 0 : index
    %c0_15 = arith.constant 0 : index
    %c0_16 = arith.constant 0 : index
    %26 = vector.load %arg13[%c0_14, %c0_15, %c0_16] : memref<4x16x128xf32, #tpu.memory_space<vmem>>, vector<1x16x128xf32>
    %27 = vector.shape_cast %26 : vector<1x16x128xf32> to vector<16x128xf32>
    %28 = arith.mulf %21, %27 : vector<16x128xf32>
    %cst_17 = arith.constant dense<0.000000e+00> : vector<16xf32>
    %29 = vector.multi_reduction <add>, %25, %cst_17 [1] : vector<16x16xf32> to vector<16xf32>
    %30 = vector.shape_cast %29 : vector<16xf32> to vector<16x1xf32>
    %31 = vector.broadcast %30 : vector<16x1xf32> to vector<16x128xf32>
    %32 = arith.addf %28, %31 : vector<16x128xf32>
    %c0_18 = arith.constant 0 : index
    %c0_19 = arith.constant 0 : index
    %c0_20 = arith.constant 0 : index
    %33 = vector.load %arg13[%c0_18, %c0_19, %c0_20] : memref<4x16x128xf32, #tpu.memory_space<vmem>>, vector<1x16x128xf32>
    %34 = vector.shape_cast %33 : vector<1x16x128xf32> to vector<16x128xf32>
    %35 = vector.shape_cast %32 : vector<16x128xf32> to vector<1x16x128xf32>
    tpu.vector_store %arg13[%c0_18, %c0_19, %c0_20], %35 {strides = array<i32>} : memref<4x16x128xf32, #tpu.memory_space<vmem>>, vector<1x16x128xf32>,
    %36 = vector.extract_strided_slice %21 {offsets = [0, 0], sizes = [16, 32], strides = [1, 1]} : vector<16x128xf32> to vector<16x32xf32>
    %c0_21 = arith.constant 0 : index
    %c0_22 = arith.constant 0 : index
    %37 = vector.load %arg14[%c0_21, %c0_22] : memref<16x128xf32, #tpu.memory_space<vmem>>, vector<16x32xf32>
    %38 = arith.mulf %36, %37 : vector<16x32xf32>
    %39 = arith.truncf %25 : vector<16x16xf32> to vector<16x16xbf16>
    %40 = vector.extract_strided_slice %8 {offsets = [0, 0], sizes = [16, 32], strides = [1, 1]} : vector<16x128xbf16> to vector<16x32xbf16>
    %cst_23 = arith.constant dense<0.000000e+00> : vector<16x32xf32>
    %41 = tpu.matmul %39, %40, %cst_23 {dimension_numbers = #tpu.dot_dimension_numbers<[1], [0], [0], [1], [0, 0, 1, 1], [], []>} : vector<16x16xbf16>, vector<16x32xbf16>, vector<16x32xf32> -> vector<16x32xf32>
    %42 = arith.addf %38, %41 : vector<16x32xf32>
    %c0_24 = arith.constant 0 : index
    %c0_25 = arith.constant 0 : index
    %43 = vector.load %arg14[%c0_24, %c0_25] : memref<16x128xf32, #tpu.memory_space<vmem>>, vector<16x32xf32>
    tpu.vector_store %arg14[%c0_24, %c0_25], %42 {strides = array<i32>} : memref<16x128xf32, #tpu.memory_space<vmem>>, vector<16x32xf32>,
    %c0_26 = arith.constant 0 : index
    %c0_27 = arith.constant 0 : index
    %c0_28 = arith.constant 0 : index
    %44 = vector.load %arg12[%c0_26, %c0_27, %c0_28] : memref<4x16x128xf32, #tpu.memory_space<vmem>>, vector<1x16x128xf32>
    %45 = vector.shape_cast %44 : vector<1x16x128xf32> to vector<16x128xf32>
    %46 = vector.shape_cast %19 : vector<16x128xf32> to vector<1x16x128xf32>
    tpu.vector_store %arg12[%c0_26, %c0_27, %c0_28], %46 {strides = array<i32>} : memref<4x16x128xf32, #tpu.memory_space<vmem>>, vector<1x16x128xf32>,
    %47 = vector.extract_strided_slice %4 {offsets = [0, 32], sizes = [16, 32], strides = [1, 1]} : vector<16x128xbf16> to vector<16x32xbf16>
    %48 = vector.extract_strided_slice %6 {offsets = [0, 32], sizes = [16, 32], strides = [1, 1]} : vector<16x128xbf16> to vector<16x32xbf16>
    %cst_29 = arith.constant dense<0.000000e+00> : vector<16x16xf32>
    %49 = tpu.matmul %47, %48, %cst_29 {dimension_numbers = #tpu.dot_dimension_numbers<[1], [1], [0], [0], [0, 0, 1, 0], [], []>} : vector<16x32xbf16>, vector<16x32xbf16>, vector<16x16xf32> -> vector<16x16xf32>
    %cst_30 = arith.constant 0.176776692 : f32
    %50 = vector.broadcast %cst_30 : f32 to vector<16x16xf32>
    %51 = arith.mulf %49, %50 : vector<16x16xf32>
    %c1 = arith.constant 1 : index
    %c0_31 = arith.constant 0 : index
    %c0_32 = arith.constant 0 : index
    %52 = vector.load %arg12[%c1, %c0_31, %c0_32] : memref<4x16x128xf32, #tpu.memory_space<vmem>>, vector<1x16x128xf32>
    %53 = vector.shape_cast %52 : vector<1x16x128xf32> to vector<16x128xf32>
    %cst_33 = arith.constant dense<0xFF800000> : vector<16xf32>
    %54 = vector.multi_reduction <maximumf>, %51, %cst_33 [1] : vector<16x16xf32> to vector<16xf32>
    %55 = vector.shape_cast %54 : vector<16xf32> to vector<16x1xf32>
    %56 = vector.broadcast %55 : vector<16x1xf32> to vector<16x128xf32>
    %57 = arith.maximumf %53, %56 : vector<16x128xf32>
    %58 = arith.subf %53, %57 : vector<16x128xf32>
    %59 = math.exp %58 : vector<16x128xf32>
    %60 = vector.extract_strided_slice %57 {offsets = [0, 0], sizes = [16, 1], strides = [1, 1]} : vector<16x128xf32> to vector<16x1xf32>
    %61 = vector.broadcast %60 : vector<16x1xf32> to vector<16x16xf32>
    %62 = arith.subf %51, %61 : vector<16x16xf32>
    %63 = math.exp %62 : vector<16x16xf32>
    %c1_34 = arith.constant 1 : index
    %c0_35 = arith.constant 0 : index
    %c0_36 = arith.constant 0 : index
    %64 = vector.load %arg13[%c1_34, %c0_35, %c0_36] : memref<4x16x128xf32, #tpu.memory_space<vmem>>, vector<1x16x128xf32>
    %65 = vector.shape_cast %64 : vector<1x16x128xf32> to vector<16x128xf32>
    %66 = arith.mulf %59, %65 : vector<16x128xf32>
    %cst_37 = arith.constant dense<0.000000e+00> : vector<16xf32>
    %67 = vector.multi_reduction <add>, %63, %cst_37 [1] : vector<16x16xf32> to vector<16xf32>
    %68 = vector.shape_cast %67 : vector<16xf32> to vector<16x1xf32>
    %69 = vector.broadcast %68 : vector<16x1xf32> to vector<16x128xf32>
    %70 = arith.addf %66, %69 : vector<16x128xf32>
    %c1_38 = arith.constant 1 : index
    %c0_39 = arith.constant 0 : index
    %c0_40 = arith.constant 0 : index
    %71 = vector.load %arg13[%c1_38, %c0_39, %c0_40] : memref<4x16x128xf32, #tpu.memory_space<vmem>>, vector<1x16x128xf32>
    %72 = vector.shape_cast %71 : vector<1x16x128xf32> to vector<16x128xf32>
    %73 = vector.shape_cast %70 : vector<16x128xf32> to vector<1x16x128xf32>
    tpu.vector_store %arg13[%c1_38, %c0_39, %c0_40], %73 {strides = array<i32>} : memref<4x16x128xf32, #tpu.memory_space<vmem>>, vector<1x16x128xf32>,
    %74 = vector.extract_strided_slice %59 {offsets = [0, 0], sizes = [16, 32], strides = [1, 1]} : vector<16x128xf32> to vector<16x32xf32>
    %c0_41 = arith.constant 0 : index
    %c32 = arith.constant 32 : index
    %75 = vector.load %arg14[%c0_41, %c32] : memref<16x128xf32, #tpu.memory_space<vmem>>, vector<16x32xf32>
    %76 = arith.mulf %74, %75 : vector<16x32xf32>
    %77 = arith.truncf %63 : vector<16x16xf32> to vector<16x16xbf16>
    %78 = vector.extract_strided_slice %8 {offsets = [0, 32], sizes = [16, 32], strides = [1, 1]} : vector<16x128xbf16> to vector<16x32xbf16>
    %cst_42 = arith.constant dense<0.000000e+00> : vector<16x32xf32>
    %79 = tpu.matmul %77, %78, %cst_42 {dimension_numbers = #tpu.dot_dimension_numbers<[1], [0], [0], [1], [0, 0, 1, 1], [], []>} : vector<16x16xbf16>, vector<16x32xbf16>, vector<16x32xf32> -> vector<16x32xf32>
    %80 = arith.addf %76, %79 : vector<16x32xf32>
    %c0_43 = arith.constant 0 : index
    %c32_44 = arith.constant 32 : index
    %81 = vector.load %arg14[%c0_43, %c32_44] : memref<16x128xf32, #tpu.memory_space<vmem>>, vector<16x32xf32>
    tpu.vector_store %arg14[%c0_43, %c32_44], %80 {strides = array<i32>} : memref<16x128xf32, #tpu.memory_space<vmem>>, vector<16x32xf32>,
    %c1_45 = arith.constant 1 : index
    %c0_46 = arith.constant 0 : index
    %c0_47 = arith.constant 0 : index
    %82 = vector.load %arg12[%c1_45, %c0_46, %c0_47] : memref<4x16x128xf32, #tpu.memory_space<vmem>>, vector<1x16x128xf32>
    %83 = vector.shape_cast %82 : vector<1x16x128xf32> to vector<16x128xf32>
    %84 = vector.shape_cast %57 : vector<16x128xf32> to vector<1x16x128xf32>
    tpu.vector_store %arg12[%c1_45, %c0_46, %c0_47], %84 {strides = array<i32>} : memref<4x16x128xf32, #tpu.memory_space<vmem>>, vector<1x16x128xf32>,
    %85 = vector.extract_strided_slice %4 {offsets = [0, 64], sizes = [16, 32], strides = [1, 1]} : vector<16x128xbf16> to vector<16x32xbf16>
    %86 = vector.extract_strided_slice %6 {offsets = [0, 64], sizes = [16, 32], strides = [1, 1]} : vector<16x128xbf16> to vector<16x32xbf16>
    %cst_48 = arith.constant dense<0.000000e+00> : vector<16x16xf32>
    %87 = tpu.matmul %85, %86, %cst_48 {dimension_numbers = #tpu.dot_dimension_numbers<[1], [1], [0], [0], [0, 0, 1, 0], [], []>} : vector<16x32xbf16>, vector<16x32xbf16>, vector<16x16xf32> -> vector<16x16xf32>
    %cst_49 = arith.constant 0.176776692 : f32
    %88 = vector.broadcast %cst_49 : f32 to vector<16x16xf32>
    %89 = arith.mulf %87, %88 : vector<16x16xf32>
    %c2 = arith.constant 2 : index
    %c0_50 = arith.constant 0 : index
    %c0_51 = arith.constant 0 : index
    %90 = vector.load %arg12[%c2, %c0_50, %c0_51] : memref<4x16x128xf32, #tpu.memory_space<vmem>>, vector<1x16x128xf32>
    %91 = vector.shape_cast %90 : vector<1x16x128xf32> to vector<16x128xf32>
    %cst_52 = arith.constant dense<0xFF800000> : vector<16xf32>
    %92 = vector.multi_reduction <maximumf>, %89, %cst_52 [1] : vector<16x16xf32> to vector<16xf32>
    %93 = vector.shape_cast %92 : vector<16xf32> to vector<16x1xf32>
    %94 = vector.broadcast %93 : vector<16x1xf32> to vector<16x128xf32>
    %95 = arith.maximumf %91, %94 : vector<16x128xf32>
    %96 = arith.subf %91, %95 : vector<16x128xf32>
    %97 = math.exp %96 : vector<16x128xf32>
    %98 = vector.extract_strided_slice %95 {offsets = [0, 0], sizes = [16, 1], strides = [1, 1]} : vector<16x128xf32> to vector<16x1xf32>
    %99 = vector.broadcast %98 : vector<16x1xf32> to vector<16x16xf32>
    %100 = arith.subf %89, %99 : vector<16x16xf32>
    %101 = math.exp %100 : vector<16x16xf32>
    %c2_53 = arith.constant 2 : index
    %c0_54 = arith.constant 0 : index
    %c0_55 = arith.constant 0 : index
    %102 = vector.load %arg13[%c2_53, %c0_54, %c0_55] : memref<4x16x128xf32, #tpu.memory_space<vmem>>, vector<1x16x128xf32>
    %103 = vector.shape_cast %102 : vector<1x16x128xf32> to vector<16x128xf32>
    %104 = arith.mulf %97, %103 : vector<16x128xf32>
    %cst_56 = arith.constant dense<0.000000e+00> : vector<16xf32>
    %105 = vector.multi_reduction <add>, %101, %cst_56 [1] : vector<16x16xf32> to vector<16xf32>
    %106 = vector.shape_cast %105 : vector<16xf32> to vector<16x1xf32>
    %107 = vector.broadcast %106 : vector<16x1xf32> to vector<16x128xf32>
    %108 = arith.addf %104, %107 : vector<16x128xf32>
    %c2_57 = arith.constant 2 : index
    %c0_58 = arith.constant 0 : index
    %c0_59 = arith.constant 0 : index
    %109 = vector.load %arg13[%c2_57, %c0_58, %c0_59] : memref<4x16x128xf32, #tpu.memory_space<vmem>>, vector<1x16x128xf32>
    %110 = vector.shape_cast %109 : vector<1x16x128xf32> to vector<16x128xf32>
    %111 = vector.shape_cast %108 : vector<16x128xf32> to vector<1x16x128xf32>
    tpu.vector_store %arg13[%c2_57, %c0_58, %c0_59], %111 {strides = array<i32>} : memref<4x16x128xf32, #tpu.memory_space<vmem>>, vector<1x16x128xf32>,
    %112 = vector.extract_strided_slice %97 {offsets = [0, 0], sizes = [16, 32], strides = [1, 1]} : vector<16x128xf32> to vector<16x32xf32>
    %c0_60 = arith.constant 0 : index
    %c64 = arith.constant 64 : index
    %113 = vector.load %arg14[%c0_60, %c64] : memref<16x128xf32, #tpu.memory_space<vmem>>, vector<16x32xf32>
    %114 = arith.mulf %112, %113 : vector<16x32xf32>
    %115 = arith.truncf %101 : vector<16x16xf32> to vector<16x16xbf16>
    %116 = vector.extract_strided_slice %8 {offsets = [0, 64], sizes = [16, 32], strides = [1, 1]} : vector<16x128xbf16> to vector<16x32xbf16>
    %cst_61 = arith.constant dense<0.000000e+00> : vector<16x32xf32>
    %117 = tpu.matmul %115, %116, %cst_61 {dimension_numbers = #tpu.dot_dimension_numbers<[1], [0], [0], [1], [0, 0, 1, 1], [], []>} : vector<16x16xbf16>, vector<16x32xbf16>, vector<16x32xf32> -> vector<16x32xf32>
    %118 = arith.addf %114, %117 : vector<16x32xf32>
    %c0_62 = arith.constant 0 : index
    %c64_63 = arith.constant 64 : index
    %119 = vector.load %arg14[%c0_62, %c64_63] : memref<16x128xf32, #tpu.memory_space<vmem>>, vector<16x32xf32>
    tpu.vector_store %arg14[%c0_62, %c64_63], %118 {strides = array<i32>} : memref<16x128xf32, #tpu.memory_space<vmem>>, vector<16x32xf32>,
    %c2_64 = arith.constant 2 : index
    %c0_65 = arith.constant 0 : index
    %c0_66 = arith.constant 0 : index
    %120 = vector.load %arg12[%c2_64, %c0_65, %c0_66] : memref<4x16x128xf32, #tpu.memory_space<vmem>>, vector<1x16x128xf32>
    %121 = vector.shape_cast %120 : vector<1x16x128xf32> to vector<16x128xf32>
    %122 = vector.shape_cast %95 : vector<16x128xf32> to vector<1x16x128xf32>
    tpu.vector_store %arg12[%c2_64, %c0_65, %c0_66], %122 {strides = array<i32>} : memref<4x16x128xf32, #tpu.memory_space<vmem>>, vector<1x16x128xf32>,
    %123 = vector.extract_strided_slice %4 {offsets = [0, 96], sizes = [16, 32], strides = [1, 1]} : vector<16x128xbf16> to vector<16x32xbf16>
    %124 = vector.extract_strided_slice %6 {offsets = [0, 96], sizes = [16, 32], strides = [1, 1]} : vector<16x128xbf16> to vector<16x32xbf16>
    %cst_67 = arith.constant dense<0.000000e+00> : vector<16x16xf32>
    %125 = tpu.matmul %123, %124, %cst_67 {dimension_numbers = #tpu.dot_dimension_numbers<[1], [1], [0], [0], [0, 0, 1, 0], [], []>} : vector<16x32xbf16>, vector<16x32xbf16>, vector<16x16xf32> -> vector<16x16xf32>
    %cst_68 = arith.constant 0.176776692 : f32
    %126 = vector.broadcast %cst_68 : f32 to vector<16x16xf32>
    %127 = arith.mulf %125, %126 : vector<16x16xf32>
    %c3 = arith.constant 3 : index
    %c0_69 = arith.constant 0 : index
    %c0_70 = arith.constant 0 : index
    %128 = vector.load %arg12[%c3, %c0_69, %c0_70] : memref<4x16x128xf32, #tpu.memory_space<vmem>>, vector<1x16x128xf32>
    %129 = vector.shape_cast %128 : vector<1x16x128xf32> to vector<16x128xf32>
    %cst_71 = arith.constant dense<0xFF800000> : vector<16xf32>
    %130 = vector.multi_reduction <maximumf>, %127, %cst_71 [1] : vector<16x16xf32> to vector<16xf32>
    %131 = vector.shape_cast %130 : vector<16xf32> to vector<16x1xf32>
    %132 = vector.broadcast %131 : vector<16x1xf32> to vector<16x128xf32>
    %133 = arith.maximumf %129, %132 : vector<16x128xf32>
    %134 = arith.subf %129, %133 : vector<16x128xf32>
    %135 = math.exp %134 : vector<16x128xf32>
    %136 = vector.extract_strided_slice %133 {offsets = [0, 0], sizes = [16, 1], strides = [1, 1]} : vector<16x128xf32> to vector<16x1xf32>
    %137 = vector.broadcast %136 : vector<16x1xf32> to vector<16x16xf32>
    %138 = arith.subf %127, %137 : vector<16x16xf32>
    %139 = math.exp %138 : vector<16x16xf32>
    %c3_72 = arith.constant 3 : index
    %c0_73 = arith.constant 0 : index
    %c0_74 = arith.constant 0 : index
    %140 = vector.load %arg13[%c3_72, %c0_73, %c0_74] : memref<4x16x128xf32, #tpu.memory_space<vmem>>, vector<1x16x128xf32>
    %141 = vector.shape_cast %140 : vector<1x16x128xf32> to vector<16x128xf32>
    %142 = arith.mulf %135, %141 : vector<16x128xf32>
    %cst_75 = arith.constant dense<0.000000e+00> : vector<16xf32>
    %143 = vector.multi_reduction <add>, %139, %cst_75 [1] : vector<16x16xf32> to vector<16xf32>
    %144 = vector.shape_cast %143 : vector<16xf32> to vector<16x1xf32>
    %145 = vector.broadcast %144 : vector<16x1xf32> to vector<16x128xf32>
    %146 = arith.addf %142, %145 : vector<16x128xf32>
    %c3_76 = arith.constant 3 : index
    %c0_77 = arith.constant 0 : index
    %c0_78 = arith.constant 0 : index
    %147 = vector.load %arg13[%c3_76, %c0_77, %c0_78] : memref<4x16x128xf32, #tpu.memory_space<vmem>>, vector<1x16x128xf32>
    %148 = vector.shape_cast %147 : vector<1x16x128xf32> to vector<16x128xf32>
    %149 = vector.shape_cast %146 : vector<16x128xf32> to vector<1x16x128xf32>
    tpu.vector_store %arg13[%c3_76, %c0_77, %c0_78], %149 {strides = array<i32>} : memref<4x16x128xf32, #tpu.memory_space<vmem>>, vector<1x16x128xf32>,
    %150 = vector.extract_strided_slice %135 {offsets = [0, 0], sizes = [16, 32], strides = [1, 1]} : vector<16x128xf32> to vector<16x32xf32>
    %c0_79 = arith.constant 0 : index
    %c96 = arith.constant 96 : index
    %151 = vector.load %arg14[%c0_79, %c96] : memref<16x128xf32, #tpu.memory_space<vmem>>, vector<16x32xf32>
    %152 = arith.mulf %150, %151 : vector<16x32xf32>
    %153 = arith.truncf %139 : vector<16x16xf32> to vector<16x16xbf16>
    %154 = vector.extract_strided_slice %8 {offsets = [0, 96], sizes = [16, 32], strides = [1, 1]} : vector<16x128xbf16> to vector<16x32xbf16>
    %cst_80 = arith.constant dense<0.000000e+00> : vector<16x32xf32>
    %155 = tpu.matmul %153, %154, %cst_80 {dimension_numbers = #tpu.dot_dimension_numbers<[1], [0], [0], [1], [0, 0, 1, 1], [], []>} : vector<16x16xbf16>, vector<16x32xbf16>, vector<16x32xf32> -> vector<16x32xf32>
    %156 = arith.addf %152, %155 : vector<16x32xf32>
    %c0_81 = arith.constant 0 : index
    %c96_82 = arith.constant 96 : index
    %157 = vector.load %arg14[%c0_81, %c96_82] : memref<16x128xf32, #tpu.memory_space<vmem>>, vector<16x32xf32>
    tpu.vector_store %arg14[%c0_81, %c96_82], %156 {strides = array<i32>} : memref<16x128xf32, #tpu.memory_space<vmem>>, vector<16x32xf32>,
    %c3_83 = arith.constant 3 : index
    %c0_84 = arith.constant 0 : index
    %c0_85 = arith.constant 0 : index
    %158 = vector.load %arg12[%c3_83, %c0_84, %c0_85] : memref<4x16x128xf32, #tpu.memory_space<vmem>>, vector<1x16x128xf32>
    %159 = vector.shape_cast %158 : vector<1x16x128xf32> to vector<16x128xf32>
    %160 = vector.shape_cast %133 : vector<16x128xf32> to vector<1x16x128xf32>
    tpu.vector_store %arg12[%c3_83, %c0_84, %c0_85], %160 {strides = array<i32>} : memref<4x16x128xf32, #tpu.memory_space<vmem>>, vector<1x16x128xf32>,
    %c0_i32_86 = arith.constant 0 : i32
    %161 = arith.cmpi eq, %arg2, %c0_i32_86 : i32
    %162 = arith.extui %161 : i1 to i32
    %c0_i32_87 = arith.constant 0 : i32
    %163 = arith.cmpi ne, %162, %c0_i32_87 : i32
    scf.if %163 {
      %c0_88 = arith.constant 0 : index
      %c0_89 = arith.constant 0 : index
      %c0_90 = arith.constant 0 : index
      %164 = vector.load %arg13[%c0_88, %c0_89, %c0_90] : memref<4x16x128xf32, #tpu.memory_space<vmem>>, vector<1x16x128xf32>
      %165 = vector.shape_cast %164 : vector<1x16x128xf32> to vector<16x128xf32>
      %166 = tpu.reciprocal %165 {approx = true} : vector<16x128xf32> -> vector<16x128xf32>
      %167 = vector.extract_strided_slice %166 {offsets = [0, 0], sizes = [16, 32], strides = [1, 1]} : vector<16x128xf32> to vector<16x32xf32>
      %c0_91 = arith.constant 0 : index
      %c0_92 = arith.constant 0 : index
      %168 = vector.load %arg14[%c0_91, %c0_92] : memref<16x128xf32, #tpu.memory_space<vmem>>, vector<16x32xf32>
      %169 = arith.mulf %168, %167 : vector<16x32xf32>
      %c0_93 = arith.constant 0 : index
      %c0_94 = arith.constant 0 : index
      %170 = vector.load %arg14[%c0_93, %c0_94] : memref<16x128xf32, #tpu.memory_space<vmem>>, vector<16x32xf32>
      tpu.vector_store %arg14[%c0_93, %c0_94], %169 {strides = array<i32>} : memref<16x128xf32, #tpu.memory_space<vmem>>, vector<16x32xf32>,
      %c1_95 = arith.constant 1 : index
      %c0_96 = arith.constant 0 : index
      %c0_97 = arith.constant 0 : index
      %171 = vector.load %arg13[%c1_95, %c0_96, %c0_97] : memref<4x16x128xf32, #tpu.memory_space<vmem>>, vector<1x16x128xf32>
      %172 = vector.shape_cast %171 : vector<1x16x128xf32> to vector<16x128xf32>
      %173 = tpu.reciprocal %172 {approx = true} : vector<16x128xf32> -> vector<16x128xf32>
      %174 = vector.extract_strided_slice %173 {offsets = [0, 0], sizes = [16, 32], strides = [1, 1]} : vector<16x128xf32> to vector<16x32xf32>
      %c0_98 = arith.constant 0 : index
      %c32_99 = arith.constant 32 : index
      %175 = vector.load %arg14[%c0_98, %c32_99] : memref<16x128xf32, #tpu.memory_space<vmem>>, vector<16x32xf32>
      %176 = arith.mulf %175, %174 : vector<16x32xf32>
      %c0_100 = arith.constant 0 : index
      %c32_101 = arith.constant 32 : index
      %177 = vector.load %arg14[%c0_100, %c32_101] : memref<16x128xf32, #tpu.memory_space<vmem>>, vector<16x32xf32>
      tpu.vector_store %arg14[%c0_100, %c32_101], %176 {strides = array<i32>} : memref<16x128xf32, #tpu.memory_space<vmem>>, vector<16x32xf32>,
      %c2_102 = arith.constant 2 : index
      %c0_103 = arith.constant 0 : index
      %c0_104 = arith.constant 0 : index
      %178 = vector.load %arg13[%c2_102, %c0_103, %c0_104] : memref<4x16x128xf32, #tpu.memory_space<vmem>>, vector<1x16x128xf32>
      %179 = vector.shape_cast %178 : vector<1x16x128xf32> to vector<16x128xf32>
      %180 = tpu.reciprocal %179 {approx = true} : vector<16x128xf32> -> vector<16x128xf32>
      %181 = vector.extract_strided_slice %180 {offsets = [0, 0], sizes = [16, 32], strides = [1, 1]} : vector<16x128xf32> to vector<16x32xf32>
      %c0_105 = arith.constant 0 : index
      %c64_106 = arith.constant 64 : index
      %182 = vector.load %arg14[%c0_105, %c64_106] : memref<16x128xf32, #tpu.memory_space<vmem>>, vector<16x32xf32>
      %183 = arith.mulf %182, %181 : vector<16x32xf32>
      %c0_107 = arith.constant 0 : index
      %c64_108 = arith.constant 64 : index
      %184 = vector.load %arg14[%c0_107, %c64_108] : memref<16x128xf32, #tpu.memory_space<vmem>>, vector<16x32xf32>
      tpu.vector_store %arg14[%c0_107, %c64_108], %183 {strides = array<i32>} : memref<16x128xf32, #tpu.memory_space<vmem>>, vector<16x32xf32>,
      %c3_109 = arith.constant 3 : index
      %c0_110 = arith.constant 0 : index
      %c0_111 = arith.constant 0 : index
      %185 = vector.load %arg13[%c3_109, %c0_110, %c0_111] : memref<4x16x128xf32, #tpu.memory_space<vmem>>, vector<1x16x128xf32>
      %186 = vector.shape_cast %185 : vector<1x16x128xf32> to vector<16x128xf32>
      %187 = tpu.reciprocal %186 {approx = true} : vector<16x128xf32> -> vector<16x128xf32>
      %188 = vector.extract_strided_slice %187 {offsets = [0, 0], sizes = [16, 32], strides = [1, 1]} : vector<16x128xf32> to vector<16x32xf32>
      %c0_112 = arith.constant 0 : index
      %c96_113 = arith.constant 96 : index
      %189 = vector.load %arg14[%c0_112, %c96_113] : memref<16x128xf32, #tpu.memory_space<vmem>>, vector<16x32xf32>
      %190 = arith.mulf %189, %188 : vector<16x32xf32>
      %c0_114 = arith.constant 0 : index
      %c96_115 = arith.constant 96 : index
      %191 = vector.load %arg14[%c0_114, %c96_115] : memref<16x128xf32, #tpu.memory_space<vmem>>, vector<16x32xf32>
      tpu.vector_store %arg14[%c0_114, %c96_115], %190 {strides = array<i32>} : memref<16x128xf32, #tpu.memory_space<vmem>>, vector<16x32xf32>,
      %c0_116 = arith.constant 0 : index
      %c0_117 = arith.constant 0 : index
      %192 = vector.load %arg14[%c0_116, %c0_117] : memref<16x128xf32, #tpu.memory_space<vmem>>, vector<16x128xf32>
      %193 = arith.truncf %192 : vector<16x128xf32> to vector<16x128xbf16>
      %c0_118 = arith.constant 0 : index
      %c0_119 = arith.constant 0 : index
      %194 = vector.load %arg7[%c0_118, %c0_119] : memref<128x128xbf16, #tpu.memory_space<vmem>>, vector<128x128xbf16>
      %cst_120 = arith.constant dense<0.000000e+00> : vector<16x128xf32>
      %195 = tpu.matmul %193, %194, %cst_120 {dimension_numbers = #tpu.dot_dimension_numbers<[1], [0], [0], [1], [0, 0, 1, 1], [], []>} : vector<16x128xbf16>, vector<128x128xbf16>, vector<16x128xf32> -> vector<16x128xf32>
      %c0_121 = arith.constant 0 : index
      %c0_122 = arith.constant 0 : index
      %c0_123 = arith.constant 0 : index
      %196 = vector.load %arg3[%c0_121, %c0_122, %c0_123] : memref<1x16x128xf32, #tpu.memory_space<vmem>>, vector<1x16x128xf32>
      %197 = vector.shape_cast %196 : vector<1x16x128xf32> to vector<16x128xf32>
      %198 = arith.addf %197, %195 : vector<16x128xf32>
      %c0_124 = arith.constant 0 : index
      %c0_125 = arith.constant 0 : index
      %c0_126 = arith.constant 0 : index
      %199 = vector.load %arg10[%c0_124, %c0_125, %c0_126] : memref<1x16x128xf32, #tpu.memory_space<vmem>>, vector<1x16x128xf32>
      %200 = vector.shape_cast %199 : vector<1x16x128xf32> to vector<16x128xf32>
      %201 = vector.shape_cast %198 : vector<16x128xf32> to vector<1x16x128xf32>
      tpu.vector_store %arg10[%c0_124, %c0_125, %c0_126], %201 {strides = array<i32>} : memref<1x16x128xf32, #tpu.memory_space<vmem>>, vector<1x16x128xf32>,
      %c0_127 = arith.constant 0 : index
      %c0_128 = arith.constant 0 : index
      %202 = vector.load %arg8[%c0_127, %c0_128] : memref<1x128xf32, #tpu.memory_space<vmem>>, vector<1x128xf32>
      %203 = arith.mulf %198, %198 : vector<16x128xf32>
      %cst_129 = arith.constant dense<0.000000e+00> : vector<16xf32>
      %204 = vector.multi_reduction <add>, %203, %cst_129 [1] : vector<16x128xf32> to vector<16xf32>
      %205 = vector.shape_cast %204 : vector<16xf32> to vector<16x1xf32>
      %cst_130 = arith.constant 1.280000e+02 : f32
      %206 = vector.broadcast %cst_130 : f32 to vector<16x1xf32>
      %207 = arith.divf %205, %206 : vector<16x1xf32>
      %cst_131 = arith.constant 9.99999997E-7 : f32
      %208 = vector.broadcast %cst_131 : f32 to vector<16x1xf32>
      %209 = arith.addf %207, %208 : vector<16x1xf32>
      %210 = math.rsqrt %209 : vector<16x1xf32>
      %211 = vector.broadcast %210 : vector<16x1xf32> to vector<16x128xf32>
      %212 = arith.mulf %198, %211 : vector<16x128xf32>
      %213 = vector.broadcast %202 : vector<1x128xf32> to vector<16x128xf32>
      %214 = arith.mulf %212, %213 : vector<16x128xf32>
      %c0_132 = arith.constant 0 : index
      %c0_133 = arith.constant 0 : index
      %215 = vector.load %arg9[%c0_132, %c0_133] : memref<128x128xf32, #tpu.memory_space<vmem>>, vector<128x128xf32>
      %cst_134 = arith.constant dense<0.000000e+00> : vector<16x128xf32>
      %216 = tpu.matmul %214, %215, %cst_134 {dimension_numbers = #tpu.dot_dimension_numbers<[1], [0], [0], [1], [0, 0, 1, 1], [], []>} : vector<16x128xf32>, vector<128x128xf32>, vector<16x128xf32> -> vector<16x128xf32>
      %c0_135 = arith.constant 0 : index
      %c0_136 = arith.constant 0 : index
      %c0_137 = arith.constant 0 : index
      %217 = vector.load %arg11[%c0_135, %c0_136, %c0_137] : memref<1x16x128xf32, #tpu.memory_space<vmem>>, vector<1x16x128xf32>
      %218 = vector.shape_cast %217 : vector<1x16x128xf32> to vector<16x128xf32>
      %219 = vector.shape_cast %216 : vector<16x128xf32> to vector<1x16x128xf32>
      tpu.vector_store %arg11[%c0_135, %c0_136, %c0_137], %219 {strides = array<i32>} : memref<1x16x128xf32, #tpu.memory_space<vmem>>, vector<1x16x128xf32>,
    } else {
    }
    return
  }
  func.func @transform_0(%arg0: i32, %arg1: i32, %arg2: i32) -> (i32, i32, i32) {
    %c0_i32 = arith.constant 0 : i32
    %c0_i32_0 = arith.constant 0 : i32
    return %arg0, %arg1, %c0_i32 : i32, i32, i32
  }
  func.func @transform_1(%arg0: i32, %arg1: i32, %arg2: i32) -> (i32, i32, i32) {
    %c0_i32 = arith.constant 0 : i32
    %c0_i32_0 = arith.constant 0 : i32
    return %arg0, %arg1, %c0_i32 : i32, i32, i32
  }
  func.func @transform_2(%arg0: i32, %arg1: i32, %arg2: i32) -> (i32, i32, i32) {
    %c1_i32 = arith.constant 1 : i32
    %c0_i32 = arith.constant 0 : i32
    return %arg0, %arg2, %c1_i32 : i32, i32, i32
  }
  func.func @transform_3(%arg0: i32, %arg1: i32, %arg2: i32) -> (i32, i32, i32) {
    %c2_i32 = arith.constant 2 : i32
    %c0_i32 = arith.constant 0 : i32
    return %arg0, %arg2, %c2_i32 : i32, i32, i32
  }
  func.func @transform_4(%arg0: i32, %arg1: i32, %arg2: i32) -> (i32, i32) {
    %c0_i32 = arith.constant 0 : i32
    %c0_i32_0 = arith.constant 0 : i32
    %c0_i32_1 = arith.constant 0 : i32
    return %c0_i32, %c0_i32_0 : i32, i32
  }
  func.func @transform_5(%arg0: i32, %arg1: i32, %arg2: i32) -> (i32, i32) {
    %c0_i32 = arith.constant 0 : i32
    %c0_i32_0 = arith.constant 0 : i32
    %c0_i32_1 = arith.constant 0 : i32
    return %c0_i32, %c0_i32_0 : i32, i32
  }
  func.func @transform_6(%arg0: i32, %arg1: i32, %arg2: i32) -> (i32, i32) {
    %c0_i32 = arith.constant 0 : i32
    %c0_i32_0 = arith.constant 0 : i32
    %c0_i32_1 = arith.constant 0 : i32
    return %c0_i32, %c0_i32_0 : i32, i32
  }
  func.func @transform_7(%arg0: i32, %arg1: i32, %arg2: i32) -> (i32, i32, i32) {
    %c0_i32 = arith.constant 0 : i32
    %c0_i32_0 = arith.constant 0 : i32
    return %arg0, %arg1, %c0_i32 : i32, i32, i32
  }
  func.func @transform_8(%arg0: i32, %arg1: i32, %arg2: i32) -> (i32, i32, i32) {
    %c0_i32 = arith.constant 0 : i32
    %c0_i32_0 = arith.constant 0 : i32
    return %arg0, %arg1, %c0_i32 : i32, i32, i32
  }
}

module attributes {stable_mosaic.version = 11 : i64} {
  func.func @moe_kernel(%arg0: i32, %arg1: i32, %arg2: i32, %arg3: memref<1x4xi32, #tpu.memory_space<smem>>, %arg4: memref<1x4xi32, #tpu.memory_space<smem>>, %arg5: memref<32x128xf32, #tpu.memory_space<vmem>>, %arg6: memref<32x4xf32, #tpu.memory_space<vmem>>, %arg7: memref<1x128xf32, #tpu.memory_space<vmem>>, %arg8: memref<1x128x256xbf16, #tpu.memory_space<vmem>>, %arg9: memref<1x1x256xf32, #tpu.memory_space<vmem>>, %arg10: memref<1x256x128xbf16, #tpu.memory_space<vmem>>, %arg11: memref<1x1x128xf32, #tpu.memory_space<vmem>>, %arg12: memref<32x128xf32, #tpu.memory_space<vmem>>, %arg13: memref<32x128xf32, #tpu.memory_space<vmem>>, %arg14: memref<32x128xbf16, #tpu.memory_space<vmem>>) attributes {dimension_semantics = [#tpu.dimension_semantics<parallel>, #tpu.dimension_semantics<arbitrary>, #tpu.dimension_semantics<arbitrary>], iteration_bounds = array<i64: 1, 4, 1>, scalar_prefetch = 2 : i64, scratch_operands = 2 : i64, tpu.core_type = #tpu.core_type<tc>, window_params = [{transform_indices = @transform_0, window_bounds = array<i64: 32, 128>}, {transform_indices = @transform_1, window_bounds = array<i64: 32, 4>}, {pipeline_mode = #tpu.pipeline_mode<synchronous>, transform_indices = @transform_2, window_bounds = array<i64: 1, 128>}, {transform_indices = @transform_3, window_bounds = array<i64: 1, 128, 256>}, {transform_indices = @transform_4, window_bounds = array<i64: 1, 1, 256>}, {transform_indices = @transform_5, window_bounds = array<i64: 1, 256, 128>}, {transform_indices = @transform_6, window_bounds = array<i64: 1, 1, 128>}, {transform_indices = @transform_7, window_bounds = array<i64: 32, 128>}]} {
    %c0_i32 = arith.constant 0 : i32
    %0 = arith.cmpi eq, %arg1, %c0_i32 : i32
    %c0_i32_0 = arith.constant 0 : i32
    %1 = arith.cmpi eq, %arg2, %c0_i32_0 : i32
    %2 = arith.andi %0, %1 : i1
    %3 = arith.extui %2 : i1 to i32
    %c0_i32_1 = arith.constant 0 : i32
    %4 = arith.cmpi ne, %3, %c0_i32_1 : i32
    scf.if %4 {
      %cst = arith.constant 0.000000e+00 : f32
      %16 = vector.broadcast %cst : f32 to vector<32x128xf32>
      %c0 = arith.constant 0 : index
      %c0_6 = arith.constant 0 : index
      %17 = vector.load %arg13[%c0, %c0_6] : memref<32x128xf32, #tpu.memory_space<vmem>>, vector<32x128xf32>
      tpu.vector_store %arg13[%c0, %c0_6], %16 {strides = array<i32>} : memref<32x128xf32, #tpu.memory_space<vmem>>, vector<32x128xf32>,
      %c0_7 = arith.constant 0 : index
      %c0_8 = arith.constant 0 : index
      %18 = vector.load %arg5[%c0_7, %c0_8] : memref<32x128xf32, #tpu.memory_space<vmem>>, vector<32x128xf32>
      %c0_9 = arith.constant 0 : index
      %c0_10 = arith.constant 0 : index
      %19 = vector.load %arg7[%c0_9, %c0_10] : memref<1x128xf32, #tpu.memory_space<vmem>>, vector<1x128xf32>
      %20 = arith.mulf %18, %18 : vector<32x128xf32>
      %cst_11 = arith.constant dense<0.000000e+00> : vector<32xf32>
      %21 = vector.multi_reduction <add>, %20, %cst_11 [1] : vector<32x128xf32> to vector<32xf32>
      %22 = vector.shape_cast %21 : vector<32xf32> to vector<32x1xf32>
      %cst_12 = arith.constant 1.280000e+02 : f32
      %23 = vector.broadcast %cst_12 : f32 to vector<32x1xf32>
      %24 = arith.divf %22, %23 : vector<32x1xf32>
      %cst_13 = arith.constant 9.99999997E-7 : f32
      %25 = vector.broadcast %cst_13 : f32 to vector<32x1xf32>
      %26 = arith.addf %24, %25 : vector<32x1xf32>
      %27 = math.rsqrt %26 : vector<32x1xf32>
      %28 = vector.broadcast %27 : vector<32x1xf32> to vector<32x128xf32>
      %29 = arith.mulf %18, %28 : vector<32x128xf32>
      %30 = vector.broadcast %19 : vector<1x128xf32> to vector<32x128xf32>
      %31 = arith.mulf %29, %30 : vector<32x128xf32>
      %32 = arith.truncf %31 : vector<32x128xf32> to vector<32x128xbf16>
      %c0_14 = arith.constant 0 : index
      %c0_15 = arith.constant 0 : index
      %33 = vector.load %arg14[%c0_14, %c0_15] : memref<32x128xbf16, #tpu.memory_space<vmem>>, vector<32x128xbf16>
      tpu.vector_store %arg14[%c0_14, %c0_15], %32 {strides = array<i32>} : memref<32x128xbf16, #tpu.memory_space<vmem>>, vector<32x128xbf16>,
    } else {
    }
    %5 = arith.index_cast %arg0 : i32 to index
    %6 = arith.index_cast %arg1 : i32 to index
    %7 = memref.load %arg3[%5, %6] : memref<1x4xi32, #tpu.memory_space<smem>>
    %c0_i32_2 = arith.constant 0 : i32
    %8 = arith.cmpi ne, %7, %c0_i32_2 : i32
    %9 = arith.extui %8 : i1 to i32
    %c0_i32_3 = arith.constant 0 : i32
    %10 = arith.cmpi ne, %9, %c0_i32_3 : i32
    scf.if %10 {
      %c0 = arith.constant 0 : index
      %c0_6 = arith.constant 0 : index
      %16 = vector.load %arg14[%c0, %c0_6] : memref<32x128xbf16, #tpu.memory_space<vmem>>, vector<32x128xbf16>
      %c0_7 = arith.constant 0 : index
      %c0_8 = arith.constant 0 : index
      %c0_9 = arith.constant 0 : index
      %17 = vector.load %arg8[%c0_7, %c0_8, %c0_9] : memref<1x128x256xbf16, #tpu.memory_space<vmem>>, vector<1x128x256xbf16>
      %18 = vector.shape_cast %17 : vector<1x128x256xbf16> to vector<128x256xbf16>
      %cst = arith.constant dense<0.000000e+00> : vector<32x256xf32>
      %19 = tpu.matmul %16, %18, %cst {dimension_numbers = #tpu.dot_dimension_numbers<[1], [0], [0], [1], [0, 0, 1, 1], [], []>} : vector<32x128xbf16>, vector<128x256xbf16>, vector<32x256xf32> -> vector<32x256xf32>
      %c0_10 = arith.constant 0 : index
      %c0_11 = arith.constant 0 : index
      %c0_12 = arith.constant 0 : index
      %20 = vector.load %arg9[%c0_10, %c0_11, %c0_12] : memref<1x1x256xf32, #tpu.memory_space<vmem>>, vector<1x1x256xf32>
      %21 = vector.shape_cast %20 : vector<1x1x256xf32> to vector<1x256xf32>
      %22 = vector.broadcast %21 : vector<1x256xf32> to vector<32x256xf32>
      %23 = arith.addf %19, %22 : vector<32x256xf32>
      %24 = arith.mulf %23, %23 : vector<32x256xf32>
      %25 = arith.mulf %23, %24 : vector<32x256xf32>
      %cst_13 = arith.constant 4.471500e-02 : f32
      %26 = vector.broadcast %cst_13 : f32 to vector<32x256xf32>
      %27 = arith.mulf %26, %25 : vector<32x256xf32>
      %28 = arith.addf %23, %27 : vector<32x256xf32>
      %cst_14 = arith.constant 0.797884583 : f32
      %29 = vector.broadcast %cst_14 : f32 to vector<32x256xf32>
      %30 = arith.mulf %29, %28 : vector<32x256xf32>
      %31 = math.tanh %30 : vector<32x256xf32>
      %cst_15 = arith.constant 1.000000e+00 : f32
      %32 = vector.broadcast %cst_15 : f32 to vector<32x256xf32>
      %33 = arith.addf %32, %31 : vector<32x256xf32>
      %cst_16 = arith.constant 5.000000e-01 : f32
      %34 = vector.broadcast %cst_16 : f32 to vector<32x256xf32>
      %35 = arith.mulf %34, %33 : vector<32x256xf32>
      %36 = arith.mulf %23, %35 : vector<32x256xf32>
      %37 = arith.truncf %36 : vector<32x256xf32> to vector<32x256xbf16>
      %c0_17 = arith.constant 0 : index
      %c0_18 = arith.constant 0 : index
      %c0_19 = arith.constant 0 : index
      %38 = vector.load %arg10[%c0_17, %c0_18, %c0_19] : memref<1x256x128xbf16, #tpu.memory_space<vmem>>, vector<1x256x128xbf16>
      %39 = vector.shape_cast %38 : vector<1x256x128xbf16> to vector<256x128xbf16>
      %cst_20 = arith.constant dense<0.000000e+00> : vector<32x128xf32>
      %40 = tpu.matmul %37, %39, %cst_20 {dimension_numbers = #tpu.dot_dimension_numbers<[1], [0], [0], [1], [0, 0, 1, 1], [], []>} : vector<32x256xbf16>, vector<256x128xbf16>, vector<32x128xf32> -> vector<32x128xf32>
      %c0_i32_21 = arith.constant 0 : i32
      %41 = arith.cmpi eq, %arg2, %c0_i32_21 : i32
      %42 = arith.extui %41 : i1 to i32
      %43 = arith.sitofp %42 : i32 to f32
      %c0_22 = arith.constant 0 : index
      %c0_23 = arith.constant 0 : index
      %c0_24 = arith.constant 0 : index
      %44 = vector.load %arg11[%c0_22, %c0_23, %c0_24] : memref<1x1x128xf32, #tpu.memory_space<vmem>>, vector<1x1x128xf32>
      %45 = vector.shape_cast %44 : vector<1x1x128xf32> to vector<1x128xf32>
      %46 = vector.broadcast %43 : f32 to vector<1x128xf32>
      %47 = arith.mulf %46, %45 : vector<1x128xf32>
      %48 = vector.broadcast %47 : vector<1x128xf32> to vector<32x128xf32>
      %49 = arith.addf %40, %48 : vector<32x128xf32>
      %c0_25 = arith.constant 0 : index
      %c0_26 = arith.constant 0 : index
      %50 = vector.load %arg6[%c0_25, %c0_26] : memref<32x4xf32, #tpu.memory_space<vmem>>, vector<32x4xf32>
      %51 = tpu.iota {dimensions = array<i32: 1>} : vector<32x4xi32>
      %52 = vector.broadcast %arg1 : i32 to vector<32x4xi32>
      %53 = arith.cmpi eq, %51, %52 : vector<32x4xi32>
      %cst_27 = arith.constant 0.000000e+00 : f32
      %54 = vector.broadcast %cst_27 : f32 to vector<32x4xf32>
      %55 = arith.select %53, %50, %54 : vector<32x4xi1>, vector<32x4xf32>
      %cst_28 = arith.constant dense<0.000000e+00> : vector<32xf32>
      %56 = vector.multi_reduction <add>, %55, %cst_28 [1] : vector<32x4xf32> to vector<32xf32>
      %57 = vector.shape_cast %56 : vector<32xf32> to vector<32x1xf32>
      %c0_29 = arith.constant 0 : index
      %c0_30 = arith.constant 0 : index
      %58 = vector.load %arg13[%c0_29, %c0_30] : memref<32x128xf32, #tpu.memory_space<vmem>>, vector<32x128xf32>
      %59 = vector.broadcast %57 : vector<32x1xf32> to vector<32x128xf32>
      %60 = arith.mulf %59, %49 : vector<32x128xf32>
      %61 = arith.addf %58, %60 : vector<32x128xf32>
      %c0_31 = arith.constant 0 : index
      %c0_32 = arith.constant 0 : index
      %62 = vector.load %arg13[%c0_31, %c0_32] : memref<32x128xf32, #tpu.memory_space<vmem>>, vector<32x128xf32>
      tpu.vector_store %arg13[%c0_31, %c0_32], %61 {strides = array<i32>} : memref<32x128xf32, #tpu.memory_space<vmem>>, vector<32x128xf32>,
    } else {
    }
    %c3_i32 = arith.constant 3 : i32
    %11 = arith.cmpi eq, %arg1, %c3_i32 : i32
    %c0_i32_4 = arith.constant 0 : i32
    %12 = arith.cmpi eq, %arg2, %c0_i32_4 : i32
    %13 = arith.andi %11, %12 : i1
    %14 = arith.extui %13 : i1 to i32
    %c0_i32_5 = arith.constant 0 : i32
    %15 = arith.cmpi ne, %14, %c0_i32_5 : i32
    scf.if %15 {
      %c0 = arith.constant 0 : index
      %c0_6 = arith.constant 0 : index
      %16 = vector.load %arg5[%c0, %c0_6] : memref<32x128xf32, #tpu.memory_space<vmem>>, vector<32x128xf32>
      %c0_7 = arith.constant 0 : index
      %c0_8 = arith.constant 0 : index
      %17 = vector.load %arg13[%c0_7, %c0_8] : memref<32x128xf32, #tpu.memory_space<vmem>>, vector<32x128xf32>
      %18 = arith.addf %16, %17 : vector<32x128xf32>
      %c0_9 = arith.constant 0 : index
      %c0_10 = arith.constant 0 : index
      %19 = vector.load %arg12[%c0_9, %c0_10] : memref<32x128xf32, #tpu.memory_space<vmem>>, vector<32x128xf32>
      tpu.vector_store %arg12[%c0_9, %c0_10], %18 {strides = array<i32>} : memref<32x128xf32, #tpu.memory_space<vmem>>, vector<32x128xf32>,
    } else {
    }
    return
  }
  func.func @transform_0(%arg0: i32, %arg1: i32, %arg2: i32, %arg3: memref<1x4xi32, #tpu.memory_space<smem>>, %arg4: memref<1x4xi32, #tpu.memory_space<smem>>) -> (i32, i32) {
    %c0_i32 = arith.constant 0 : i32
    %c0_i32_0 = arith.constant 0 : i32
    return %arg0, %c0_i32 : i32, i32
  }
  func.func @transform_1(%arg0: i32, %arg1: i32, %arg2: i32, %arg3: memref<1x4xi32, #tpu.memory_space<smem>>, %arg4: memref<1x4xi32, #tpu.memory_space<smem>>) -> (i32, i32) {
    %c0_i32 = arith.constant 0 : i32
    %c0_i32_0 = arith.constant 0 : i32
    return %arg0, %c0_i32 : i32, i32
  }
  func.func @transform_2(%arg0: i32, %arg1: i32, %arg2: i32, %arg3: memref<1x4xi32, #tpu.memory_space<smem>>, %arg4: memref<1x4xi32, #tpu.memory_space<smem>>) -> (i32, i32) {
    %c0_i32 = arith.constant 0 : i32
    %c0_i32_0 = arith.constant 0 : i32
    %c0_i32_1 = arith.constant 0 : i32
    return %c0_i32, %c0_i32_0 : i32, i32
  }
  func.func @transform_3(%arg0: i32, %arg1: i32, %arg2: i32, %arg3: memref<1x4xi32, #tpu.memory_space<smem>>, %arg4: memref<1x4xi32, #tpu.memory_space<smem>>) -> (i32, i32, i32) {
    %0 = arith.index_cast %arg0 : i32 to index
    %1 = arith.index_cast %arg1 : i32 to index
    %2 = memref.load %arg3[%0, %1] : memref<1x4xi32, #tpu.memory_space<smem>>
    %3 = arith.index_cast %arg0 : i32 to index
    %4 = arith.index_cast %arg1 : i32 to index
    %5 = memref.load %arg4[%3, %4] : memref<1x4xi32, #tpu.memory_space<smem>>
    %6 = arith.muli %arg2, %2 : i32
    %c1_i32 = arith.constant 1 : i32
    %7 = arith.subi %c1_i32, %2 : i32
    %c0_i32 = arith.constant 0 : i32
    %8 = arith.muli %c0_i32, %7 : i32
    %9 = arith.addi %6, %8 : i32
    %c0_i32_0 = arith.constant 0 : i32
    %c0_i32_1 = arith.constant 0 : i32
    return %5, %c0_i32_0, %9 : i32, i32, i32
  }
  func.func @transform_4(%arg0: i32, %arg1: i32, %arg2: i32, %arg3: memref<1x4xi32, #tpu.memory_space<smem>>, %arg4: memref<1x4xi32, #tpu.memory_space<smem>>) -> (i32, i32, i32) {
    %0 = arith.index_cast %arg0 : i32 to index
    %1 = arith.index_cast %arg1 : i32 to index
    %2 = memref.load %arg3[%0, %1] : memref<1x4xi32, #tpu.memory_space<smem>>
    %3 = arith.index_cast %arg0 : i32 to index
    %4 = arith.index_cast %arg1 : i32 to index
    %5 = memref.load %arg4[%3, %4] : memref<1x4xi32, #tpu.memory_space<smem>>
    %6 = arith.muli %arg2, %2 : i32
    %c1_i32 = arith.constant 1 : i32
    %7 = arith.subi %c1_i32, %2 : i32
    %c0_i32 = arith.constant 0 : i32
    %8 = arith.muli %c0_i32, %7 : i32
    %9 = arith.addi %6, %8 : i32
    %c0_i32_0 = arith.constant 0 : i32
    %c0_i32_1 = arith.constant 0 : i32
    return %5, %c0_i32_0, %9 : i32, i32, i32
  }
  func.func @transform_5(%arg0: i32, %arg1: i32, %arg2: i32, %arg3: memref<1x4xi32, #tpu.memory_space<smem>>, %arg4: memref<1x4xi32, #tpu.memory_space<smem>>) -> (i32, i32, i32) {
    %0 = arith.index_cast %arg0 : i32 to index
    %1 = arith.index_cast %arg1 : i32 to index
    %2 = memref.load %arg3[%0, %1] : memref<1x4xi32, #tpu.memory_space<smem>>
    %3 = arith.index_cast %arg0 : i32 to index
    %4 = arith.index_cast %arg1 : i32 to index
    %5 = memref.load %arg4[%3, %4] : memref<1x4xi32, #tpu.memory_space<smem>>
    %6 = arith.muli %arg2, %2 : i32
    %c1_i32 = arith.constant 1 : i32
    %7 = arith.subi %c1_i32, %2 : i32
    %c0_i32 = arith.constant 0 : i32
    %8 = arith.muli %c0_i32, %7 : i32
    %9 = arith.addi %6, %8 : i32
    %c0_i32_0 = arith.constant 0 : i32
    %c0_i32_1 = arith.constant 0 : i32
    return %5, %9, %c0_i32_0 : i32, i32, i32
  }
  func.func @transform_6(%arg0: i32, %arg1: i32, %arg2: i32, %arg3: memref<1x4xi32, #tpu.memory_space<smem>>, %arg4: memref<1x4xi32, #tpu.memory_space<smem>>) -> (i32, i32, i32) {
    %0 = arith.index_cast %arg0 : i32 to index
    %1 = arith.index_cast %arg1 : i32 to index
    %2 = memref.load %arg4[%0, %1] : memref<1x4xi32, #tpu.memory_space<smem>>
    %c0_i32 = arith.constant 0 : i32
    %c0_i32_0 = arith.constant 0 : i32
    %c0_i32_1 = arith.constant 0 : i32
    return %2, %c0_i32, %c0_i32_0 : i32, i32, i32
  }
  func.func @transform_7(%arg0: i32, %arg1: i32, %arg2: i32, %arg3: memref<1x4xi32, #tpu.memory_space<smem>>, %arg4: memref<1x4xi32, #tpu.memory_space<smem>>) -> (i32, i32) {
    %c0_i32 = arith.constant 0 : i32
    %c0_i32_0 = arith.constant 0 : i32
    return %arg0, %c0_i32 : i32, i32
  }
}

</mosaic_0001>

<llo_original>
// kernel: custom-call
$region0: #{custom-call}
  %s0 = inlined_call_operand.vmem [shape: s32[4], index: 0, kind: output, shape index: {}]

// kernel: llada_block_forward.3
$region0: #{llada_block_forward.3}
  #allocation0 [shape = 'u32[]', space=smem, size = 0x4, offset = 0x4, fixed_abs, tag = 'smem constant byte address 0x4 - core index']
  #allocation1 [shape = 'u32[72,128]{1,0:T(1,128)}', space=vmem, size = 0x9000, scoped, tag = 'internal scratch']
  #allocation2 [shape = 'bf16[16,128]{1,0:T(8,128)(2,1)}', space=vmem, size = 0x1000, scoped, tag = 'scratch operand']
  %s0 = inlined_call_operand.hbm [shape: f32[2,16,128], index: 0, kind: input, shape index: {}]
  %s1 = inlined_call_operand.vmem [shape: f32[1,128], index: 1, kind: input, shape index: {}]
  %s2 = inlined_call_operand.hbm [shape: bf16[128,384], index: 2, kind: input, shape index: {}]
  %s3 = inlined_call_operand.vmem [shape: bf16[2,16,384], index: 3, kind: output, shape index: {}]
  %s4 = sld [smem:[#allocation0]]
  $region57: #{llada_block_forward.3} parent=0
    _
  %s6 = ssub.s32 1, %s4
  %s7 = scalar_select 0, %s6, %s4
  $region1: #{llada_block_forward.3} parent=0
    #allocation3 [shape = 'u8[16384]{0}', space=vmem, size = 0x4000, scoped, tag = 'input window, operand 0']
    #allocation4 [shape = 's32[2]{0}', space=sflag, size = 0x8, scoped, tag = 'scoped memory for llada_block_forward.3']
    #allocation5 [shape = 'u8[98304]{0}', space=vmem, size = 0x18000, scoped, tag = 'input window, operand 2, single buffered']
    #allocation6 [shape = 's32[1]{0}', space=sflag, size = 0x4, scoped, tag = 'scoped memory for llada_block_forward.3']
    %8 = vsyncpa [#allocation4], 0
    %s9 = scalar_lea.sflag [#allocation4], 1
    %10 = vsyncpa %s9, 0
    %11 = vsyncpa [#allocation6], 0
    loop: start=0, step=1, limit=4
    $region2: #{llada_block_forward.3} parent=1 // loop_pre_header
      _
    $region3: #{llada_block_forward.3} parent=1 // loop_header
      %s13 = sphi 0, %s17
      %p14 = scmp.ge.s32.totalorder %s13, 4
      %s20 = sphi 0, %s39
      %s21 = sphi 0, %s35
      %s22 = sphi 0, %s31
      %s23 = sphi 0, %s20
      %s24 = sphi 0, %s21
      %s25 = sphi 0, %s22
      %s26 = sphi 0, %s23
      %s27 = sphi 0, %s24
      %s28 = sphi 0, %s25
      %s44 = sphi 0, %s46
      %s47 = sphi 0, %s44
      %s48 = sphi 0, %s47
      %s64 = sphi 0, %s48
      %s68 = sphi 0, %s68
      %s70 = sphi 0, %s68
      %s71 = sphi 0, %s70
      %s85 = sphi 0, %s71
      %s91 = sphi 0, %s93
      %s94 = sphi 0, %s91
      %s95 = sphi 0, %s94
      %s111 = sphi 0, %s95
      %s121 = sphi 0, %s123
      %s124 = sphi 0, %s121
      %s125 = sphi 0, %s124
      %s141 = sphi 0, %s125
    $region4: #{llada_block_forward.3} parent=1 // loop_header_branch
      %16 = sbr.rel (%p14) target = $region8
    $region5: #{llada_block_forward.3} parent=1 // loop_body
      %s18 = ssub.s32 %s13, 1
      %s19 = ssub.s32 %s13, 2
      %s29 = sadd.s32 1, %s22
      %p30 = scmp.ge.s32.totalorder %s29, 1
      %s31 = scalar_select %p30, 0, %s29
      %s32 = sadd.s32 1, %s21
      %s33 = scalar_select %p30, %s32, %s21
      %p34 = scmp.ge.s32.totalorder %s33, 1
      %s35 = scalar_select %p34, 0, %s33
      %s36 = sadd.s32 1, %s20
      %s37 = scalar_select %p34, %s36, %s20
      %p38 = scmp.ge.s32.totalorder %s37, 2
      %s39 = scalar_select %p38, 0, %s37
      %s40 = ssub.s32 %s20, %s39
      %s41 = ssub.s32 %s21, %s35
      %s42 = sor.u32 %s40, %s41
      %p43 = scmp.eq.s32.totalorder %s42, 0
      %s45 = sadd.s32 %s44, 1
      %s46 = scalar_select %p43, %s44, %s45
      %p49 = pneg %p43
      %p50 = scmp.eq.s32.totalorder %s13, 1
      %p51 = por %p49, %p50
      %p52 = scmp.ne.s32.totalorder %s44, %s47
      %p53 = scmp.eq.s32.totalorder %s13, 0
      %p54 = por %p52, %p53
      %p55 = scmp.ne.s32.totalorder %s44, %s47
      %p56 = scmp.eq.s32.totalorder %s18, 1
      %p57 = por %p55, %p56
      %p58 = scmp.ne.s32.totalorder %s47, %s48
      %p59 = scmp.eq.s32.totalorder %s18, 0
      %p60 = por %p58, %p59
      %p61 = scmp.ne.s32.totalorder %s47, %s48
      %p62 = scmp.eq.s32.totalorder %s19, 1
      %p63 = por %p61, %p62
      %p65 = scmp.ne.s32.totalorder %s48, %s64
      %p66 = scmp.eq.s32.totalorder %s19, 0
      %p67 = por %p65, %p66
      %s69 = sadd.s32 %s68, 1
      %p72 = scmp.eq.s32.totalorder %s13, 1
      %p73 = scmp.ne.s32.totalorder %s68, %s70
      %p74 = scmp.eq.s32.totalorder %s13, 0
      %p75 = por %p73, %p74
      %p76 = scmp.ne.s32.totalorder %s68, %s70
      %p77 = scmp.eq.s32.totalorder %s18, 1
      %p78 = por %p76, %p77
      %p79 = scmp.ne.s32.totalorder %s70, %s71
      %p80 = scmp.eq.s32.totalorder %s18, 0
      %p81 = por %p79, %p80
      %p82 = scmp.ne.s32.totalorder %s70, %s71
      %p83 = scmp.eq.s32.totalorder %s19, 1
      %p84 = por %p82, %p83
      %p86 = scmp.ne.s32.totalorder %s71, %s85
      %p87 = scmp.eq.s32.totalorder %s19, 0
      %p88 = por %p86, %p87
      %s89 = ssub.s32 %s22, %s31
      %p90 = scmp.eq.s32.totalorder %s89, 0
      %s92 = sadd.s32 %s91, 1
      %s93 = scalar_select %p90, %s91, %s92
      %p96 = pneg %p90
      %p97 = scmp.eq.s32.totalorder %s13, 1
      %p98 = por %p96, %p97
      %p99 = scmp.ne.s32.totalorder %s91, %s94
      %p100 = scmp.eq.s32.totalorder %s13, 0
      %p101 = por %p99, %p100
      %p102 = scmp.ne.s32.totalorder %s91, %s94
      %p103 = scmp.eq.s32.totalorder %s18, 1
      %p104 = por %p102, %p103
      %p105 = scmp.ne.s32.totalorder %s94, %s95
      %p106 = scmp.eq.s32.totalorder %s18, 0
      %p107 = por %p105, %p106
      %p108 = scmp.ne.s32.totalorder %s94, %s95
      %p109 = scmp.eq.s32.totalorder %s19, 1
      %p110 = por %p108, %p109
      %p112 = scmp.ne.s32.totalorder %s95, %s111
      %p113 = scmp.eq.s32.totalorder %s19, 0
      %p114 = por %p112, %p113
      %s115 = ssub.s32 %s20, %s39
      %s116 = ssub.s32 %s21, %s35
      %s117 = sor.u32 %s115, %s116
      %s118 = ssub.s32 %s22, %s31
      %s119 = sor.u32 %s117, %s118
      %p120 = scmp.eq.s32.totalorder %s119, 0
      %s122 = sadd.s32 %s121, 1
      %s123 = scalar_select %p120, %s121, %s122
      %p126 = pneg %p120
      %p127 = scmp.eq.s32.totalorder %s13, 1
      %p128 = por %p126, %p127
      %p129 = scmp.ne.s32.totalorder %s121, %s124
      %p130 = scmp.eq.s32.totalorder %s13, 0
      %p131 = por %p129, %p130
      %p132 = scmp.ne.s32.totalorder %s121, %s124
      %p133 = scmp.eq.s32.totalorder %s18, 1
      %p134 = por %p132, %p133
      %p135 = scmp.ne.s32.totalorder %s124, %s125
      %p136 = scmp.eq.s32.totalorder %s18, 0
      %p137 = por %p135, %p136
      %p138 = scmp.ne.s32.totalorder %s124, %s125
      %p139 = scmp.eq.s32.totalorder %s19, 1
      %p140 = por %p138, %p139
      %p142 = scmp.ne.s32.totalorder %s125, %s141
      %p143 = scmp.eq.s32.totalorder %s19, 0
      %p144 = por %p142, %p143
      %p145 = scmp.le.s32.totalorder 1, %s13
      %p146 = scmp.lt.s32.totalorder %s13, 3
      %p147 = pnand %p145, %p146
      %p148 = pneg %p147
      // Predicated region
      $region9: #{llada_block_forward.3} parent=5 // pred_check
        _
      $region10: #{llada_block_forward.3} parent=5 // pred_check_branch
        %150 = sbr.rel (%p147) target = $region12
      $region11: #{llada_block_forward.3} parent=5 // pred_region
        %s151 = ssub.s32 %s13, 1
        // Predicated region
        $region13: #{llada_block_forward.3} parent=11 // pred_check
          %p152 = pneg %p81
        $region14: #{llada_block_forward.3} parent=11 // pred_check_branch
          %154 = sbr.rel (%p152) target = $region16
        $region15: #{llada_block_forward.3} parent=11 // pred_region
          _
        $region16: #{llada_block_forward.3} parent=11 // pred_fallthru
          _
        // Predicated region
        $region17: #{llada_block_forward.3} parent=11 // pred_check
          %p155 = pneg %p107
        $region18: #{llada_block_forward.3} parent=11 // pred_check_branch
          %157 = sbr.rel (%p155) target = $region20
        $region19: #{llada_block_forward.3} parent=11 // pred_region
          %s158 = smul.u32 3, %s25
          %160 = vsyncadd [#allocation6], 0
          %s161 = smul.addr %s158, 4
          %s162 = scalar_lea.hbm %s2, %s161
          %s163 = sshll.u32 %s162, 4
          %s164 = int_to_ptr.hbm [resolvable:$true] %s163
          %s165 = sshll.u32 [#allocation5], 4
          %s166 = int_to_ptr.vmem [resolvable:$true] %s165
          %171 = dma.hbm_to_vmem [thread:$0]  %s164, 3072, %s166, [#allocation6], 192, 192, 12
        $region20: #{llada_block_forward.3} parent=11 // pred_fallthru
          _
      $region12: #{llada_block_forward.3} parent=5 // pred_fallthru
        _
      %p172 = scmp.lt.s32.totalorder %s13, 2
      // Predicated region
      $region21: #{llada_block_forward.3} parent=5 // pred_check
        %p173 = pneg %p172
      $region22: #{llada_block_forward.3} parent=5 // pred_check_branch
        %175 = sbr.rel (%p173) target = $region24
      $region23: #{llada_block_forward.3} parent=5 // pred_region
        // Predicated region
        $region25: #{llada_block_forward.3} parent=23 // pred_check
          %p176 = pneg %p54
        $region26: #{llada_block_forward.3} parent=23 // pred_check_branch
          %178 = sbr.rel (%p176) target = $region28
        $region27: #{llada_block_forward.3} parent=23 // pred_region
          %s179 = sand.u32 %s44, 1
          %s180 = scalar_lea.sflag [#allocation4], %s179
          %s181 = sand.u32 %s44, 1
          %s182 = smul.addr %s181, 16
          %s183 = scalar_lea.vmem [#allocation3], %s182
          %s184 = smul.u32 2, %s21
          %186 = vsyncadd %s180, 0
          %s187 = smul.addr %s20, 2
          %s188 = sadd.s32 %s184, %s187
          %s189 = smul.addr %s188, 8
          %s190 = scalar_lea.hbm %s0, %s189
          %s191 = sshll.u32 %s190, 4
          %s192 = int_to_ptr.hbm [resolvable:$true] %s191
          %s193 = sshll.u32 %s183, 4
          %s194 = int_to_ptr.vmem [resolvable:$true] %s193
          %199 = dma.hbm_to_vmem [thread:$0]  %s192, 256, %s194, %s180, 128, 128, 8
        $region28: #{llada_block_forward.3} parent=23 // pred_fallthru
          _
      $region24: #{llada_block_forward.3} parent=5 // pred_fallthru
        _
      %p200 = scmp.le.s32.totalorder 1, %s13
      %p201 = scmp.lt.s32.totalorder %s13, 3
      %p202 = pnand %p200, %p201
      %p203 = pneg %p202
      // Predicated region
      $region29: #{llada_block_forward.3} parent=5 // pred_check
        _
      $region30: #{llada_block_forward.3} parent=5 // pred_check_branch
        %205 = sbr.rel (%p202) target = $region32
      $region31: #{llada_block_forward.3} parent=5 // pred_region
        %s206 = ssub.s32 %s13, 1
        %s207 = sand.u32 %s47, 1
        %s208 = scalar_lea.sflag [#allocation4], %s207
        %s209 = sand.u32 %s47, 1
        %s210 = smul.addr %s209, 16
        %s211 = scalar_lea.vmem [#allocation3], %s210
        // Predicated region
        $region33: #{llada_block_forward.3} parent=31 // pred_check
          %p212 = pneg %p60
        $region34: #{llada_block_forward.3} parent=31 // pred_check_branch
          %214 = sbr.rel (%p212) target = $region36
        $region35: #{llada_block_forward.3} parent=31 // pred_region
          %216 = dma.done %s208, 256
        $region36: #{llada_block_forward.3} parent=31 // pred_fallthru
          _
        // Predicated region
        $region37: #{llada_block_forward.3} parent=31 // pred_check
          %p217 = pneg %p107
        $region38: #{llada_block_forward.3} parent=31 // pred_check_branch
          %219 = sbr.rel (%p217) target = $region40
        $region39: #{llada_block_forward.3} parent=31 // pred_region
          %221 = dma.done [#allocation6], 3072
        $region40: #{llada_block_forward.3} parent=31 // pred_fallthru
          _
        %s222 = sand.u32 %s47, 1
        %s223 = scalar_lea.sflag [#allocation4], %s222
        %s224 = sand.u32 %s47, 1
        %s225 = smul.addr %s224, 16
        %s226 = scalar_lea.vmem [#allocation3], %s225
        %p227 = pneg %p60
        %p228 = pneg %p57
        %p229 = pneg %p81
        %p230 = pneg %p78
        %p231 = pneg %p107
        %p232 = pneg %p104
        %p233 = pneg %p137
        %p234 = pneg %p134
        %s235 = smul.u32 2, %s24
        %s236 = smul.u32 3, %s25
        %p237 = scmp.lt.s32.totalorder %s23, 1
        %s238 = scalar_select %p237, %s23, 1
        %p239 = scmp.lt.s32.totalorder %s235, 1
        %s240 = scalar_select %p239, %s235, 1
        %p241 = scmp.lt.s32.totalorder %s236, 2
        %s242 = scalar_select %p241, %s236, 2
        %s243 = smul.addr %s240, 3
        %s244 = sadd.s32 %s242, %s243
        %s245 = smul.addr %s238, 6
        %s246 = sadd.s32 %s244, %s245
        %s247 = smul.addr %s246, 4
        %s248 = scalar_lea.vmem %s3, %s247
        %s249 = smul.u32 2, %s24
        %s250 = smul.u32 3, %s25
        %s251 = smul.u32 2, %s24
        %s252 = smul.u32 3, %s25
        %p253 = scmp.lt.s32.totalorder %s23, 1
        %s254 = scalar_select %p253, %s23, 1
        %p255 = scmp.lt.s32.totalorder %s251, 1
        %s256 = scalar_select %p255, %s251, 1
        %p257 = scmp.lt.s32.totalorder %s252, 2
        %s258 = scalar_select %p257, %s252, 2
        %s259 = smul.addr %s256, 3
        %s260 = sadd.s32 %s258, %s259
        %s261 = smul.addr %s254, 6
        %s262 = sadd.s32 %s260, %s261
        %s263 = smul.addr %s262, 4
        %s264 = scalar_lea.vmem %s3, %s263
        %s265 = smul.u32 2, %s24
        %s266 = smul.u32 3, %s25
        %p267 = scmp.eq.s32.totalorder %s25, 0
        // Predicated region
        $region41: #{llada_block_forward.3} parent=31 // pred_check
          %p268 = pneg %p267
        $region42: #{llada_block_forward.3} parent=31 // pred_check_branch
          %270 = sbr.rel (%p268) target = $region44
        $region43: #{llada_block_forward.3} parent=31 // pred_region
          %v271 = vld [vmem:[%s211] sm:$0xff]
          %v272 = vld [vmem:[%s211 + $0x8] sm:$0xff]
          %v273 = vld [vmem:[%s1] sm:$0x1]
          %v274 = vmul.f32 %v271, %v271
          %v275 = vmul.f32 %v272, %v272
          %276 = vadd.xlane.f32.xlu0 %v274
          %v277 = vpop.xlane.xlu0 %276
          %278 = vadd.xlane.f32.xlu0 %v275
          %v279 = vpop.xlane.xlu0 %278
          %v280 = vrcp.pop 128.0
          %v281 = vmul.f32 128.0, %v280
          %v282 = vsub.f32 1.0, %v281
          %v283 = vmul.f32 %v280, %v282
          %v284 = vadd.f32 %v280, %v283
          %vm285 = vweird.f32 %v280
          %v286 = vsel %vm285, %v280, %v284
          %v287 = vmul.f32 %v277, %v286
          %v288 = vmul.f32 %v279, %v286
          %v289 = vadd.f32 %v287, 1e-06
          %v290 = vadd.f32 %v288, 1e-06
          %v291 = vrsqrt.pop %v289
          %v292 = vmul.f32 %v291, %v289
          %v293 = vmul.f32 %v292, %v291
          %v294 = vmul.f32 0.5, %v293
          %v295 = vsub.f32 1.5, %v294
          %v296 = vmul.f32 %v291, %v295
          %vm297 = vweird.f32 %v289
          %vm298 = vweird.f32 %v291
          %vm299 = vmor %vm297, %vm298
          %v300 = vsel %vm299, %v291, %v296
          %v301 = vrsqrt.pop %v290
          %v302 = vmul.f32 %v301, %v290
          %v303 = vmul.f32 %v302, %v301
          %v304 = vmul.f32 0.5, %v303
          %v305 = vsub.f32 1.5, %v304
          %v306 = vmul.f32 %v301, %v305
          %vm307 = vweird.f32 %v290
          %vm308 = vweird.f32 %v301
          %vm309 = vmor %vm307, %vm308
          %v310 = vsel %vm309, %v301, %v306
          %v311 = vmul.f32 %v271, %v300
          %v312 = vmul.f32 %v272, %v310
          %v314 = vperm.slane %v273, 0
          %v316 = vmul.f32 %v311, %v314
          %v317 = vmul.f32 %v312, %v314
          %v318 = vpack.c.bf16 %v316, %v316
          %v319 = vpack.c.bf16 %v317, %v317
          %320 = vst [vmem:[#allocation2] sm:$0xf] %v318
          %321 = vst [vmem:[#allocation2 + $0x4] sm:$0xf] %v319
        $region44: #{llada_block_forward.3} parent=31 // pred_fallthru
          _
        %v322 = vld [vmem:[#allocation2] sm:$0xf]
        %v323 = vld [vmem:[#allocation2 + $0x4] sm:$0xf]
        %v324 = vld [vmem:[#allocation5] sm:$0xff]
        %v325 = vld [vmem:[#allocation5 + $0x8] sm:$0xf]
        %v326 = vld [vmem:[#allocation5 + $0xc] sm:$0xff]
        %v327 = vld [vmem:[#allocation5 + $0x14] sm:$0xf]
        %v328 = vld [vmem:[#allocation5 + $0x18] sm:$0xff]
        %v329 = vld [vmem:[#allocation5 + $0x20] sm:$0xf]
        %v330 = vld [vmem:[#allocation5 + $0x24] sm:$0xff]
        %v331 = vld [vmem:[#allocation5 + $0x2c] sm:$0xf]
        %v332 = vld [vmem:[#allocation5 + $0x30] sm:$0xff]
        %v333 = vld [vmem:[#allocation5 + $0x38] sm:$0xf]
        %v334 = vld [vmem:[#allocation5 + $0x3c] sm:$0xff]
        %v335 = vld [vmem:[#allocation5 + $0x44] sm:$0xf]
        %v336 = vld [vmem:[#allocation5 + $0x48] sm:$0xff]
        %v337 = vld [vmem:[#allocation5 + $0x50] sm:$0xf]
        %v338 = vld [vmem:[#allocation5 + $0x54] sm:$0xff]
        %v339 = vld [vmem:[#allocation5 + $0x5c] sm:$0xf]
        %v340 = vld [vmem:[#allocation5 + $0x60] sm:$0xff]
        %v341 = vld [vmem:[#allocation5 + $0x68] sm:$0xf]
        %v342 = vld [vmem:[#allocation5 + $0x6c] sm:$0xff]
        %v343 = vld [vmem:[#allocation5 + $0x74] sm:$0xf]
        %v344 = vld [vmem:[#allocation5 + $0x78] sm:$0xff]
        %v345 = vld [vmem:[#allocation5 + $0x80] sm:$0xf]
        %v346 = vld [vmem:[#allocation5 + $0x84] sm:$0xff]
        %v347 = vld [vmem:[#allocation5 + $0x8c] sm:$0xf]
        %v348 = vld [vmem:[#allocation5 + $0x90] sm:$0xff]
        %v349 = vld [vmem:[#allocation5 + $0x98] sm:$0xf]
        %v350 = vld [vmem:[#allocation5 + $0x9c] sm:$0xff]
        %v351 = vld [vmem:[#allocation5 + $0xa4] sm:$0xf]
        %v352 = vld [vmem:[#allocation5 + $0xa8] sm:$0xff]
        %v353 = vld [vmem:[#allocation5 + $0xb0] sm:$0xf]
        %v354 = vld [vmem:[#allocation5 + $0xb4] sm:$0xff]
        %v355 = vld [vmem:[#allocation5 + $0xbc] sm:$0xf]
        %v358 = vunpack.c.l.b16 %v322
        %v359 = vunpack.c.l.b16 %v323
        %v360 = vpack.c.b16 %v359, %v358
        %v394 = vunpack.c.l.b16 %v324
        %v395 = vunpack.c.h.b16 %v324
        %v396 = vunpack.c.l.b16 %v325
        %v397 = vunpack.c.l.b16 %v326
        %v398 = vunpack.c.h.b16 %v326
        %v399 = vunpack.c.l.b16 %v327
        %v400 = vunpack.c.l.b16 %v328
        %v401 = vunpack.c.h.b16 %v328
        %v402 = vunpack.c.l.b16 %v329
        %v403 = vunpack.c.l.b16 %v330
        %v404 = vunpack.c.h.b16 %v330
        %v405 = vunpack.c.l.b16 %v331
        %v406 = vunpack.c.l.b16 %v332
        %v407 = vunpack.c.h.b16 %v332
        %v408 = vunpack.c.l.b16 %v333
        %v409 = vunpack.c.l.b16 %v334
        %v410 = vunpack.c.h.b16 %v334
        %v411 = vunpack.c.l.b16 %v335
        %v412 = vunpack.c.l.b16 %v336
        %v413 = vunpack.c.h.b16 %v336
        %v414 = vunpack.c.l.b16 %v337
        %v415 = vunpack.c.l.b16 %v338
        %v416 = vunpack.c.h.b16 %v338
        %v417 = vunpack.c.l.b16 %v339
        %v418 = vunpack.c.l.b16 %v340
        %v419 = vunpack.c.h.b16 %v340
        %v420 = vunpack.c.l.b16 %v341
        %v421 = vunpack.c.l.b16 %v342
        %v422 = vunpack.c.h.b16 %v342
        %v423 = vunpack.c.l.b16 %v343
        %v424 = vunpack.c.l.b16 %v344
        %v425 = vunpack.c.h.b16 %v344
        %v426 = vunpack.c.l.b16 %v345
        %v427 = vunpack.c.l.b16 %v346
        %v428 = vunpack.c.h.b16 %v346
        %v429 = vunpack.c.l.b16 %v347
        %v430 = vunpack.c.l.b16 %v348
        %v431 = vunpack.c.h.b16 %v348
        %v432 = vunpack.c.l.b16 %v349
        %v433 = vunpack.c.l.b16 %v350
        %v434 = vunpack.c.h.b16 %v350
        %v435 = vunpack.c.l.b16 %v351
        %v436 = vunpack.c.l.b16 %v352
        %v437 = vunpack.c.h.b16 %v352
        %v438 = vunpack.c.l.b16 %v353
        %v439 = vunpack.c.l.b16 %v354
        %v440 = vunpack.c.h.b16 %v354
        %v441 = vunpack.c.l.b16 %v355
        %v442 = vpack.c.b16 %v397, %v394
        %v443 = vpack.c.b16 %v398, %v395
        %v444 = vpack.c.b16 %v399, %v396
        %v445 = vpack.c.b16 %v403, %v400
        %v446 = vpack.c.b16 %v404, %v401
        %v447 = vpack.c.b16 %v405, %v402
        %v448 = vpack.c.b16 %v409, %v406
        %v449 = vpack.c.b16 %v410, %v407
        %v450 = vpack.c.b16 %v411, %v408
        %v451 = vpack.c.b16 %v415, %v412
        %v452 = vpack.c.b16 %v416, %v413
        %v453 = vpack.c.b16 %v417, %v414
        %v454 = vpack.c.b16 %v421, %v418
        %v455 = vpack.c.b16 %v422, %v419
        %v456 = vpack.c.b16 %v423, %v420
        %v457 = vpack.c.b16 %v427, %v424
        %v458 = vpack.c.b16 %v428, %v425
        %v459 = vpack.c.b16 %v429, %v426
        %v460 = vpack.c.b16 %v433, %v430
        %v461 = vpack.c.b16 %v434, %v431
        %v462 = vpack.c.b16 %v435, %v432
        %v463 = vpack.c.b16 %v439, %v436
        %v464 = vpack.c.b16 %v440, %v437
        %v465 = vpack.c.b16 %v441, %v438
        %490 = vmatpush.bf16.msra.mxu0 %v463
        %491 = vmatpush.bf16.msra.mxu0 %v460
        %492 = vmatpush.bf16.msra.mxu0 %v457
        %493 = vmatpush.bf16.msra.mxu0 %v454
        %494 = vmatpush.bf16.msra.mxu0 %v451
        %495 = vmatpush.bf16.msra.mxu0 %v448
        %496 = vmatpush.bf16.msra.mxu0 %v445
        %497 = vmatpush.bf16.msra.mxu0 %v442
        %498 = vmatmul.bf16.gmra.mxu0 %v360
        %v499 = vpop.f32.mrf.mxu0
        %v500 = vadd.f32 0.0, %v499
        %v501 = vpop.f32.mrf.mxu0
        %v502 = vadd.f32 0.0, %v501
        %503 = vdwg.mxu0
        %504 = vmatpush.bf16.msra.mxu0 %v464
        %505 = vmatpush.bf16.msra.mxu0 %v461
        %506 = vmatpush.bf16.msra.mxu0 %v458
        %507 = vmatpush.bf16.msra.mxu0 %v455
        %508 = vmatpush.bf16.msra.mxu0 %v452
        %509 = vmatpush.bf16.msra.mxu0 %v449
        %510 = vmatpush.bf16.msra.mxu0 %v446
        %511 = vmatpush.bf16.msra.mxu0 %v443
        %512 = vmatmul.bf16.gmra.mxu0 %v360
        %v513 = vpop.f32.mrf.mxu0
        %v514 = vadd.f32 0.0, %v513
        %v515 = vpop.f32.mrf.mxu0
        %v516 = vadd.f32 0.0, %v515
        %517 = vdwg.mxu0
        %518 = vmatpush.bf16.msra.mxu0 %v465
        %519 = vmatpush.bf16.msra.mxu0 %v462
        %520 = vmatpush.bf16.msra.mxu0 %v459
        %521 = vmatpush.bf16.msra.mxu0 %v456
        %522 = vmatpush.bf16.msra.mxu0 %v453
        %523 = vmatpush.bf16.msra.mxu0 %v450
        %524 = vmatpush.bf16.msra.mxu0 %v447
        %525 = vmatpush.bf16.msra.mxu0 %v444
        %526 = vmatmul.bf16.gmra.mxu0 %v360
        %v527 = vpop.f32.mrf.mxu0
        %v528 = vadd.f32 0.0, %v527
        %v529 = vpop.f32.mrf.mxu0
        %v530 = vadd.f32 0.0, %v529
        %531 = vdwg.mxu0
        %v532 = vpack.c.bf16 %v514, %v500
        %v533 = vpack.c.bf16 %v528, %v528
        %v534 = vpack.c.bf16 %v516, %v502
        %v535 = vpack.c.bf16 %v530, %v530
        %536 = vst [vmem:[%s264] sm:$0xff] %v532
        %537 = vst [vmem:[%s264 + $0x8] sm:$0xf] %v533
        %538 = vst [vmem:[%s264 + $0xc] sm:$0xff] %v534
        %539 = vst [vmem:[%s264 + $0x14] sm:$0xf] %v535
        %s540 = smul.u32 2, %s24
        %s541 = smul.u32 3, %s25
        %p542 = scmp.lt.s32.totalorder %s23, 1
        %s543 = scalar_select %p542, %s23, 1
        %p544 = scmp.lt.s32.totalorder %s540, 1
        %s545 = scalar_select %p544, %s540, 1
        %p546 = scmp.lt.s32.totalorder %s541, 2
        %s547 = scalar_select %p546, %s541, 2
        %s548 = smul.addr %s545, 3
        %s549 = sadd.s32 %s547, %s548
        %s550 = smul.addr %s543, 6
        %s551 = sadd.s32 %s549, %s550
        %s552 = smul.addr %s551, 4
        %s553 = scalar_lea.vmem %s3, %s552
        // Predicated region
        $region45: #{llada_block_forward.3} parent=31 // pred_check
          %p554 = pneg %p134
        $region46: #{llada_block_forward.3} parent=31 // pred_check_branch
          %556 = sbr.rel (%p554) target = $region48
        $region47: #{llada_block_forward.3} parent=31 // pred_region
          %s557 = smul.u32 2, %s24
          %s558 = smul.u32 3, %s25
        $region48: #{llada_block_forward.3} parent=31 // pred_fallthru
          _
      $region32: #{llada_block_forward.3} parent=5 // pred_fallthru
        _
      %p559 = scmp.le.s32.totalorder 2, %s13
      // Predicated region
      $region49: #{llada_block_forward.3} parent=5 // pred_check
        %p560 = pneg %p559
      $region50: #{llada_block_forward.3} parent=5 // pred_check_branch
        %562 = sbr.rel (%p560) target = $region52
      $region51: #{llada_block_forward.3} parent=5 // pred_region
        %s563 = ssub.s32 %s13, 2
        // Predicated region
        $region53: #{llada_block_forward.3} parent=51 // pred_check
          %p564 = pneg %p140
        $region54: #{llada_block_forward.3} parent=51 // pred_check_branch
          %566 = sbr.rel (%p564) target = $region56
        $region55: #{llada_block_forward.3} parent=51 // pred_region
          %s567 = smul.u32 2, %s27
          %s568 = smul.u32 3, %s28
          %p569 = scmp.lt.s32.totalorder %s26, 1
          %s570 = scalar_select %p569, %s26, 1
          %p571 = scmp.lt.s32.totalorder %s567, 1
          %s572 = scalar_select %p571, %s567, 1
          %p573 = scmp.lt.s32.totalorder %s568, 2
          %s574 = scalar_select %p573, %s568, 2
          %s575 = smul.addr %s572, 3
          %s576 = sadd.s32 %s574, %s575
          %s577 = smul.addr %s570, 6
          %s578 = sadd.s32 %s576, %s577
          %s579 = smul.addr %s578, 4
          %s580 = scalar_lea.vmem %s3, %s579
        $region56: #{llada_block_forward.3} parent=51 // pred_fallthru
          _
      $region52: #{llada_block_forward.3} parent=5 // pred_fallthru
        _
    $region6: #{llada_block_forward.3} parent=1 // loop_footer
      %s17 = sadd.s32 1, %s13
    $region7: #{llada_block_forward.3} parent=1 // loop_footer_branch
      %12 = sbr.rel target = $region3
    $region8: #{llada_block_forward.3} parent=1 // loop_exit
      _
    %581 = vsyncpa [#allocation4], 1
    %s582 = scalar_lea.sflag [#allocation4], 1
    %583 = vsyncpa %s582, 1
    %584 = vsyncpa [#allocation6], 1

// kernel: llada_block_forward.4
$region0: #{llada_block_forward.4}
  #allocation0 [shape = 'u32[]', space=smem, size = 0x4, offset = 0x4, fixed_abs, tag = 'smem constant byte address 0x4 - core index']
  #allocation1 [shape = 'u32[72,128]{1,0:T(1,128)}', space=vmem, size = 0x9000, scoped, tag = 'internal scratch']
  #allocation2 [shape = 'f32[4,16,128]{2,1,0:T(8,128)}', space=vmem, size = 0x8000, scoped, tag = 'scratch operand']
  #allocation3 [shape = 'f32[4,16,128]{2,1,0:T(8,128)}', space=vmem, size = 0x8000, scoped, tag = 'scratch operand']
  #allocation4 [shape = 'f32[16,128]{1,0:T(8,128)}', space=vmem, size = 0x2000, scoped, tag = 'scratch operand']
  %s0 = inlined_call_operand.hbm [shape: f32[2,16,128], index: 0, kind: input, shape index: {}]
  %s1 = inlined_call_operand.vmem [shape: bf16[2,16,384], index: 1, kind: input, shape index: {}, may-alias: {1,2,3}]
  %s2 = inlined_call_operand.vmem [shape: bf16[2,16,384], index: 2, kind: input, shape index: {}, may-alias: {1,2,3}]
  %s3 = inlined_call_operand.vmem [shape: bf16[2,16,384], index: 3, kind: input, shape index: {}, may-alias: {1,2,3}]
  %s4 = inlined_call_operand.hbm [shape: bf16[128,128], index: 4, kind: input, shape index: {}]
  %s5 = inlined_call_operand.vmem [shape: f32[1,128], index: 5, kind: input, shape index: {}]
  %s6 = inlined_call_operand.vmem [shape: f32[128,128], index: 6, kind: input, shape index: {}]
  %s7 = inlined_call_operand.vmem [shape: f32[2,16,128], index: 7, kind: output, shape index: {0}]
  %s8 = inlined_call_operand.vmem [shape: f32[2,16,128], index: 8, kind: output, shape index: {1}]
  %9 = xla_tuple %s7, %s8
  %s10 = sld [smem:[#allocation0]]
  $region208: #{llada_block_forward.4} parent=0
    _
  %s12 = ssub.s32 1, %s10
  %s13 = scalar_select 0, %s12, %s10
  $region1: #{llada_block_forward.4} parent=0
    #allocation5 [shape = 'u8[16384]{0}', space=vmem, size = 0x4000, scoped, tag = 'input window, operand 0']
    #allocation6 [shape = 's32[2]{0}', space=sflag, size = 0x8, scoped, tag = 'scoped memory for llada_block_forward.4']
    #allocation7 [shape = 'u8[8192]{0}', space=vmem, size = 0x2000, scoped, tag = 'input window, operand 1']
    #allocation8 [shape = 'u8[8192]{0}', space=vmem, size = 0x2000, scoped, tag = 'input window, operand 2']
    #allocation9 [shape = 'u8[8192]{0}', space=vmem, size = 0x2000, scoped, tag = 'input window, operand 3']
    #allocation10 [shape = 'u8[32768]{0}', space=vmem, size = 0x8000, scoped, tag = 'input window, operand 4, single buffered']
    #allocation11 [shape = 's32[1]{0}', space=sflag, size = 0x4, scoped, tag = 'scoped memory for llada_block_forward.4']
    %14 = vsyncpa [#allocation6], 0
    %s15 = scalar_lea.sflag [#allocation6], 1
    %16 = vsyncpa %s15, 0
    %17 = vsyncpa [#allocation11], 0
    loop: start=0, step=1, limit=4
    $region2: #{llada_block_forward.4} parent=1 // loop_pre_header
      _
    $region3: #{llada_block_forward.4} parent=1 // loop_header
      %s19 = sphi 0, %s23
      %p20 = scmp.ge.s32.totalorder %s19, 4
      %s26 = sphi 0, %s45
      %s27 = sphi 0, %s41
      %s28 = sphi 0, %s37
      %s29 = sphi 0, %s26
      %s30 = sphi 0, %s27
      %s31 = sphi 0, %s28
      %s32 = sphi 0, %s29
      %s33 = sphi 0, %s30
      %s34 = sphi 0, %s31
      %s50 = sphi 0, %s52
      %s53 = sphi 0, %s50
      %s54 = sphi 0, %s53
      %s70 = sphi 0, %s54
      %s78 = sphi 0, %s80
      %s81 = sphi 0, %s78
      %s82 = sphi 0, %s81
      %s98 = sphi 0, %s82
      %s106 = sphi 0, %s108
      %s109 = sphi 0, %s106
      %s110 = sphi 0, %s109
      %s126 = sphi 0, %s110
      %s134 = sphi 0, %s136
      %s137 = sphi 0, %s134
      %s138 = sphi 0, %s137
      %s154 = sphi 0, %s138
      %s158 = sphi 0, %s158
      %s160 = sphi 0, %s158
      %s161 = sphi 0, %s160
      %s175 = sphi 0, %s161
      %s179 = sphi 0, %s179
      %s181 = sphi 0, %s179
      %s182 = sphi 0, %s181
      %s196 = sphi 0, %s182
      %s200 = sphi 0, %s200
      %s202 = sphi 0, %s200
      %s203 = sphi 0, %s202
      %s217 = sphi 0, %s203
      %s225 = sphi 0, %s227
      %s228 = sphi 0, %s225
      %s229 = sphi 0, %s228
      %s245 = sphi 0, %s229
      %s253 = sphi 0, %s255
      %s256 = sphi 0, %s253
      %s257 = sphi 0, %s256
      %s273 = sphi 0, %s257
    $region4: #{llada_block_forward.4} parent=1 // loop_header_branch
      %22 = sbr.rel (%p20) target = $region8
    $region5: #{llada_block_forward.4} parent=1 // loop_body
      %s24 = ssub.s32 %s19, 1
      %s25 = ssub.s32 %s19, 2
      %s35 = sadd.s32 1, %s28
      %p36 = scmp.ge.s32.totalorder %s35, 1
      %s37 = scalar_select %p36, 0, %s35
      %s38 = sadd.s32 1, %s27
      %s39 = scalar_select %p36, %s38, %s27
      %p40 = scmp.ge.s32.totalorder %s39, 1
      %s41 = scalar_select %p40, 0, %s39
      %s42 = sadd.s32 1, %s26
      %s43 = scalar_select %p40, %s42, %s26
      %p44 = scmp.ge.s32.totalorder %s43, 2
      %s45 = scalar_select %p44, 0, %s43
      %s46 = ssub.s32 %s26, %s45
      %s47 = ssub.s32 %s27, %s41
      %s48 = sor.u32 %s46, %s47
      %p49 = scmp.eq.s32.totalorder %s48, 0
      %s51 = sadd.s32 %s50, 1
      %s52 = scalar_select %p49, %s50, %s51
      %p55 = pneg %p49
      %p56 = scmp.eq.s32.totalorder %s19, 1
      %p57 = por %p55, %p56
      %p58 = scmp.ne.s32.totalorder %s50, %s53
      %p59 = scmp.eq.s32.totalorder %s19, 0
      %p60 = por %p58, %p59
      %p61 = scmp.ne.s32.totalorder %s50, %s53
      %p62 = scmp.eq.s32.totalorder %s24, 1
      %p63 = por %p61, %p62
      %p64 = scmp.ne.s32.totalorder %s53, %s54
      %p65 = scmp.eq.s32.totalorder %s24, 0
      %p66 = por %p64, %p65
      %p67 = scmp.ne.s32.totalorder %s53, %s54
      %p68 = scmp.eq.s32.totalorder %s25, 1
      %p69 = por %p67, %p68
      %p71 = scmp.ne.s32.totalorder %s54, %s70
      %p72 = scmp.eq.s32.totalorder %s25, 0
      %p73 = por %p71, %p72
      %s74 = ssub.s32 %s26, %s45
      %s75 = ssub.s32 %s27, %s41
      %s76 = sor.u32 %s74, %s75
      %p77 = scmp.eq.s32.totalorder %s76, 0
      %s79 = sadd.s32 %s78, 1
      %s80 = scalar_select %p77, %s78, %s79
      %p83 = pneg %p77
      %p84 = scmp.eq.s32.totalorder %s19, 1
      %p85 = por %p83, %p84
      %p86 = scmp.ne.s32.totalorder %s78, %s81
      %p87 = scmp.eq.s32.totalorder %s19, 0
      %p88 = por %p86, %p87
      %p89 = scmp.ne.s32.totalorder %s78, %s81
      %p90 = scmp.eq.s32.totalorder %s24, 1
      %p91 = por %p89, %p90
      %p92 = scmp.ne.s32.totalorder %s81, %s82
      %p93 = scmp.eq.s32.totalorder %s24, 0
      %p94 = por %p92, %p93
      %p95 = scmp.ne.s32.totalorder %s81, %s82
      %p96 = scmp.eq.s32.totalorder %s25, 1
      %p97 = por %p95, %p96
      %p99 = scmp.ne.s32.totalorder %s82, %s98
      %p100 = scmp.eq.s32.totalorder %s25, 0
      %p101 = por %p99, %p100
      %s102 = ssub.s32 %s26, %s45
      %s103 = ssub.s32 %s28, %s37
      %s104 = sor.u32 %s102, %s103
      %p105 = scmp.eq.s32.totalorder %s104, 0
      %s107 = sadd.s32 %s106, 1
      %s108 = scalar_select %p105, %s106, %s107
      %p111 = pneg %p105
      %p112 = scmp.eq.s32.totalorder %s19, 1
      %p113 = por %p111, %p112
      %p114 = scmp.ne.s32.totalorder %s106, %s109
      %p115 = scmp.eq.s32.totalorder %s19, 0
      %p116 = por %p114, %p115
      %p117 = scmp.ne.s32.totalorder %s106, %s109
      %p118 = scmp.eq.s32.totalorder %s24, 1
      %p119 = por %p117, %p118
      %p120 = scmp.ne.s32.totalorder %s109, %s110
      %p121 = scmp.eq.s32.totalorder %s24, 0
      %p122 = por %p120, %p121
      %p123 = scmp.ne.s32.totalorder %s109, %s110
      %p124 = scmp.eq.s32.totalorder %s25, 1
      %p125 = por %p123, %p124
      %p127 = scmp.ne.s32.totalorder %s110, %s126
      %p128 = scmp.eq.s32.totalorder %s25, 0
      %p129 = por %p127, %p128
      %s130 = ssub.s32 %s26, %s45
      %s131 = ssub.s32 %s28, %s37
      %s132 = sor.u32 %s130, %s131
      %p133 = scmp.eq.s32.totalorder %s132, 0
      %s135 = sadd.s32 %s134, 1
      %s136 = scalar_select %p133, %s134, %s135
      %p139 = pneg %p133
      %p140 = scmp.eq.s32.totalorder %s19, 1
      %p141 = por %p139, %p140
      %p142 = scmp.ne.s32.totalorder %s134, %s137
      %p143 = scmp.eq.s32.totalorder %s19, 0
      %p144 = por %p142, %p143
      %p145 = scmp.ne.s32.totalorder %s134, %s137
      %p146 = scmp.eq.s32.totalorder %s24, 1
      %p147 = por %p145, %p146
      %p148 = scmp.ne.s32.totalorder %s137, %s138
      %p149 = scmp.eq.s32.totalorder %s24, 0
      %p150 = por %p148, %p149
      %p151 = scmp.ne.s32.totalorder %s137, %s138
      %p152 = scmp.eq.s32.totalorder %s25, 1
      %p153 = por %p151, %p152
      %p155 = scmp.ne.s32.totalorder %s138, %s154
      %p156 = scmp.eq.s32.totalorder %s25, 0
      %p157 = por %p155, %p156
      %s159 = sadd.s32 %s158, 1
      %p162 = scmp.eq.s32.totalorder %s19, 1
      %p163 = scmp.ne.s32.totalorder %s158, %s160
      %p164 = scmp.eq.s32.totalorder %s19, 0
      %p165 = por %p163, %p164
      %p166 = scmp.ne.s32.totalorder %s158, %s160
      %p167 = scmp.eq.s32.totalorder %s24, 1
      %p168 = por %p166, %p167
      %p169 = scmp.ne.s32.totalorder %s160, %s161
      %p170 = scmp.eq.s32.totalorder %s24, 0
      %p171 = por %p169, %p170
      %p172 = scmp.ne.s32.totalorder %s160, %s161
      %p173 = scmp.eq.s32.totalorder %s25, 1
      %p174 = por %p172, %p173
      %p176 = scmp.ne.s32.totalorder %s161, %s175
      %p177 = scmp.eq.s32.totalorder %s25, 0
      %p178 = por %p176, %p177
      %s180 = sadd.s32 %s179, 1
      %p183 = scmp.eq.s32.totalorder %s19, 1
      %p184 = scmp.ne.s32.totalorder %s179, %s181
      %p185 = scmp.eq.s32.totalorder %s19, 0
      %p186 = por %p184, %p185
      %p187 = scmp.ne.s32.totalorder %s179, %s181
      %p188 = scmp.eq.s32.totalorder %s24, 1
      %p189 = por %p187, %p188
      %p190 = scmp.ne.s32.totalorder %s181, %s182
      %p191 = scmp.eq.s32.totalorder %s24, 0
      %p192 = por %p190, %p191
      %p193 = scmp.ne.s32.totalorder %s181, %s182
      %p194 = scmp.eq.s32.totalorder %s25, 1
      %p195 = por %p193, %p194
      %p197 = scmp.ne.s32.totalorder %s182, %s196
      %p198 = scmp.eq.s32.totalorder %s25, 0
      %p199 = por %p197, %p198
      %s201 = sadd.s32 %s200, 1
      %p204 = scmp.eq.s32.totalorder %s19, 1
      %p205 = scmp.ne.s32.totalorder %s200, %s202
      %p206 = scmp.eq.s32.totalorder %s19, 0
      %p207 = por %p205, %p206
      %p208 = scmp.ne.s32.totalorder %s200, %s202
      %p209 = scmp.eq.s32.totalorder %s24, 1
      %p210 = por %p208, %p209
      %p211 = scmp.ne.s32.totalorder %s202, %s203
      %p212 = scmp.eq.s32.totalorder %s24, 0
      %p213 = por %p211, %p212
      %p214 = scmp.ne.s32.totalorder %s202, %s203
      %p215 = scmp.eq.s32.totalorder %s25, 1
      %p216 = por %p214, %p215
      %p218 = scmp.ne.s32.totalorder %s203, %s217
      %p219 = scmp.eq.s32.totalorder %s25, 0
      %p220 = por %p218, %p219
      %s221 = ssub.s32 %s26, %s45
      %s222 = ssub.s32 %s27, %s41
      %s223 = sor.u32 %s221, %s222
      %p224 = scmp.eq.s32.totalorder %s223, 0
      %s226 = sadd.s32 %s225, 1
      %s227 = scalar_select %p224, %s225, %s226
      %p230 = pneg %p224
      %p231 = scmp.eq.s32.totalorder %s19, 1
      %p232 = por %p230, %p231
      %p233 = scmp.ne.s32.totalorder %s225, %s228
      %p234 = scmp.eq.s32.totalorder %s19, 0
      %p235 = por %p233, %p234
      %p236 = scmp.ne.s32.totalorder %s225, %s228
      %p237 = scmp.eq.s32.totalorder %s24, 1
      %p238 = por %p236, %p237
      %p239 = scmp.ne.s32.totalorder %s228, %s229
      %p240 = scmp.eq.s32.totalorder %s24, 0
      %p241 = por %p239, %p240
      %p242 = scmp.ne.s32.totalorder %s228, %s229
      %p243 = scmp.eq.s32.totalorder %s25, 1
      %p244 = por %p242, %p243
      %p246 = scmp.ne.s32.totalorder %s229, %s245
      %p247 = scmp.eq.s32.totalorder %s25, 0
      %p248 = por %p246, %p247
      %s249 = ssub.s32 %s26, %s45
      %s250 = ssub.s32 %s27, %s41
      %s251 = sor.u32 %s249, %s250
      %p252 = scmp.eq.s32.totalorder %s251, 0
      %s254 = sadd.s32 %s253, 1
      %s255 = scalar_select %p252, %s253, %s254
      %p258 = pneg %p252
      %p259 = scmp.eq.s32.totalorder %s19, 1
      %p260 = por %p258, %p259
      %p261 = scmp.ne.s32.totalorder %s253, %s256
      %p262 = scmp.eq.s32.totalorder %s19, 0
      %p263 = por %p261, %p262
      %p264 = scmp.ne.s32.totalorder %s253, %s256
      %p265 = scmp.eq.s32.totalorder %s24, 1
      %p266 = por %p264, %p265
      %p267 = scmp.ne.s32.totalorder %s256, %s257
      %p268 = scmp.eq.s32.totalorder %s24, 0
      %p269 = por %p267, %p268
      %p270 = scmp.ne.s32.totalorder %s256, %s257
      %p271 = scmp.eq.s32.totalorder %s25, 1
      %p272 = por %p270, %p271
      %p274 = scmp.ne.s32.totalorder %s257, %s273
      %p275 = scmp.eq.s32.totalorder %s25, 0
      %p276 = por %p274, %p275
      %p277 = scmp.le.s32.totalorder 1, %s19
      %p278 = scmp.lt.s32.totalorder %s19, 3
      %p279 = pnand %p277, %p278
      %p280 = pneg %p279
      // Predicated region
      $region9: #{llada_block_forward.4} parent=5 // pred_check
        _
      $region10: #{llada_block_forward.4} parent=5 // pred_check_branch
        %282 = sbr.rel (%p279) target = $region12
      $region11: #{llada_block_forward.4} parent=5 // pred_region
        %s283 = ssub.s32 %s19, 1
        // Predicated region
        $region13: #{llada_block_forward.4} parent=11 // pred_check
          %p284 = pneg %p171
        $region14: #{llada_block_forward.4} parent=11 // pred_check_branch
          %286 = sbr.rel (%p284) target = $region16
        $region15: #{llada_block_forward.4} parent=11 // pred_region
          %288 = vsyncadd [#allocation11], 0
          %s289 = sshll.u32 %s4, 4
          %s290 = int_to_ptr.hbm [resolvable:$true] %s289
          %s291 = sshll.u32 [#allocation10], 4
          %s292 = int_to_ptr.vmem [resolvable:$true] %s291
          %297 = dma.hbm_to_vmem [thread:$0]  %s290, 1024, %s292, [#allocation11], 64, 64, 4
        $region16: #{llada_block_forward.4} parent=11 // pred_fallthru
          _
        // Predicated region
        $region17: #{llada_block_forward.4} parent=11 // pred_check
          %p298 = pneg %p192
        $region18: #{llada_block_forward.4} parent=11 // pred_check_branch
          %300 = sbr.rel (%p298) target = $region20
        $region19: #{llada_block_forward.4} parent=11 // pred_region
          _
        $region20: #{llada_block_forward.4} parent=11 // pred_fallthru
          _
        // Predicated region
        $region21: #{llada_block_forward.4} parent=11 // pred_check
          %p301 = pneg %p213
        $region22: #{llada_block_forward.4} parent=11 // pred_check_branch
          %303 = sbr.rel (%p301) target = $region24
        $region23: #{llada_block_forward.4} parent=11 // pred_region
          _
        $region24: #{llada_block_forward.4} parent=11 // pred_fallthru
          _
      $region12: #{llada_block_forward.4} parent=5 // pred_fallthru
        _
      %p304 = scmp.lt.s32.totalorder %s19, 2
      // Predicated region
      $region25: #{llada_block_forward.4} parent=5 // pred_check
        %p305 = pneg %p304
      $region26: #{llada_block_forward.4} parent=5 // pred_check_branch
        %307 = sbr.rel (%p305) target = $region28
      $region27: #{llada_block_forward.4} parent=5 // pred_region
        // Predicated region
        $region29: #{llada_block_forward.4} parent=27 // pred_check
          %p308 = pneg %p60
        $region30: #{llada_block_forward.4} parent=27 // pred_check_branch
          %310 = sbr.rel (%p308) target = $region32
        $region31: #{llada_block_forward.4} parent=27 // pred_region
          %s311 = sand.u32 %s50, 1
          %s312 = scalar_lea.sflag [#allocation6], %s311
          %s313 = sand.u32 %s50, 1
          %s314 = smul.addr %s313, 16
          %s315 = scalar_lea.vmem [#allocation5], %s314
          %s316 = smul.u32 2, %s27
          %318 = vsyncadd %s312, 0
          %s319 = smul.addr %s26, 2
          %s320 = sadd.s32 %s316, %s319
          %s321 = smul.addr %s320, 8
          %s322 = scalar_lea.hbm %s0, %s321
          %s323 = sshll.u32 %s322, 4
          %s324 = int_to_ptr.hbm [resolvable:$true] %s323
          %s325 = sshll.u32 %s315, 4
          %s326 = int_to_ptr.vmem [resolvable:$true] %s325
          %331 = dma.hbm_to_vmem [thread:$0]  %s324, 256, %s326, %s312, 128, 128, 8
        $region32: #{llada_block_forward.4} parent=27 // pred_fallthru
          _
        // Predicated region
        $region33: #{llada_block_forward.4} parent=27 // pred_check
          %p332 = pneg %p88
        $region34: #{llada_block_forward.4} parent=27 // pred_check_branch
          %334 = sbr.rel (%p332) target = $region36
        $region35: #{llada_block_forward.4} parent=27 // pred_region
          %s335 = sand.u32 %s78, 1
          %s336 = sand.u32 %s78, 1
          %s337 = smul.addr %s336, 8
          %s338 = scalar_lea.vmem [#allocation7], %s337
          %s339 = smul.u32 2, %s27
          %s340 = smul.addr %s339, 3
          %s341 = smul.addr %s26, 6
          %s342 = sadd.s32 %s340, %s341
          %s343 = smul.addr %s342, 4
          %s344 = scalar_lea.vmem %s1, %s343
          // Predicated region
          $region37: #{llada_block_forward.4} parent=35 // pred_check
            _
          $region38: #{llada_block_forward.4} parent=35 // pred_check_branch
            %346 = sbr.rel (0) target = $region40
          $region39: #{llada_block_forward.4} parent=35 // pred_region
            // Predicated region
            $region41: #{llada_block_forward.4} parent=39 // pred_check
              _
            $region42: #{llada_block_forward.4} parent=39 // pred_check_branch
              %348 = sbr.rel target = $region44
            $region43: #{llada_block_forward.4} parent=39 // pred_region
              // Predicated region
              $region56: #{llada_block_forward.4} parent=43 // pred_check
                _
              $region57: #{llada_block_forward.4} parent=43 // pred_check_branch
                %366 = sbr.rel (0) target = $region59
              $region58: #{llada_block_forward.4} parent=43 // pred_region
                loop: start=0, step=1, limit=1
                $region60: #{llada_block_forward.4} parent=58 // loop_pre_header
                  _
                $region61: #{llada_block_forward.4} parent=58 // loop_header
                  %s368 = sphi 0, %s372
                  %p369 = scmp.ge.s32.totalorder %s368, 1
                  %s373 = sphi %s344, %s344
                  %s374 = sphi %s338, %s338
                $region62: #{llada_block_forward.4} parent=58 // loop_header_branch
                  %371 = sbr.rel (%p369) target = $region66
                $region63: #{llada_block_forward.4} parent=58 // loop_body
                  _
                $region64: #{llada_block_forward.4} parent=58 // loop_footer
                  %s372 = sadd.s32 1, %s368
                $region65: #{llada_block_forward.4} parent=58 // loop_footer_branch
                  %367 = sbr.rel target = $region61
                $region66: #{llada_block_forward.4} parent=58 // loop_exit
                  _
                %s376 = ssub.s32 16, 1
                loop: start=0, step=1, limit=1
                $region67: #{llada_block_forward.4} parent=58 // loop_pre_header
                  _
                $region68: #{llada_block_forward.4} parent=58 // loop_header
                  %s378 = sphi 0, %s382
                  %p379 = scmp.ge.s32.totalorder %s378, 1
                  %s383 = sphi %s344, %s344
                  %s384 = sphi %s338, %s338
                $region69: #{llada_block_forward.4} parent=58 // loop_header_branch
                  %381 = sbr.rel (%p379) target = $region73
                $region70: #{llada_block_forward.4} parent=58 // loop_body
                  %v385 = vld [vmem:[%s383] sm:%s376]
                  %386 = vst [vmem:[%s384] sm:%s376] %v385
                  %v387 = vld [vmem:[%s383 + $0xc] sm:%s376]
                  %388 = vst [vmem:[%s384 + $0x4] sm:%s376] %v387
                $region71: #{llada_block_forward.4} parent=58 // loop_footer
                  %s382 = sadd.s32 1, %s378
                $region72: #{llada_block_forward.4} parent=58 // loop_footer_branch
                  %377 = sbr.rel target = $region68
                $region73: #{llada_block_forward.4} parent=58 // loop_exit
                  _
              $region59: #{llada_block_forward.4} parent=43 // pred_fallthru
                _
            $region44: #{llada_block_forward.4} parent=39 // pred_fallthru
              _
            // Predicated region
            $region45: #{llada_block_forward.4} parent=39 // pred_check
              _
            $region46: #{llada_block_forward.4} parent=39 // pred_check_branch
              %350 = sbr.rel (0) target = $region48
            $region47: #{llada_block_forward.4} parent=39 // pred_region
              %s352 = ssub.s32 16, 1
              loop: start=0, step=1, limit=1
              $region49: #{llada_block_forward.4} parent=47 // loop_pre_header
                _
              $region50: #{llada_block_forward.4} parent=47 // loop_header
                %s354 = sphi 0, %s358
                %p355 = scmp.ge.s32.totalorder %s354, 1
                %s359 = sphi %s344, %s344
                %s360 = sphi %s338, %s338
              $region51: #{llada_block_forward.4} parent=47 // loop_header_branch
                %357 = sbr.rel (%p355) target = $region55
              $region52: #{llada_block_forward.4} parent=47 // loop_body
                %v361 = vld [vmem:[%s359] sm:%s352]
                %362 = vst [vmem:[%s360] sm:%s352] %v361
                %v363 = vld [vmem:[%s359 + $0xc] sm:%s352]
                %364 = vst [vmem:[%s360 + $0x4] sm:%s352] %v363
              $region53: #{llada_block_forward.4} parent=47 // loop_footer
                %s358 = sadd.s32 1, %s354
              $region54: #{llada_block_forward.4} parent=47 // loop_footer_branch
                %353 = sbr.rel target = $region50
              $region55: #{llada_block_forward.4} parent=47 // loop_exit
                _
            $region48: #{llada_block_forward.4} parent=39 // pred_fallthru
              _
          $region40: #{llada_block_forward.4} parent=35 // pred_fallthru
            _
          %389 = vnop
        $region36: #{llada_block_forward.4} parent=27 // pred_fallthru
          _
        // Predicated region
        $region74: #{llada_block_forward.4} parent=27 // pred_check
          %p390 = pneg %p116
        $region75: #{llada_block_forward.4} parent=27 // pred_check_branch
          %392 = sbr.rel (%p390) target = $region77
        $region76: #{llada_block_forward.4} parent=27 // pred_region
          %s393 = sand.u32 %s106, 1
          %s394 = sand.u32 %s106, 1
          %s395 = smul.addr %s394, 8
          %s396 = scalar_lea.vmem [#allocation8], %s395
          %s397 = smul.u32 2, %s28
          %s398 = smul.addr %s397, 3
          %s399 = sadd.s32 1, %s398
          %s400 = smul.addr %s26, 6
          %s401 = sadd.s32 %s399, %s400
          %s402 = smul.addr %s401, 4
          %s403 = scalar_lea.vmem %s2, %s402
          // Predicated region
          $region78: #{llada_block_forward.4} parent=76 // pred_check
            _
          $region79: #{llada_block_forward.4} parent=76 // pred_check_branch
            %405 = sbr.rel (0) target = $region81
          $region80: #{llada_block_forward.4} parent=76 // pred_region
            // Predicated region
            $region82: #{llada_block_forward.4} parent=80 // pred_check
              _
            $region83: #{llada_block_forward.4} parent=80 // pred_check_branch
              %407 = sbr.rel target = $region85
            $region84: #{llada_block_forward.4} parent=80 // pred_region
              // Predicated region
              $region97: #{llada_block_forward.4} parent=84 // pred_check
                _
              $region98: #{llada_block_forward.4} parent=84 // pred_check_branch
                %425 = sbr.rel (0) target = $region100
              $region99: #{llada_block_forward.4} parent=84 // pred_region
                loop: start=0, step=1, limit=1
                $region101: #{llada_block_forward.4} parent=99 // loop_pre_header
                  _
                $region102: #{llada_block_forward.4} parent=99 // loop_header
                  %s427 = sphi 0, %s431
                  %p428 = scmp.ge.s32.totalorder %s427, 1
                  %s432 = sphi %s403, %s403
                  %s433 = sphi %s396, %s396
                $region103: #{llada_block_forward.4} parent=99 // loop_header_branch
                  %430 = sbr.rel (%p428) target = $region107
                $region104: #{llada_block_forward.4} parent=99 // loop_body
                  _
                $region105: #{llada_block_forward.4} parent=99 // loop_footer
                  %s431 = sadd.s32 1, %s427
                $region106: #{llada_block_forward.4} parent=99 // loop_footer_branch
                  %426 = sbr.rel target = $region102
                $region107: #{llada_block_forward.4} parent=99 // loop_exit
                  _
                %s435 = ssub.s32 16, 1
                loop: start=0, step=1, limit=1
                $region108: #{llada_block_forward.4} parent=99 // loop_pre_header
                  _
                $region109: #{llada_block_forward.4} parent=99 // loop_header
                  %s437 = sphi 0, %s441
                  %p438 = scmp.ge.s32.totalorder %s437, 1
                  %s442 = sphi %s403, %s403
                  %s443 = sphi %s396, %s396
                $region110: #{llada_block_forward.4} parent=99 // loop_header_branch
                  %440 = sbr.rel (%p438) target = $region114
                $region111: #{llada_block_forward.4} parent=99 // loop_body
                  %v444 = vld [vmem:[%s442] sm:%s435]
                  %445 = vst [vmem:[%s443] sm:%s435] %v444
                  %v446 = vld [vmem:[%s442 + $0xc] sm:%s435]
                  %447 = vst [vmem:[%s443 + $0x4] sm:%s435] %v446
                $region112: #{llada_block_forward.4} parent=99 // loop_footer
                  %s441 = sadd.s32 1, %s437
                $region113: #{llada_block_forward.4} parent=99 // loop_footer_branch
                  %436 = sbr.rel target = $region109
                $region114: #{llada_block_forward.4} parent=99 // loop_exit
                  _
              $region100: #{llada_block_forward.4} parent=84 // pred_fallthru
                _
            $region85: #{llada_block_forward.4} parent=80 // pred_fallthru
              _
            // Predicated region
            $region86: #{llada_block_forward.4} parent=80 // pred_check
              _
            $region87: #{llada_block_forward.4} parent=80 // pred_check_branch
              %409 = sbr.rel (0) target = $region89
            $region88: #{llada_block_forward.4} parent=80 // pred_region
              %s411 = ssub.s32 16, 1
              loop: start=0, step=1, limit=1
              $region90: #{llada_block_forward.4} parent=88 // loop_pre_header
                _
              $region91: #{llada_block_forward.4} parent=88 // loop_header
                %s413 = sphi 0, %s417
                %p414 = scmp.ge.s32.totalorder %s413, 1
                %s418 = sphi %s403, %s403
                %s419 = sphi %s396, %s396
              $region92: #{llada_block_forward.4} parent=88 // loop_header_branch
                %416 = sbr.rel (%p414) target = $region96
              $region93: #{llada_block_forward.4} parent=88 // loop_body
                %v420 = vld [vmem:[%s418] sm:%s411]
                %421 = vst [vmem:[%s419] sm:%s411] %v420
                %v422 = vld [vmem:[%s418 + $0xc] sm:%s411]
                %423 = vst [vmem:[%s419 + $0x4] sm:%s411] %v422
              $region94: #{llada_block_forward.4} parent=88 // loop_footer
                %s417 = sadd.s32 1, %s413
              $region95: #{llada_block_forward.4} parent=88 // loop_footer_branch
                %412 = sbr.rel target = $region91
              $region96: #{llada_block_forward.4} parent=88 // loop_exit
                _
            $region89: #{llada_block_forward.4} parent=80 // pred_fallthru
              _
          $region81: #{llada_block_forward.4} parent=76 // pred_fallthru
            _
          %448 = vnop
        $region77: #{llada_block_forward.4} parent=27 // pred_fallthru
          _
        // Predicated region
        $region115: #{llada_block_forward.4} parent=27 // pred_check
          %p449 = pneg %p144
        $region116: #{llada_block_forward.4} parent=27 // pred_check_branch
          %451 = sbr.rel (%p449) target = $region118
        $region117: #{llada_block_forward.4} parent=27 // pred_region
          %s452 = sand.u32 %s134, 1
          %s453 = sand.u32 %s134, 1
          %s454 = smul.addr %s453, 8
          %s455 = scalar_lea.vmem [#allocation9], %s454
          %s456 = smul.u32 2, %s28
          %s457 = smul.addr %s456, 3
          %s458 = sadd.s32 2, %s457
          %s459 = smul.addr %s26, 6
          %s460 = sadd.s32 %s458, %s459
          %s461 = smul.addr %s460, 4
          %s462 = scalar_lea.vmem %s3, %s461
          // Predicated region
          $region119: #{llada_block_forward.4} parent=117 // pred_check
            _
          $region120: #{llada_block_forward.4} parent=117 // pred_check_branch
            %464 = sbr.rel (0) target = $region122
          $region121: #{llada_block_forward.4} parent=117 // pred_region
            // Predicated region
            $region123: #{llada_block_forward.4} parent=121 // pred_check
              _
            $region124: #{llada_block_forward.4} parent=121 // pred_check_branch
              %466 = sbr.rel target = $region126
            $region125: #{llada_block_forward.4} parent=121 // pred_region
              // Predicated region
              $region138: #{llada_block_forward.4} parent=125 // pred_check
                _
              $region139: #{llada_block_forward.4} parent=125 // pred_check_branch
                %484 = sbr.rel (0) target = $region141
              $region140: #{llada_block_forward.4} parent=125 // pred_region
                loop: start=0, step=1, limit=1
                $region142: #{llada_block_forward.4} parent=140 // loop_pre_header
                  _
                $region143: #{llada_block_forward.4} parent=140 // loop_header
                  %s486 = sphi 0, %s490
                  %p487 = scmp.ge.s32.totalorder %s486, 1
                  %s491 = sphi %s462, %s462
                  %s492 = sphi %s455, %s455
                $region144: #{llada_block_forward.4} parent=140 // loop_header_branch
                  %489 = sbr.rel (%p487) target = $region148
                $region145: #{llada_block_forward.4} parent=140 // loop_body
                  _
                $region146: #{llada_block_forward.4} parent=140 // loop_footer
                  %s490 = sadd.s32 1, %s486
                $region147: #{llada_block_forward.4} parent=140 // loop_footer_branch
                  %485 = sbr.rel target = $region143
                $region148: #{llada_block_forward.4} parent=140 // loop_exit
                  _
                %s494 = ssub.s32 16, 1
                loop: start=0, step=1, limit=1
                $region149: #{llada_block_forward.4} parent=140 // loop_pre_header
                  _
                $region150: #{llada_block_forward.4} parent=140 // loop_header
                  %s496 = sphi 0, %s500
                  %p497 = scmp.ge.s32.totalorder %s496, 1
                  %s501 = sphi %s462, %s462
                  %s502 = sphi %s455, %s455
                $region151: #{llada_block_forward.4} parent=140 // loop_header_branch
                  %499 = sbr.rel (%p497) target = $region155
                $region152: #{llada_block_forward.4} parent=140 // loop_body
                  %v503 = vld [vmem:[%s501] sm:%s494]
                  %504 = vst [vmem:[%s502] sm:%s494] %v503
                  %v505 = vld [vmem:[%s501 + $0xc] sm:%s494]
                  %506 = vst [vmem:[%s502 + $0x4] sm:%s494] %v505
                $region153: #{llada_block_forward.4} parent=140 // loop_footer
                  %s500 = sadd.s32 1, %s496
                $region154: #{llada_block_forward.4} parent=140 // loop_footer_branch
                  %495 = sbr.rel target = $region150
                $region155: #{llada_block_forward.4} parent=140 // loop_exit
                  _
              $region141: #{llada_block_forward.4} parent=125 // pred_fallthru
                _
            $region126: #{llada_block_forward.4} parent=121 // pred_fallthru
              _
            // Predicated region
            $region127: #{llada_block_forward.4} parent=121 // pred_check
              _
            $region128: #{llada_block_forward.4} parent=121 // pred_check_branch
              %468 = sbr.rel (0) target = $region130
            $region129: #{llada_block_forward.4} parent=121 // pred_region
              %s470 = ssub.s32 16, 1
              loop: start=0, step=1, limit=1
              $region131: #{llada_block_forward.4} parent=129 // loop_pre_header
                _
              $region132: #{llada_block_forward.4} parent=129 // loop_header
                %s472 = sphi 0, %s476
                %p473 = scmp.ge.s32.totalorder %s472, 1
                %s477 = sphi %s462, %s462
                %s478 = sphi %s455, %s455
              $region133: #{llada_block_forward.4} parent=129 // loop_header_branch
                %475 = sbr.rel (%p473) target = $region137
              $region134: #{llada_block_forward.4} parent=129 // loop_body
                %v479 = vld [vmem:[%s477] sm:%s470]
                %480 = vst [vmem:[%s478] sm:%s470] %v479
                %v481 = vld [vmem:[%s477 + $0xc] sm:%s470]
                %482 = vst [vmem:[%s478 + $0x4] sm:%s470] %v481
              $region135: #{llada_block_forward.4} parent=129 // loop_footer
                %s476 = sadd.s32 1, %s472
              $region136: #{llada_block_forward.4} parent=129 // loop_footer_branch
                %471 = sbr.rel target = $region132
              $region137: #{llada_block_forward.4} parent=129 // loop_exit
                _
            $region130: #{llada_block_forward.4} parent=121 // pred_fallthru
              _
          $region122: #{llada_block_forward.4} parent=117 // pred_fallthru
            _
          %507 = vnop
        $region118: #{llada_block_forward.4} parent=27 // pred_fallthru
          _
      $region28: #{llada_block_forward.4} parent=5 // pred_fallthru
        _
      %p508 = scmp.le.s32.totalorder 1, %s19
      %p509 = scmp.lt.s32.totalorder %s19, 3
      %p510 = pnand %p508, %p509
      %p511 = pneg %p510
      // Predicated region
      $region156: #{llada_block_forward.4} parent=5 // pred_check
        _
      $region157: #{llada_block_forward.4} parent=5 // pred_check_branch
        %513 = sbr.rel (%p510) target = $region159
      $region158: #{llada_block_forward.4} parent=5 // pred_region
        %s514 = ssub.s32 %s19, 1
        %s515 = sand.u32 %s53, 1
        %s516 = scalar_lea.sflag [#allocation6], %s515
        %s517 = sand.u32 %s53, 1
        %s518 = smul.addr %s517, 16
        %s519 = scalar_lea.vmem [#allocation5], %s518
        // Predicated region
        $region160: #{llada_block_forward.4} parent=158 // pred_check
          %p520 = pneg %p66
        $region161: #{llada_block_forward.4} parent=158 // pred_check_branch
          %522 = sbr.rel (%p520) target = $region163
        $region162: #{llada_block_forward.4} parent=158 // pred_region
          %524 = dma.done %s516, 256
        $region163: #{llada_block_forward.4} parent=158 // pred_fallthru
          _
        %s525 = sand.u32 %s81, 1
        %s526 = sand.u32 %s81, 1
        %s527 = smul.addr %s526, 8
        %s528 = scalar_lea.vmem [#allocation7], %s527
        // Predicated region
        $region164: #{llada_block_forward.4} parent=158 // pred_check
          %p529 = pneg %p94
        $region165: #{llada_block_forward.4} parent=158 // pred_check_branch
          %531 = sbr.rel (%p529) target = $region167
        $region166: #{llada_block_forward.4} parent=158 // pred_region
          _
        $region167: #{llada_block_forward.4} parent=158 // pred_fallthru
          _
        %s532 = sand.u32 %s109, 1
        %s533 = sand.u32 %s109, 1
        %s534 = smul.addr %s533, 8
        %s535 = scalar_lea.vmem [#allocation8], %s534
        // Predicated region
        $region168: #{llada_block_forward.4} parent=158 // pred_check
          %p536 = pneg %p122
        $region169: #{llada_block_forward.4} parent=158 // pred_check_branch
          %538 = sbr.rel (%p536) target = $region171
        $region170: #{llada_block_forward.4} parent=158 // pred_region
          _
        $region171: #{llada_block_forward.4} parent=158 // pred_fallthru
          _
        %s539 = sand.u32 %s137, 1
        %s540 = sand.u32 %s137, 1
        %s541 = smul.addr %s540, 8
        %s542 = scalar_lea.vmem [#allocation9], %s541
        // Predicated region
        $region172: #{llada_block_forward.4} parent=158 // pred_check
          %p543 = pneg %p150
        $region173: #{llada_block_forward.4} parent=158 // pred_check_branch
          %545 = sbr.rel (%p543) target = $region175
        $region174: #{llada_block_forward.4} parent=158 // pred_region
          _
        $region175: #{llada_block_forward.4} parent=158 // pred_fallthru
          _
        // Predicated region
        $region176: #{llada_block_forward.4} parent=158 // pred_check
          %p546 = pneg %p171
        $region177: #{llada_block_forward.4} parent=158 // pred_check_branch
          %548 = sbr.rel (%p546) target = $region179
        $region178: #{llada_block_forward.4} parent=158 // pred_region
          %550 = dma.done [#allocation11], 1024
        $region179: #{llada_block_forward.4} parent=158 // pred_fallthru
          _
        %s551 = sand.u32 %s53, 1
        %s552 = scalar_lea.sflag [#allocation6], %s551
        %s553 = sand.u32 %s53, 1
        %s554 = smul.addr %s553, 16
        %s555 = scalar_lea.vmem [#allocation5], %s554
        %p556 = pneg %p66
        %p557 = pneg %p63
        %s558 = sand.u32 %s81, 1
        %s559 = sand.u32 %s81, 1
        %s560 = smul.addr %s559, 8
        %s561 = scalar_lea.vmem [#allocation7], %s560
        %p562 = pneg %p94
        %p563 = pneg %p91
        %s564 = sand.u32 %s109, 1
        %s565 = sand.u32 %s109, 1
        %s566 = smul.addr %s565, 8
        %s567 = scalar_lea.vmem [#allocation8], %s566
        %p568 = pneg %p122
        %p569 = pneg %p119
        %s570 = sand.u32 %s137, 1
        %s571 = sand.u32 %s137, 1
        %s572 = smul.addr %s571, 8
        %s573 = scalar_lea.vmem [#allocation9], %s572
        %p574 = pneg %p150
        %p575 = pneg %p147
        %p576 = pneg %p171
        %p577 = pneg %p168
        %p578 = pneg %p192
        %p579 = pneg %p189
        %p580 = pneg %p213
        %p581 = pneg %p210
        %p582 = pneg %p241
        %p583 = pneg %p238
        %s584 = smul.u32 2, %s30
        %p585 = scmp.lt.s32.totalorder %s29, 1
        %s586 = scalar_select %p585, %s29, 1
        %p587 = scmp.lt.s32.totalorder %s584, 1
        %s588 = scalar_select %p587, %s584, 1
        %s589 = smul.addr %s586, 2
        %s590 = sadd.s32 %s588, %s589
        %s591 = smul.addr %s590, 8
        %s592 = scalar_lea.vmem %s7, %s591
        %p593 = pneg %p269
        %p594 = pneg %p266
        %s595 = smul.u32 2, %s30
        %p596 = scmp.lt.s32.totalorder %s29, 1
        %s597 = scalar_select %p596, %s29, 1
        %p598 = scmp.lt.s32.totalorder %s595, 1
        %s599 = scalar_select %p598, %s595, 1
        %s600 = smul.addr %s597, 2
        %s601 = sadd.s32 %s599, %s600
        %s602 = smul.addr %s601, 8
        %s603 = scalar_lea.vmem %s8, %s602
        %s604 = smul.u32 2, %s30
        %s605 = smul.u32 2, %s30
        %s606 = smul.u32 2, %s31
        %s607 = smul.u32 2, %s31
        %s608 = smul.u32 2, %s30
        %p609 = scmp.lt.s32.totalorder %s29, 1
        %s610 = scalar_select %p609, %s29, 1
        %p611 = scmp.lt.s32.totalorder %s608, 1
        %s612 = scalar_select %p611, %s608, 1
        %s613 = smul.addr %s610, 2
        %s614 = sadd.s32 %s612, %s613
        %s615 = smul.addr %s614, 8
        %s616 = scalar_lea.vmem %s7, %s615
        %s617 = smul.u32 2, %s30
        %s618 = smul.u32 2, %s30
        %p619 = scmp.lt.s32.totalorder %s29, 1
        %s620 = scalar_select %p619, %s29, 1
        %p621 = scmp.lt.s32.totalorder %s618, 1
        %s622 = scalar_select %p621, %s618, 1
        %s623 = smul.addr %s620, 2
        %s624 = sadd.s32 %s622, %s623
        %s625 = smul.addr %s624, 8
        %s626 = scalar_lea.vmem %s8, %s625
        %s627 = smul.u32 2, %s30
        %p629 = scmp.eq.s32.totalorder %s31, 0
        // Predicated region
        $region180: #{llada_block_forward.4} parent=158 // pred_check
          %p630 = pneg %p629
        $region181: #{llada_block_forward.4} parent=158 // pred_check_branch
          %632 = sbr.rel (%p630) target = $region183
        $region182: #{llada_block_forward.4} parent=158 // pred_region
          %633 = vst [vmem:[#allocation2] sm:$0xff] -inf
          %634 = vst [vmem:[#allocation2 + $0x8] sm:$0xff] -inf
          %635 = vst [vmem:[#allocation2 + $0x10] sm:$0xff] -inf
          %636 = vst [vmem:[#allocation2 + $0x18] sm:$0xff] -inf
          %637 = vst [vmem:[#allocation2 + $0x20] sm:$0xff] -inf
          %638 = vst [vmem:[#allocation2 + $0x28] sm:$0xff] -inf
          %639 = vst [vmem:[#allocation2 + $0x30] sm:$0xff] -inf
          %640 = vst [vmem:[#allocation2 + $0x38] sm:$0xff] -inf
          %641 = vst [vmem:[#allocation3] sm:$0xff] 0.0
          %642 = vst [vmem:[#allocation3 + $0x8] sm:$0xff] 0.0
          %643 = vst [vmem:[#allocation3 + $0x10] sm:$0xff] 0.0
          %644 = vst [vmem:[#allocation3 + $0x18] sm:$0xff] 0.0
          %645 = vst [vmem:[#allocation3 + $0x20] sm:$0xff] 0.0
          %646 = vst [vmem:[#allocation3 + $0x28] sm:$0xff] 0.0
          %647 = vst [vmem:[#allocation3 + $0x30] sm:$0xff] 0.0
          %648 = vst [vmem:[#allocation3 + $0x38] sm:$0xff] 0.0
          %649 = vst [vmem:[#allocation4] sm:$0xff] 0.0
          %650 = vst [vmem:[#allocation4 + $0x8] sm:$0xff] 0.0
        $region183: #{llada_block_forward.4} parent=158 // pred_fallthru
          _
        %v651 = vld [vmem:[%s528] sm:$0xf]
        %v652 = vld [vmem:[%s528 + $0x4] sm:$0xf]
        %v653 = vld [vmem:[%s535] sm:$0xf]
        %v654 = vld [vmem:[%s535 + $0x4] sm:$0xf]
        %v655 = vld [vmem:[%s542] sm:$0xf]
        %v656 = vld [vmem:[%s542 + $0x4] sm:$0xf]
        %v659 = vunpack.c.l.b16 %v651
        %v660 = vunpack.c.l.b16 %v652
        %v661 = vpack.c.b16 %v660, %v659
        %v664 = vunpack.c.l.b16 %v653
        %v665 = vunpack.c.l.b16 %v654
        %v666 = vpack.c.b16 %v665, %v664
        %vm667 = vcmask 261120
        %v669 = vsel %vm667, %v661, 0
        %v672 = vsel %vm667, %v666, 0
        %674 = vmatpush.bf16.xpose.msra.mxu0 0
        %675 = vmatpush.bf16.xpose.msra.mxu0 0
        %676 = vmatpush.bf16.xpose.msra.mxu0 0
        %677 = vmatpush.bf16.xpose.msra.mxu0 0
        %678 = vmatpush.bf16.xpose.msra.mxu0 0
        %679 = vmatpush.bf16.xpose.msra.mxu0 0
        %680 = vmatpush.bf16.xpose.msra.mxu0 0
        %681 = vmatpush.bf16.xpose.msra.mxu0 %v672
        %682 = vmatmul.bf16.gmra.mxu0 %v669
        %v683 = vpop.f32.mrf.mxu0
        %v684 = vadd.f32 0.0, %v683
        %v685 = vpop.f32.mrf.mxu0
        %v686 = vadd.f32 0.0, %v685
        %687 = vdwg.mxu0
        %v688 = vmul.f32 %v684, 0.17677669
        %v689 = vmul.f32 %v686, 0.17677669
        %v690 = vld [vmem:[#allocation2] sm:$0xff]
        %v691 = vld [vmem:[#allocation2 + $0x8] sm:$0xff]
        %vm692 = vcmask 130048
        %v693 = vsel %vm692, %v688, -inf
        %694 = vmax.xlane.f32.xlu0 %v693
        %v695 = vpop.xlane.xlu0 %694
        %v696 = vsel %vm692, %v689, -inf
        %697 = vmax.xlane.f32.xlu0 %v696
        %v698 = vpop.xlane.xlu0 %697
        %v699 = vmax.f32 %v690, %v695
        %v700 = vmax.f32 %v691, %v698
        %v701 = vsub.f32 %v690, %v699
        %v702 = vsub.f32 %v691, %v700
        %v703 = vmul.f32 %v701, 1.442695
        %v704 = vpow.pop %v703
        %v705 = vmul.f32 %v702, 1.442695
        %v706 = vpow.pop %v705
        %708 = vset.pattern.permute.xlu0 0
        %709 = vperm.xlu0 %708, %v699
        %v710 = vpop.permute.xlu0 %709
        %713 = vset.pattern.permute.xlu0 0
        %714 = vperm.xlu0 %713, %v700
        %v715 = vpop.permute.xlu0 %714
        %v717 = vsub.f32 %v688, %v710
        %v718 = vsub.f32 %v689, %v715
        %v719 = vmul.f32 %v717, 1.442695
        %v720 = vpow.pop %v719
        %v721 = vmul.f32 %v718, 1.442695
        %v722 = vpow.pop %v721
        %v723 = vld [vmem:[#allocation3] sm:$0xff]
        %v724 = vld [vmem:[#allocation3 + $0x8] sm:$0xff]
        %v725 = vmul.f32 %v704, %v723
        %v726 = vmul.f32 %v706, %v724
        %v727 = vsel %vm692, %v720, 0.0
        %728 = vadd.xlane.f32.xlu0 %v727
        %v729 = vpop.xlane.xlu0 %728
        %v730 = vsel %vm692, %v722, 0.0
        %731 = vadd.xlane.f32.xlu0 %v730
        %v732 = vpop.xlane.xlu0 %731
        %v733 = vadd.f32 %v725, %v729
        %v734 = vadd.f32 %v726, %v732
        %735 = vst [vmem:[#allocation3] sm:$0xff] %v733
        %736 = vst [vmem:[#allocation3 + $0x8] sm:$0xff] %v734
        %v737 = vld [vmem:[#allocation4] sm:$0xff]
        %v738 = vld [vmem:[#allocation4 + $0x8] sm:$0xff]
        %v739 = vmul.f32 %v704, %v737
        %v740 = vmul.f32 %v706, %v738
        %v741 = vpack.c.bf16 %v722, %v720
        %v744 = vunpack.c.l.b16 %v655
        %v745 = vunpack.c.l.b16 %v656
        %v746 = vpack.c.b16 %v745, %v744
        %v749 = vsel %vm692, %v741, 0
        %751 = vmatpush.bf16.msra.mxu0 0
        %752 = vmatpush.bf16.msra.mxu0 0
        %753 = vmatpush.bf16.msra.mxu0 0
        %754 = vmatpush.bf16.msra.mxu0 0
        %755 = vmatpush.bf16.msra.mxu0 0
        %756 = vmatpush.bf16.msra.mxu0 0
        %757 = vmatpush.bf16.msra.mxu0 0
        %758 = vmatpush.bf16.msra.mxu0 %v746
        %759 = vmatmul.bf16.gmra.mxu0 %v749
        %v760 = vpop.f32.mrf.mxu0
        %v761 = vadd.f32 0.0, %v760
        %v762 = vpop.f32.mrf.mxu0
        %v763 = vadd.f32 0.0, %v762
        %764 = vdwg.mxu0
        %v765 = vadd.f32 %v739, %v761
        %v766 = vadd.f32 %v740, %v763
        %767 = vst.msk [vmem:[#allocation4] sm:$0xff] %vm667, %v765
        %768 = vst.msk [vmem:[#allocation4 + $0x8] sm:$0xff] %vm667, %v766
        %769 = vst [vmem:[#allocation2] sm:$0xff] %v699
        %770 = vst [vmem:[#allocation2 + $0x8] sm:$0xff] %v700
        %771 = vrot.lane.b32.xlu0 %v661, 96
        %v772 = vpop.permute.xlu0 %771
        %773 = vrot.lane.b32.xlu0 %v666, 96
        %v774 = vpop.permute.xlu0 %773
        %v776 = vsel %vm667, %v772, 0
        %v779 = vsel %vm667, %v774, 0
        %781 = vmatpush.bf16.xpose.msra.mxu0 0
        %782 = vmatpush.bf16.xpose.msra.mxu0 0
        %783 = vmatpush.bf16.xpose.msra.mxu0 0
        %784 = vmatpush.bf16.xpose.msra.mxu0 0
        %785 = vmatpush.bf16.xpose.msra.mxu0 0
        %786 = vmatpush.bf16.xpose.msra.mxu0 0
        %787 = vmatpush.bf16.xpose.msra.mxu0 0
        %788 = vmatpush.bf16.xpose.msra.mxu0 %v779
        %789 = vmatmul.bf16.gmra.mxu0 %v776
        %v790 = vpop.f32.mrf.mxu0
        %v791 = vadd.f32 0.0, %v790
        %v792 = vpop.f32.mrf.mxu0
        %v793 = vadd.f32 0.0, %v792
        %794 = vdwg.mxu0
        %v795 = vmul.f32 %v791, 0.17677669
        %v796 = vmul.f32 %v793, 0.17677669
        %s797 = scalar_lea.vmem [#allocation2], 16
        %v798 = vld [vmem:[%s797] sm:$0xff]
        %v799 = vld [vmem:[%s797 + $0x8] sm:$0xff]
        %v800 = vsel %vm692, %v795, -inf
        %801 = vmax.xlane.f32.xlu0 %v800
        %v802 = vpop.xlane.xlu0 %801
        %v803 = vsel %vm692, %v796, -inf
        %804 = vmax.xlane.f32.xlu0 %v803
        %v805 = vpop.xlane.xlu0 %804
        %v806 = vmax.f32 %v798, %v802
        %v807 = vmax.f32 %v799, %v805
        %v808 = vsub.f32 %v798, %v806
        %v809 = vsub.f32 %v799, %v807
        %v810 = vmul.f32 %v808, 1.442695
        %v811 = vpow.pop %v810
        %v812 = vmul.f32 %v809, 1.442695
        %v813 = vpow.pop %v812
        %815 = vset.pattern.permute.xlu0 0
        %816 = vperm.xlu0 %815, %v806
        %v817 = vpop.permute.xlu0 %816
        %820 = vset.pattern.permute.xlu0 0
        %821 = vperm.xlu0 %820, %v807
        %v822 = vpop.permute.xlu0 %821
        %v824 = vsub.f32 %v795, %v817
        %v825 = vsub.f32 %v796, %v822
        %v826 = vmul.f32 %v824, 1.442695
        %v827 = vpow.pop %v826
        %v828 = vmul.f32 %v825, 1.442695
        %v829 = vpow.pop %v828
        %s830 = scalar_lea.vmem [#allocation3], 16
        %v831 = vld [vmem:[%s830] sm:$0xff]
        %v832 = vld [vmem:[%s830 + $0x8] sm:$0xff]
        %v833 = vmul.f32 %v811, %v831
        %v834 = vmul.f32 %v813, %v832
        %v835 = vsel %vm692, %v827, 0.0
        %836 = vadd.xlane.f32.xlu0 %v835
        %v837 = vpop.xlane.xlu0 %836
        %v838 = vsel %vm692, %v829, 0.0
        %839 = vadd.xlane.f32.xlu0 %v838
        %v840 = vpop.xlane.xlu0 %839
        %v841 = vadd.f32 %v833, %v837
        %v842 = vadd.f32 %v834, %v840
        %843 = vst [vmem:[%s830] sm:$0xff] %v841
        %844 = vst [vmem:[%s830 + $0x8] sm:$0xff] %v842
        %v845 = vld [vmem:[#allocation4] sm:$0xff]
        %v846 = vld [vmem:[#allocation4 + $0x8] sm:$0xff]
        %849 = vrot.lane.b32.xlu0 %v845, 96
        %v850 = vpop.permute.xlu0 %849
        %851 = vrot.lane.b32.xlu0 %v846, 96
        %v852 = vpop.permute.xlu0 %851
        %v855 = vmul.f32 %v811, %v850
        %v856 = vmul.f32 %v813, %v852
        %v857 = vpack.c.bf16 %v829, %v827
        %858 = vrot.lane.b32.xlu0 %v746, 96
        %v859 = vpop.permute.xlu0 %858
        %v862 = vsel %vm692, %v857, 0
        %864 = vmatpush.bf16.msra.mxu0 0
        %865 = vmatpush.bf16.msra.mxu0 0
        %866 = vmatpush.bf16.msra.mxu0 0
        %867 = vmatpush.bf16.msra.mxu0 0
        %868 = vmatpush.bf16.msra.mxu0 0
        %869 = vmatpush.bf16.msra.mxu0 0
        %870 = vmatpush.bf16.msra.mxu0 0
        %871 = vmatpush.bf16.msra.mxu0 %v859
        %872 = vmatmul.bf16.gmra.mxu0 %v862
        %v873 = vpop.f32.mrf.mxu0
        %v874 = vadd.f32 0.0, %v873
        %v875 = vpop.f32.mrf.mxu0
        %v876 = vadd.f32 0.0, %v875
        %877 = vdwg.mxu0
        %v878 = vadd.f32 %v855, %v874
        %v879 = vadd.f32 %v856, %v876
        %882 = vrot.lane.b32.xlu0 %v878, 32
        %v883 = vpop.permute.xlu0 %882
        %884 = vrot.lane.b32.xlu0 %v879, 32
        %v885 = vpop.permute.xlu0 %884
        %vm888 = vcmask 523520
        %889 = vst.msk [vmem:[#allocation4] sm:$0xff] %vm888, %v883
        %890 = vst.msk [vmem:[#allocation4 + $0x8] sm:$0xff] %vm888, %v885
        %891 = vst [vmem:[%s797] sm:$0xff] %v806
        %892 = vst [vmem:[%s797 + $0x8] sm:$0xff] %v807
        %893 = vrot.lane.b32.xlu0 %v661, 64
        %v894 = vpop.permute.xlu0 %893
        %895 = vrot.lane.b32.xlu0 %v666, 64
        %v896 = vpop.permute.xlu0 %895
        %v898 = vsel %vm667, %v894, 0
        %v901 = vsel %vm667, %v896, 0
        %903 = vmatpush.bf16.xpose.msra.mxu0 0
        %904 = vmatpush.bf16.xpose.msra.mxu0 0
        %905 = vmatpush.bf16.xpose.msra.mxu0 0
        %906 = vmatpush.bf16.xpose.msra.mxu0 0
        %907 = vmatpush.bf16.xpose.msra.mxu0 0
        %908 = vmatpush.bf16.xpose.msra.mxu0 0
        %909 = vmatpush.bf16.xpose.msra.mxu0 0
        %910 = vmatpush.bf16.xpose.msra.mxu0 %v901
        %911 = vmatmul.bf16.gmra.mxu0 %v898
        %v912 = vpop.f32.mrf.mxu0
        %v913 = vadd.f32 0.0, %v912
        %v914 = vpop.f32.mrf.mxu0
        %v915 = vadd.f32 0.0, %v914
        %916 = vdwg.mxu0
        %v917 = vmul.f32 %v913, 0.17677669
        %v918 = vmul.f32 %v915, 0.17677669
        %s919 = scalar_lea.vmem [#allocation2], 32
        %v920 = vld [vmem:[%s919] sm:$0xff]
        %v921 = vld [vmem:[%s919 + $0x8] sm:$0xff]
        %v922 = vsel %vm692, %v917, -inf
        %923 = vmax.xlane.f32.xlu0 %v922
        %v924 = vpop.xlane.xlu0 %923
        %v925 = vsel %vm692, %v918, -inf
        %926 = vmax.xlane.f32.xlu0 %v925
        %v927 = vpop.xlane.xlu0 %926
        %v928 = vmax.f32 %v920, %v924
        %v929 = vmax.f32 %v921, %v927
        %v930 = vsub.f32 %v920, %v928
        %v931 = vsub.f32 %v921, %v929
        %v932 = vmul.f32 %v930, 1.442695
        %v933 = vpow.pop %v932
        %v934 = vmul.f32 %v931, 1.442695
        %v935 = vpow.pop %v934
        %937 = vset.pattern.permute.xlu0 0
        %938 = vperm.xlu0 %937, %v928
        %v939 = vpop.permute.xlu0 %938
        %942 = vset.pattern.permute.xlu0 0
        %943 = vperm.xlu0 %942, %v929
        %v944 = vpop.permute.xlu0 %943
        %v946 = vsub.f32 %v917, %v939
        %v947 = vsub.f32 %v918, %v944
        %v948 = vmul.f32 %v946, 1.442695
        %v949 = vpow.pop %v948
        %v950 = vmul.f32 %v947, 1.442695
        %v951 = vpow.pop %v950
        %s952 = scalar_lea.vmem [#allocation3], 32
        %v953 = vld [vmem:[%s952] sm:$0xff]
        %v954 = vld [vmem:[%s952 + $0x8] sm:$0xff]
        %v955 = vmul.f32 %v933, %v953
        %v956 = vmul.f32 %v935, %v954
        %v957 = vsel %vm692, %v949, 0.0
        %958 = vadd.xlane.f32.xlu0 %v957
        %v959 = vpop.xlane.xlu0 %958
        %v960 = vsel %vm692, %v951, 0.0
        %961 = vadd.xlane.f32.xlu0 %v960
        %v962 = vpop.xlane.xlu0 %961
        %v963 = vadd.f32 %v955, %v959
        %v964 = vadd.f32 %v956, %v962
        %965 = vst [vmem:[%s952] sm:$0xff] %v963
        %966 = vst [vmem:[%s952 + $0x8] sm:$0xff] %v964
        %v967 = vld [vmem:[#allocation4] sm:$0xff]
        %v968 = vld [vmem:[#allocation4 + $0x8] sm:$0xff]
        %971 = vrot.lane.b32.xlu0 %v967, 64
        %v972 = vpop.permute.xlu0 %971
        %973 = vrot.lane.b32.xlu0 %v968, 64
        %v974 = vpop.permute.xlu0 %973
        %v977 = vmul.f32 %v933, %v972
        %v978 = vmul.f32 %v935, %v974
        %v979 = vpack.c.bf16 %v951, %v949
        %980 = vrot.lane.b32.xlu0 %v746, 64
        %v981 = vpop.permute.xlu0 %980
        %v984 = vsel %vm692, %v979, 0
        %986 = vmatpush.bf16.msra.mxu0 0
        %987 = vmatpush.bf16.msra.mxu0 0
        %988 = vmatpush.bf16.msra.mxu0 0
        %989 = vmatpush.bf16.msra.mxu0 0
        %990 = vmatpush.bf16.msra.mxu0 0
        %991 = vmatpush.bf16.msra.mxu0 0
        %992 = vmatpush.bf16.msra.mxu0 0
        %993 = vmatpush.bf16.msra.mxu0 %v981
        %994 = vmatmul.bf16.gmra.mxu0 %v984
        %v995 = vpop.f32.mrf.mxu0
        %v996 = vadd.f32 0.0, %v995
        %v997 = vpop.f32.mrf.mxu0
        %v998 = vadd.f32 0.0, %v997
        %999 = vdwg.mxu0
        %v1000 = vadd.f32 %v977, %v996
        %v1001 = vadd.f32 %v978, %v998
        %1004 = vrot.lane.b32.xlu0 %v1000, 64
        %v1005 = vpop.permute.xlu0 %1004
        %1006 = vrot.lane.b32.xlu0 %v1001, 64
        %v1007 = vpop.permute.xlu0 %1006
        %vm1010 = vcmask 785920
        %1011 = vst.msk [vmem:[#allocation4] sm:$0xff] %vm1010, %v1005
        %1012 = vst.msk [vmem:[#allocation4 + $0x8] sm:$0xff] %vm1010, %v1007
        %1013 = vst [vmem:[%s919] sm:$0xff] %v928
        %1014 = vst [vmem:[%s919 + $0x8] sm:$0xff] %v929
        %1015 = vrot.lane.b32.xlu0 %v661, 32
        %v1016 = vpop.permute.xlu0 %1015
        %1017 = vrot.lane.b32.xlu0 %v666, 32
        %v1018 = vpop.permute.xlu0 %1017
        %v1020 = vsel %vm667, %v1016, 0
        %v1023 = vsel %vm667, %v1018, 0
        %1025 = vmatpush.bf16.xpose.msra.mxu0 0
        %1026 = vmatpush.bf16.xpose.msra.mxu0 0
        %1027 = vmatpush.bf16.xpose.msra.mxu0 0
        %1028 = vmatpush.bf16.xpose.msra.mxu0 0
        %1029 = vmatpush.bf16.xpose.msra.mxu0 0
        %1030 = vmatpush.bf16.xpose.msra.mxu0 0
        %1031 = vmatpush.bf16.xpose.msra.mxu0 0
        %1032 = vmatpush.bf16.xpose.msra.mxu0 %v1023
        %1033 = vmatmul.bf16.gmra.mxu0 %v1020
        %v1034 = vpop.f32.mrf.mxu0
        %v1035 = vadd.f32 0.0, %v1034
        %v1036 = vpop.f32.mrf.mxu0
        %v1037 = vadd.f32 0.0, %v1036
        %1038 = vdwg.mxu0
        %v1039 = vmul.f32 %v1035, 0.17677669
        %v1040 = vmul.f32 %v1037, 0.17677669
        %s1041 = scalar_lea.vmem [#allocation2], 48
        %v1042 = vld [vmem:[%s1041] sm:$0xff]
        %v1043 = vld [vmem:[%s1041 + $0x8] sm:$0xff]
        %v1044 = vsel %vm692, %v1039, -inf
        %1045 = vmax.xlane.f32.xlu0 %v1044
        %v1046 = vpop.xlane.xlu0 %1045
        %v1047 = vsel %vm692, %v1040, -inf
        %1048 = vmax.xlane.f32.xlu0 %v1047
        %v1049 = vpop.xlane.xlu0 %1048
        %v1050 = vmax.f32 %v1042, %v1046
        %v1051 = vmax.f32 %v1043, %v1049
        %v1052 = vsub.f32 %v1042, %v1050
        %v1053 = vsub.f32 %v1043, %v1051
        %v1054 = vmul.f32 %v1052, 1.442695
        %v1055 = vpow.pop %v1054
        %v1056 = vmul.f32 %v1053, 1.442695
        %v1057 = vpow.pop %v1056
        %1059 = vset.pattern.permute.xlu0 0
        %1060 = vperm.xlu0 %1059, %v1050
        %v1061 = vpop.permute.xlu0 %1060
        %1064 = vset.pattern.permute.xlu0 0
        %1065 = vperm.xlu0 %1064, %v1051
        %v1066 = vpop.permute.xlu0 %1065
        %v1068 = vsub.f32 %v1039, %v1061
        %v1069 = vsub.f32 %v1040, %v1066
        %v1070 = vmul.f32 %v1068, 1.442695
        %v1071 = vpow.pop %v1070
        %v1072 = vmul.f32 %v1069, 1.442695
        %v1073 = vpow.pop %v1072
        %s1074 = scalar_lea.vmem [#allocation3], 48
        %v1075 = vld [vmem:[%s1074] sm:$0xff]
        %v1076 = vld [vmem:[%s1074 + $0x8] sm:$0xff]
        %v1077 = vmul.f32 %v1055, %v1075
        %v1078 = vmul.f32 %v1057, %v1076
        %v1079 = vsel %vm692, %v1071, 0.0
        %1080 = vadd.xlane.f32.xlu0 %v1079
        %v1081 = vpop.xlane.xlu0 %1080
        %v1082 = vsel %vm692, %v1073, 0.0
        %1083 = vadd.xlane.f32.xlu0 %v1082
        %v1084 = vpop.xlane.xlu0 %1083
        %v1085 = vadd.f32 %v1077, %v1081
        %v1086 = vadd.f32 %v1078, %v1084
        %1087 = vst [vmem:[%s1074] sm:$0xff] %v1085
        %1088 = vst [vmem:[%s1074 + $0x8] sm:$0xff] %v1086
        %v1089 = vld [vmem:[#allocation4] sm:$0xff]
        %v1090 = vld [vmem:[#allocation4 + $0x8] sm:$0xff]
        %1093 = vrot.lane.b32.xlu0 %v1089, 32
        %v1094 = vpop.permute.xlu0 %1093
        %1095 = vrot.lane.b32.xlu0 %v1090, 32
        %v1096 = vpop.permute.xlu0 %1095
        %v1099 = vmul.f32 %v1055, %v1094
        %v1100 = vmul.f32 %v1057, %v1096
        %v1101 = vpack.c.bf16 %v1073, %v1071
        %1102 = vrot.lane.b32.xlu0 %v746, 32
        %v1103 = vpop.permute.xlu0 %1102
        %v1106 = vsel %vm692, %v1101, 0
        %1108 = vmatpush.bf16.msra.mxu0 0
        %1109 = vmatpush.bf16.msra.mxu0 0
        %1110 = vmatpush.bf16.msra.mxu0 0
        %1111 = vmatpush.bf16.msra.mxu0 0
        %1112 = vmatpush.bf16.msra.mxu0 0
        %1113 = vmatpush.bf16.msra.mxu0 0
        %1114 = vmatpush.bf16.msra.mxu0 0
        %1115 = vmatpush.bf16.msra.mxu0 %v1103
        %1116 = vmatmul.bf16.gmra.mxu0 %v1106
        %v1117 = vpop.f32.mrf.mxu0
        %v1118 = vadd.f32 0.0, %v1117
        %v1119 = vpop.f32.mrf.mxu0
        %v1120 = vadd.f32 0.0, %v1119
        %1121 = vdwg.mxu0
        %v1122 = vadd.f32 %v1099, %v1118
        %v1123 = vadd.f32 %v1100, %v1120
        %1126 = vrot.lane.b32.xlu0 %v1122, 96
        %v1127 = vpop.permute.xlu0 %1126
        %1128 = vrot.lane.b32.xlu0 %v1123, 96
        %v1129 = vpop.permute.xlu0 %1128
        %vm1132 = vcmask 1048320
        %1133 = vst.msk [vmem:[#allocation4] sm:$0xff] %vm1132, %v1127
        %1134 = vst.msk [vmem:[#allocation4 + $0x8] sm:$0xff] %vm1132, %v1129
        %1135 = vst [vmem:[%s1041] sm:$0xff] %v1050
        %1136 = vst [vmem:[%s1041 + $0x8] sm:$0xff] %v1051
        // Predicated region
        $region184: #{llada_block_forward.4} parent=158 // pred_check
          %p1137 = pneg %p629
        $region185: #{llada_block_forward.4} parent=158 // pred_check_branch
          %1139 = sbr.rel (%p1137) target = $region187
        $region186: #{llada_block_forward.4} parent=158 // pred_region
          %v1140 = vld [vmem:[#allocation3] sm:$0xff]
          %v1141 = vld [vmem:[#allocation3 + $0x8] sm:$0xff]
          %v1142 = vrcp.pop %v1140
          %v1143 = vrcp.pop %v1141
          %v1144 = vld [vmem:[#allocation4] sm:$0xff]
          %v1145 = vld [vmem:[#allocation4 + $0x8] sm:$0xff]
          %v1146 = vmul.f32 %v1144, %v1142
          %v1147 = vmul.f32 %v1145, %v1143
          %1148 = vst.msk [vmem:[#allocation4] sm:$0xff] %vm667, %v1146
          %1149 = vst.msk [vmem:[#allocation4 + $0x8] sm:$0xff] %vm667, %v1147
          %v1150 = vld [vmem:[%s830] sm:$0xff]
          %v1151 = vld [vmem:[%s830 + $0x8] sm:$0xff]
          %v1152 = vrcp.pop %v1150
          %v1153 = vrcp.pop %v1151
          %v1154 = vld [vmem:[#allocation4] sm:$0xff]
          %v1155 = vld [vmem:[#allocation4 + $0x8] sm:$0xff]
          %1158 = vrot.lane.b32.xlu0 %v1152, 32
          %v1159 = vpop.permute.xlu0 %1158
          %1160 = vrot.lane.b32.xlu0 %v1153, 32
          %v1161 = vpop.permute.xlu0 %1160
          %v1164 = vmul.f32 %v1154, %v1159
          %v1165 = vmul.f32 %v1155, %v1161
          %1166 = vst.msk [vmem:[#allocation4] sm:$0xff] %vm888, %v1164
          %1167 = vst.msk [vmem:[#allocation4 + $0x8] sm:$0xff] %vm888, %v1165
          %v1168 = vld [vmem:[%s952] sm:$0xff]
          %v1169 = vld [vmem:[%s952 + $0x8] sm:$0xff]
          %v1170 = vrcp.pop %v1168
          %v1171 = vrcp.pop %v1169
          %v1172 = vld [vmem:[#allocation4] sm:$0xff]
          %v1173 = vld [vmem:[#allocation4 + $0x8] sm:$0xff]
          %1176 = vrot.lane.b32.xlu0 %v1170, 64
          %v1177 = vpop.permute.xlu0 %1176
          %1178 = vrot.lane.b32.xlu0 %v1171, 64
          %v1179 = vpop.permute.xlu0 %1178
          %v1182 = vmul.f32 %v1172, %v1177
          %v1183 = vmul.f32 %v1173, %v1179
          %1184 = vst.msk [vmem:[#allocation4] sm:$0xff] %vm1010, %v1182
          %1185 = vst.msk [vmem:[#allocation4 + $0x8] sm:$0xff] %vm1010, %v1183
          %v1186 = vld [vmem:[%s1074] sm:$0xff]
          %v1187 = vld [vmem:[%s1074 + $0x8] sm:$0xff]
          %v1188 = vrcp.pop %v1186
          %v1189 = vrcp.pop %v1187
          %v1190 = vld [vmem:[#allocation4] sm:$0xff]
          %v1191 = vld [vmem:[#allocation4 + $0x8] sm:$0xff]
          %1194 = vrot.lane.b32.xlu0 %v1188, 96
          %v1195 = vpop.permute.xlu0 %1194
          %1196 = vrot.lane.b32.xlu0 %v1189, 96
          %v1197 = vpop.permute.xlu0 %1196
          %v1200 = vmul.f32 %v1190, %v1195
          %v1201 = vmul.f32 %v1191, %v1197
          %1202 = vst.msk [vmem:[#allocation4] sm:$0xff] %vm1132, %v1200
          %1203 = vst.msk [vmem:[#allocation4 + $0x8] sm:$0xff] %vm1132, %v1201
          %v1204 = vld [vmem:[#allocation4] sm:$0xff]
          %v1205 = vld [vmem:[#allocation4 + $0x8] sm:$0xff]
          %v1206 = vpack.c.bf16 %v1205, %v1204
          %v1207 = vld [vmem:[#allocation10] sm:$0xf]
          %v1208 = vld [vmem:[#allocation10 + $0x4] sm:$0xf]
          %v1209 = vld [vmem:[#allocation10 + $0x8] sm:$0xf]
          %v1210 = vld [vmem:[#allocation10 + $0xc] sm:$0xf]
          %v1211 = vld [vmem:[#allocation10 + $0x10] sm:$0xf]
          %v1212 = vld [vmem:[#allocation10 + $0x14] sm:$0xf]
          %v1213 = vld [vmem:[#allocation10 + $0x18] sm:$0xf]
          %v1214 = vld [vmem:[#allocation10 + $0x1c] sm:$0xf]
          %v1215 = vld [vmem:[#allocation10 + $0x20] sm:$0xf]
          %v1216 = vld [vmem:[#allocation10 + $0x24] sm:$0xf]
          %v1217 = vld [vmem:[#allocation10 + $0x28] sm:$0xf]
          %v1218 = vld [vmem:[#allocation10 + $0x2c] sm:$0xf]
          %v1219 = vld [vmem:[#allocation10 + $0x30] sm:$0xf]
          %v1220 = vld [vmem:[#allocation10 + $0x34] sm:$0xf]
          %v1221 = vld [vmem:[#allocation10 + $0x38] sm:$0xf]
          %v1222 = vld [vmem:[#allocation10 + $0x3c] sm:$0xf]
          %v1239 = vunpack.c.l.b16 %v1207
          %v1240 = vunpack.c.l.b16 %v1208
          %v1241 = vunpack.c.l.b16 %v1209
          %v1242 = vunpack.c.l.b16 %v1210
          %v1243 = vunpack.c.l.b16 %v1211
          %v1244 = vunpack.c.l.b16 %v1212
          %v1245 = vunpack.c.l.b16 %v1213
          %v1246 = vunpack.c.l.b16 %v1214
          %v1247 = vunpack.c.l.b16 %v1215
          %v1248 = vunpack.c.l.b16 %v1216
          %v1249 = vunpack.c.l.b16 %v1217
          %v1250 = vunpack.c.l.b16 %v1218
          %v1251 = vunpack.c.l.b16 %v1219
          %v1252 = vunpack.c.l.b16 %v1220
          %v1253 = vunpack.c.l.b16 %v1221
          %v1254 = vunpack.c.l.b16 %v1222
          %v1255 = vpack.c.b16 %v1240, %v1239
          %v1256 = vpack.c.b16 %v1242, %v1241
          %v1257 = vpack.c.b16 %v1244, %v1243
          %v1258 = vpack.c.b16 %v1246, %v1245
          %v1259 = vpack.c.b16 %v1248, %v1247
          %v1260 = vpack.c.b16 %v1250, %v1249
          %v1261 = vpack.c.b16 %v1252, %v1251
          %v1262 = vpack.c.b16 %v1254, %v1253
          %1271 = vmatpush.bf16.msra.mxu0 %v1262
          %1272 = vmatpush.bf16.msra.mxu0 %v1261
          %1273 = vmatpush.bf16.msra.mxu0 %v1260
          %1274 = vmatpush.bf16.msra.mxu0 %v1259
          %1275 = vmatpush.bf16.msra.mxu0 %v1258
          %1276 = vmatpush.bf16.msra.mxu0 %v1257
          %1277 = vmatpush.bf16.msra.mxu0 %v1256
          %1278 = vmatpush.bf16.msra.mxu0 %v1255
          %1279 = vmatmul.bf16.gmra.mxu0 %v1206
          %v1280 = vpop.f32.mrf.mxu0
          %v1281 = vadd.f32 0.0, %v1280
          %v1282 = vpop.f32.mrf.mxu0
          %v1283 = vadd.f32 0.0, %v1282
          %1284 = vdwg.mxu0
          %v1285 = vld [vmem:[%s519] sm:$0xff]
          %v1286 = vld [vmem:[%s519 + $0x8] sm:$0xff]
          %v1287 = vadd.f32 %v1285, %v1281
          %v1288 = vadd.f32 %v1286, %v1283
          %1289 = vst [vmem:[%s616] sm:$0xff] %v1287
          %1290 = vst [vmem:[%s616 + $0x8] sm:$0xff] %v1288
          %v1291 = vld [vmem:[%s5] sm:$0x1]
          %v1292 = vmul.f32 %v1287, %v1287
          %v1293 = vmul.f32 %v1288, %v1288
          %1294 = vadd.xlane.f32.xlu0 %v1292
          %v1295 = vpop.xlane.xlu0 %1294
          %1296 = vadd.xlane.f32.xlu0 %v1293
          %v1297 = vpop.xlane.xlu0 %1296
          %v1298 = vrcp.pop 128.0
          %v1299 = vmul.f32 128.0, %v1298
          %v1300 = vsub.f32 1.0, %v1299
          %v1301 = vmul.f32 %v1298, %v1300
          %v1302 = vadd.f32 %v1298, %v1301
          %vm1303 = vweird.f32 %v1298
          %v1304 = vsel %vm1303, %v1298, %v1302
          %v1305 = vmul.f32 %v1295, %v1304
          %v1306 = vmul.f32 %v1297, %v1304
          %v1307 = vadd.f32 %v1305, 1e-06
          %v1308 = vadd.f32 %v1306, 1e-06
          %v1309 = vrsqrt.pop %v1307
          %v1310 = vmul.f32 %v1309, %v1307
          %v1311 = vmul.f32 %v1310, %v1309
          %v1312 = vmul.f32 0.5, %v1311
          %v1313 = vsub.f32 1.5, %v1312
          %v1314 = vmul.f32 %v1309, %v1313
          %vm1315 = vweird.f32 %v1307
          %vm1316 = vweird.f32 %v1309
          %vm1317 = vmor %vm1315, %vm1316
          %v1318 = vsel %vm1317, %v1309, %v1314
          %v1319 = vrsqrt.pop %v1308
          %v1320 = vmul.f32 %v1319, %v1308
          %v1321 = vmul.f32 %v1320, %v1319
          %v1322 = vmul.f32 0.5, %v1321
          %v1323 = vsub.f32 1.5, %v1322
          %v1324 = vmul.f32 %v1319, %v1323
          %vm1325 = vweird.f32 %v1308
          %vm1326 = vweird.f32 %v1319
          %vm1327 = vmor %vm1325, %vm1326
          %v1328 = vsel %vm1327, %v1319, %v1324
          %v1329 = vmul.f32 %v1287, %v1318
          %v1330 = vmul.f32 %v1288, %v1328
          %v1332 = vperm.slane %v1291, 0
          %v1334 = vmul.f32 %v1329, %v1332
          %v1335 = vmul.f32 %v1330, %v1332
          %v1336 = vld [vmem:[%s6] sm:$0xff]
          %v1337 = vld [vmem:[%s6 + $0x8] sm:$0xff]
          %v1338 = vld [vmem:[%s6 + $0x10] sm:$0xff]
          %v1339 = vld [vmem:[%s6 + $0x18] sm:$0xff]
          %v1340 = vld [vmem:[%s6 + $0x20] sm:$0xff]
          %v1341 = vld [vmem:[%s6 + $0x28] sm:$0xff]
          %v1342 = vld [vmem:[%s6 + $0x30] sm:$0xff]
          %v1343 = vld [vmem:[%s6 + $0x38] sm:$0xff]
          %v1344 = vld [vmem:[%s6 + $0x40] sm:$0xff]
          %v1345 = vld [vmem:[%s6 + $0x48] sm:$0xff]
          %v1346 = vld [vmem:[%s6 + $0x50] sm:$0xff]
          %v1347 = vld [vmem:[%s6 + $0x58] sm:$0xff]
          %v1348 = vld [vmem:[%s6 + $0x60] sm:$0xff]
          %v1349 = vld [vmem:[%s6 + $0x68] sm:$0xff]
          %v1350 = vld [vmem:[%s6 + $0x70] sm:$0xff]
          %v1351 = vld [vmem:[%s6 + $0x78] sm:$0xff]
          %1352 = vmatpush.msra.mxu0 %v1351
          %1353 = vmatpush.msra.mxu0 %v1350
          %1354 = vmatpush.msra.mxu0 %v1349
          %1355 = vmatpush.msra.mxu0 %v1348
          %1356 = vmatpush.msra.mxu0 %v1347
          %1357 = vmatpush.msra.mxu0 %v1346
          %1358 = vmatpush.msra.mxu0 %v1345
          %1359 = vmatpush.msra.mxu0 %v1344
          %1360 = vmatpush.msra.mxu0 %v1343
          %1361 = vmatpush.msra.mxu0 %v1342
          %1362 = vmatpush.msra.mxu0 %v1341
          %1363 = vmatpush.msra.mxu0 %v1340
          %1364 = vmatpush.msra.mxu0 %v1339
          %1365 = vmatpush.msra.mxu0 %v1338
          %1366 = vmatpush.msra.mxu0 %v1337
          %1367 = vmatpush.msra.mxu0 %v1336
          %1368 = vmatmul.f32.gmra.mxu0 %v1334
          %v1369 = vpop.f32.mrf.mxu0
          %v1370 = vadd.f32 0.0, %v1369
          %1371 = vmatmul.f32.gmra.mxu0 %v1335
          %v1372 = vpop.f32.mrf.mxu0
          %v1373 = vadd.f32 0.0, %v1372
          %1374 = vdwg.mxu0
          %1375 = vst [vmem:[%s626] sm:$0xff] %v1370
          %1376 = vst [vmem:[%s626 + $0x8] sm:$0xff] %v1373
        $region187: #{llada_block_forward.4} parent=158 // pred_fallthru
          _
        %s1377 = smul.u32 2, %s30
        %p1378 = scmp.lt.s32.totalorder %s29, 1
        %s1379 = scalar_select %p1378, %s29, 1
        %p1380 = scmp.lt.s32.totalorder %s1377, 1
        %s1381 = scalar_select %p1380, %s1377, 1
        %s1382 = smul.addr %s1379, 2
        %s1383 = sadd.s32 %s1381, %s1382
        %s1384 = smul.addr %s1383, 8
        %s1385 = scalar_lea.vmem %s7, %s1384
        %s1386 = smul.u32 2, %s30
        %p1387 = scmp.lt.s32.totalorder %s29, 1
        %s1388 = scalar_select %p1387, %s29, 1
        %p1389 = scmp.lt.s32.totalorder %s1386, 1
        %s1390 = scalar_select %p1389, %s1386, 1
        %s1391 = smul.addr %s1388, 2
        %s1392 = sadd.s32 %s1390, %s1391
        %s1393 = smul.addr %s1392, 8
        %s1394 = scalar_lea.vmem %s8, %s1393
        // Predicated region
        $region188: #{llada_block_forward.4} parent=158 // pred_check
          %p1395 = pneg %p238
        $region189: #{llada_block_forward.4} parent=158 // pred_check_branch
          %1397 = sbr.rel (%p1395) target = $region191
        $region190: #{llada_block_forward.4} parent=158 // pred_region
          %s1398 = smul.u32 2, %s30
        $region191: #{llada_block_forward.4} parent=158 // pred_fallthru
          _
        // Predicated region
        $region192: #{llada_block_forward.4} parent=158 // pred_check
          %p1399 = pneg %p266
        $region193: #{llada_block_forward.4} parent=158 // pred_check_branch
          %1401 = sbr.rel (%p1399) target = $region195
        $region194: #{llada_block_forward.4} parent=158 // pred_region
          %s1402 = smul.u32 2, %s30
        $region195: #{llada_block_forward.4} parent=158 // pred_fallthru
          _
      $region159: #{llada_block_forward.4} parent=5 // pred_fallthru
        _
      %p1403 = scmp.le.s32.totalorder 2, %s19
      // Predicated region
      $region196: #{llada_block_forward.4} parent=5 // pred_check
        %p1404 = pneg %p1403
      $region197: #{llada_block_forward.4} parent=5 // pred_check_branch
        %1406 = sbr.rel (%p1404) target = $region199
      $region198: #{llada_block_forward.4} parent=5 // pred_region
        %s1407 = ssub.s32 %s19, 2
        // Predicated region
        $region200: #{llada_block_forward.4} parent=198 // pred_check
          %p1408 = pneg %p244
        $region201: #{llada_block_forward.4} parent=198 // pred_check_branch
          %1410 = sbr.rel (%p1408) target = $region203
        $region202: #{llada_block_forward.4} parent=198 // pred_region
          %s1411 = smul.u32 2, %s33
          %p1412 = scmp.lt.s32.totalorder %s32, 1
          %s1413 = scalar_select %p1412, %s32, 1
          %p1414 = scmp.lt.s32.totalorder %s1411, 1
          %s1415 = scalar_select %p1414, %s1411, 1
          %s1416 = smul.addr %s1413, 2
          %s1417 = sadd.s32 %s1415, %s1416
          %s1418 = smul.addr %s1417, 8
          %s1419 = scalar_lea.vmem %s7, %s1418
        $region203: #{llada_block_forward.4} parent=198 // pred_fallthru
          _
        // Predicated region
        $region204: #{llada_block_forward.4} parent=198 // pred_check
          %p1420 = pneg %p272
        $region205: #{llada_block_forward.4} parent=198 // pred_check_branch
          %1422 = sbr.rel (%p1420) target = $region207
        $region206: #{llada_block_forward.4} parent=198 // pred_region
          %s1423 = smul.u32 2, %s33
          %p1424 = scmp.lt.s32.totalorder %s32, 1
          %s1425 = scalar_select %p1424, %s32, 1
          %p1426 = scmp.lt.s32.totalorder %s1423, 1
          %s1427 = scalar_select %p1426, %s1423, 1
          %s1428 = smul.addr %s1425, 2
          %s1429 = sadd.s32 %s1427, %s1428
          %s1430 = smul.addr %s1429, 8
          %s1431 = scalar_lea.vmem %s8, %s1430
        $region207: #{llada_block_forward.4} parent=198 // pred_fallthru
          _
      $region199: #{llada_block_forward.4} parent=5 // pred_fallthru
        _
    $region6: #{llada_block_forward.4} parent=1 // loop_footer
      %s23 = sadd.s32 1, %s19
    $region7: #{llada_block_forward.4} parent=1 // loop_footer_branch
      %18 = sbr.rel target = $region3
    $region8: #{llada_block_forward.4} parent=1 // loop_exit
      _
    %1432 = vsyncpa [#allocation6], 1
    %s1433 = scalar_lea.sflag [#allocation6], 1
    %1434 = vsyncpa %s1433, 1
    %1435 = vsyncpa [#allocation11], 1

// kernel: llada_block_forward.5
$region0: #{llada_block_forward.5}
  #allocation0 [shape = 'u32[]', space=smem, size = 0x4, offset = 0x4, fixed_abs, tag = 'smem constant byte address 0x4 - core index']
  #allocation1 [shape = 'u32[72,128]{1,0:T(1,128)}', space=vmem, size = 0x9000, scoped, tag = 'internal scratch']
  #allocation2 [shape = 'f32[32,128]{1,0:T(8,128)}', space=vmem, size = 0x4000, scoped, tag = 'scratch operand']
  #allocation3 [shape = 'bf16[32,128]{1,0:T(8,128)(2,1)}', space=vmem, size = 0x2000, scoped, tag = 'scratch operand']
  #allocation4 [shape = 's32[1]{0}', space=sflag, size = 0x4, scoped, tag = 'scoped memory for llada_block_forward.5']
  #allocation5 [shape = 'u8[512]{0}', space=smem, size = 0x200, scoped, tag = 'prefetched SMEM operand 0']
  #allocation6 [shape = 'u8[512]{0}', space=smem, size = 0x200, scoped, tag = 'prefetched SMEM operand 1']
  %s0 = inlined_call_operand.vmem [shape: s32[1,4], index: 0, kind: input, shape index: {}]
  %s1 = inlined_call_operand.vmem [shape: s32[1,4], index: 1, kind: input, shape index: {}]
  %s2 = inlined_call_operand.vmem [shape: f32[32,128], index: 2, kind: input, shape index: {}]
  %s3 = inlined_call_operand.vmem [shape: f32[32,4], index: 3, kind: input, shape index: {}]
  %s4 = inlined_call_operand.vmem [shape: f32[1,128], index: 4, kind: input, shape index: {}]
  %s5 = inlined_call_operand.vmem [shape: bf16[4,128,256], index: 5, kind: input, shape index: {}]
  %s6 = inlined_call_operand.vmem [shape: f32[4,1,256], index: 6, kind: input, shape index: {}]
  %s7 = inlined_call_operand.vmem [shape: bf16[4,256,128], index: 7, kind: input, shape index: {}]
  %s8 = inlined_call_operand.vmem [shape: f32[4,1,128], index: 8, kind: input, shape index: {}]
  %s9 = inlined_call_operand.hbm [shape: f32[32,128], index: 9, kind: output, shape index: {}]
  %s10 = sld [smem:[#allocation0]]
  $region73: #{llada_block_forward.5} parent=0
    _
  %s12 = ssub.s32 1, %s10
  %s13 = scalar_select 0, %s12, %s10
  %s15 = sshll.u32 %s0, 4
  %s16 = int_to_ptr.vmem [resolvable:$true] %s15
  %18 = dma.vmem_to_smem %s16, 16, [#allocation5], [#allocation4]
  %s20 = sshll.u32 %s1, 4
  %s21 = int_to_ptr.vmem [resolvable:$true] %s20
  %23 = dma.vmem_to_smem %s21, 16, [#allocation6], [#allocation4]
  %25 = dma.done [#allocation4], 32
  %26 = sfence
  $region1: #{llada_block_forward.5} parent=0
    #allocation7 [shape = 'u8[16384]{0}', space=vmem, size = 0x4000, scoped, tag = 'output window, operand 0, single buffered']
    #allocation8 [shape = 's32[2]{0}', space=sflag, size = 0x8, scoped, tag = 'scoped memory for llada_block_forward.5']
    %27 = vsyncpa [#allocation8], 0
    loop: start=0, step=1, limit=6
    $region2: #{llada_block_forward.5} parent=1 // loop_pre_header
      _
    $region3: #{llada_block_forward.5} parent=1 // loop_header
      %s29 = sphi 0, %s33
      %p30 = scmp.ge.s32.totalorder %s29, 6
      %s36 = sphi 0, %s55
      %s37 = sphi 0, %s51
      %s38 = sphi 0, %s47
      %s39 = sphi 0, %s36
      %s40 = sphi 0, %s37
      %s41 = sphi 0, %s38
      %s42 = sphi 0, %s39
      %s43 = sphi 0, %s40
      %s44 = sphi 0, %s41
      %s58 = sphi 0, %s60
      %s61 = sphi 0, %s58
      %s62 = sphi 0, %s61
      %s78 = sphi 0, %s62
      %s84 = sphi 0, %s86
      %s87 = sphi 0, %s84
      %s88 = sphi 0, %s87
      %s104 = sphi 0, %s88
      %s108 = sphi 0, %s108
      %s110 = sphi 0, %s108
      %s111 = sphi 0, %s110
      %s125 = sphi 0, %s111
      %s153 = sphi 0, %s155
      %s156 = sphi 0, %s153
      %s157 = sphi 0, %s156
      %s173 = sphi 0, %s157
      %s201 = sphi 0, %s203
      %s204 = sphi 0, %s201
      %s205 = sphi 0, %s204
      %s221 = sphi 0, %s205
      %s249 = sphi 0, %s251
      %s252 = sphi 0, %s249
      %s253 = sphi 0, %s252
      %s269 = sphi 0, %s253
      %s291 = sphi 0, %s293
      %s294 = sphi 0, %s291
      %s295 = sphi 0, %s294
      %s311 = sphi 0, %s295
      %s317 = sphi 0, %s319
      %s320 = sphi 0, %s317
      %s321 = sphi 0, %s320
      %s337 = sphi 0, %s321
    $region4: #{llada_block_forward.5} parent=1 // loop_header_branch
      %32 = sbr.rel (%p30) target = $region8
    $region5: #{llada_block_forward.5} parent=1 // loop_body
      %s34 = ssub.s32 %s29, 1
      %s35 = ssub.s32 %s29, 2
      %s45 = sadd.s32 1, %s38
      %p46 = scmp.ge.s32.totalorder %s45, 1
      %s47 = scalar_select %p46, 0, %s45
      %s48 = sadd.s32 1, %s37
      %s49 = scalar_select %p46, %s48, %s37
      %p50 = scmp.ge.s32.totalorder %s49, 4
      %s51 = scalar_select %p50, 0, %s49
      %s52 = sadd.s32 1, %s36
      %s53 = scalar_select %p50, %s52, %s36
      %p54 = scmp.ge.s32.totalorder %s53, 1
      %s55 = scalar_select %p54, 0, %s53
      %s56 = ssub.s32 %s36, %s55
      %p57 = scmp.eq.s32.totalorder %s56, 0
      %s59 = sadd.s32 %s58, 1
      %s60 = scalar_select %p57, %s58, %s59
      %p63 = pneg %p57
      %p64 = scmp.eq.s32.totalorder %s29, 3
      %p65 = por %p63, %p64
      %p66 = scmp.ne.s32.totalorder %s58, %s61
      %p67 = scmp.eq.s32.totalorder %s29, 0
      %p68 = por %p66, %p67
      %p69 = scmp.ne.s32.totalorder %s58, %s61
      %p70 = scmp.eq.s32.totalorder %s34, 3
      %p71 = por %p69, %p70
      %p72 = scmp.ne.s32.totalorder %s61, %s62
      %p73 = scmp.eq.s32.totalorder %s34, 0
      %p74 = por %p72, %p73
      %p75 = scmp.ne.s32.totalorder %s61, %s62
      %p76 = scmp.eq.s32.totalorder %s35, 3
      %p77 = por %p75, %p76
      %p79 = scmp.ne.s32.totalorder %s62, %s78
      %p80 = scmp.eq.s32.totalorder %s35, 0
      %p81 = por %p79, %p80
      %s82 = ssub.s32 %s36, %s55
      %p83 = scmp.eq.s32.totalorder %s82, 0
      %s85 = sadd.s32 %s84, 1
      %s86 = scalar_select %p83, %s84, %s85
      %p89 = pneg %p83
      %p90 = scmp.eq.s32.totalorder %s29, 3
      %p91 = por %p89, %p90
      %p92 = scmp.ne.s32.totalorder %s84, %s87
      %p93 = scmp.eq.s32.totalorder %s29, 0
      %p94 = por %p92, %p93
      %p95 = scmp.ne.s32.totalorder %s84, %s87
      %p96 = scmp.eq.s32.totalorder %s34, 3
      %p97 = por %p95, %p96
      %p98 = scmp.ne.s32.totalorder %s87, %s88
      %p99 = scmp.eq.s32.totalorder %s34, 0
      %p100 = por %p98, %p99
      %p101 = scmp.ne.s32.totalorder %s87, %s88
      %p102 = scmp.eq.s32.totalorder %s35, 3
      %p103 = por %p101, %p102
      %p105 = scmp.ne.s32.totalorder %s88, %s104
      %p106 = scmp.eq.s32.totalorder %s35, 0
      %p107 = por %p105, %p106
      %s109 = sadd.s32 %s108, 1
      %p112 = scmp.eq.s32.totalorder %s29, 3
      %p113 = scmp.ne.s32.totalorder %s108, %s110
      %p114 = scmp.eq.s32.totalorder %s29, 0
      %p115 = por %p113, %p114
      %p116 = scmp.ne.s32.totalorder %s108, %s110
      %p117 = scmp.eq.s32.totalorder %s34, 3
      %p118 = por %p116, %p117
      %p119 = scmp.ne.s32.totalorder %s110, %s111
      %p120 = scmp.eq.s32.totalorder %s34, 0
      %p121 = por %p119, %p120
      %p122 = scmp.ne.s32.totalorder %s110, %s111
      %p123 = scmp.eq.s32.totalorder %s35, 3
      %p124 = por %p122, %p123
      %p126 = scmp.ne.s32.totalorder %s111, %s125
      %p127 = scmp.eq.s32.totalorder %s35, 0
      %p128 = por %p126, %p127
      %s129 = sshra.s32 %s37, 7
      %s130 = sand.u32 %s37, 127
      %s131 = sadd.s32 %s129, %s36
      %s132 = smul.u32 %s131, 128
      %s133 = sshra.s32 %s37, 7
      %s134 = sand.u32 %s37, 127
      %s135 = sadd.s32 %s132, %s134
      %s136 = sld [smem:[#allocation5 + %s135]]
      %s137 = sld [smem:[#allocation6 + %s135]]
      %s138 = smul.u32 %s38, %s136
      %s139 = sshra.s32 %s51, 7
      %s140 = sand.u32 %s51, 127
      %s141 = sadd.s32 %s139, %s55
      %s142 = smul.u32 %s141, 128
      %s143 = sshra.s32 %s51, 7
      %s144 = sand.u32 %s51, 127
      %s145 = sadd.s32 %s142, %s144
      %s146 = sld [smem:[#allocation5 + %s145]]
      %s147 = sld [smem:[#allocation6 + %s145]]
      %s148 = smul.u32 %s47, %s146
      %s149 = ssub.s32 %s137, %s147
      %s150 = ssub.s32 %s138, %s148
      %s151 = sor.u32 %s149, %s150
      %p152 = scmp.eq.s32.totalorder %s151, 0
      %s154 = sadd.s32 %s153, 1
      %s155 = scalar_select %p152, %s153, %s154
      %p158 = pneg %p152
      %p159 = scmp.eq.s32.totalorder %s29, 3
      %p160 = por %p158, %p159
      %p161 = scmp.ne.s32.totalorder %s153, %s156
      %p162 = scmp.eq.s32.totalorder %s29, 0
      %p163 = por %p161, %p162
      %p164 = scmp.ne.s32.totalorder %s153, %s156
      %p165 = scmp.eq.s32.totalorder %s34, 3
      %p166 = por %p164, %p165
      %p167 = scmp.ne.s32.totalorder %s156, %s157
      %p168 = scmp.eq.s32.totalorder %s34, 0
      %p169 = por %p167, %p168
      %p170 = scmp.ne.s32.totalorder %s156, %s157
      %p171 = scmp.eq.s32.totalorder %s35, 3
      %p172 = por %p170, %p171
      %p174 = scmp.ne.s32.totalorder %s157, %s173
      %p175 = scmp.eq.s32.totalorder %s35, 0
      %p176 = por %p174, %p175
      %s177 = sshra.s32 %s37, 7
      %s178 = sand.u32 %s37, 127
      %s179 = sadd.s32 %s177, %s36
      %s180 = smul.u32 %s179, 128
      %s181 = sshra.s32 %s37, 7
      %s182 = sand.u32 %s37, 127
      %s183 = sadd.s32 %s180, %s182
      %s184 = sld [smem:[#allocation5 + %s183]]
      %s185 = sld [smem:[#allocation6 + %s183]]
      %s186 = smul.u32 %s38, %s184
      %s187 = sshra.s32 %s51, 7
      %s188 = sand.u32 %s51, 127
      %s189 = sadd.s32 %s187, %s55
      %s190 = smul.u32 %s189, 128
      %s191 = sshra.s32 %s51, 7
      %s192 = sand.u32 %s51, 127
      %s193 = sadd.s32 %s190, %s192
      %s194 = sld [smem:[#allocation5 + %s193]]
      %s195 = sld [smem:[#allocation6 + %s193]]
      %s196 = smul.u32 %s47, %s194
      %s197 = ssub.s32 %s185, %s195
      %s198 = ssub.s32 %s186, %s196
      %s199 = sor.u32 %s197, %s198
      %p200 = scmp.eq.s32.totalorder %s199, 0
      %s202 = sadd.s32 %s201, 1
      %s203 = scalar_select %p200, %s201, %s202
      %p206 = pneg %p200
      %p207 = scmp.eq.s32.totalorder %s29, 3
      %p208 = por %p206, %p207
      %p209 = scmp.ne.s32.totalorder %s201, %s204
      %p210 = scmp.eq.s32.totalorder %s29, 0
      %p211 = por %p209, %p210
      %p212 = scmp.ne.s32.totalorder %s201, %s204
      %p213 = scmp.eq.s32.totalorder %s34, 3
      %p214 = por %p212, %p213
      %p215 = scmp.ne.s32.totalorder %s204, %s205
      %p216 = scmp.eq.s32.totalorder %s34, 0
      %p217 = por %p215, %p216
      %p218 = scmp.ne.s32.totalorder %s204, %s205
      %p219 = scmp.eq.s32.totalorder %s35, 3
      %p220 = por %p218, %p219
      %p222 = scmp.ne.s32.totalorder %s205, %s221
      %p223 = scmp.eq.s32.totalorder %s35, 0
      %p224 = por %p222, %p223
      %s225 = sshra.s32 %s37, 7
      %s226 = sand.u32 %s37, 127
      %s227 = sadd.s32 %s225, %s36
      %s228 = smul.u32 %s227, 128
      %s229 = sshra.s32 %s37, 7
      %s230 = sand.u32 %s37, 127
      %s231 = sadd.s32 %s228, %s230
      %s232 = sld [smem:[#allocation5 + %s231]]
      %s233 = sld [smem:[#allocation6 + %s231]]
      %s234 = smul.u32 %s38, %s232
      %s235 = sshra.s32 %s51, 7
      %s236 = sand.u32 %s51, 127
      %s237 = sadd.s32 %s235, %s55
      %s238 = smul.u32 %s237, 128
      %s239 = sshra.s32 %s51, 7
      %s240 = sand.u32 %s51, 127
      %s241 = sadd.s32 %s238, %s240
      %s242 = sld [smem:[#allocation5 + %s241]]
      %s243 = sld [smem:[#allocation6 + %s241]]
      %s244 = smul.u32 %s47, %s242
      %s245 = ssub.s32 %s233, %s243
      %s246 = ssub.s32 %s234, %s244
      %s247 = sor.u32 %s245, %s246
      %p248 = scmp.eq.s32.totalorder %s247, 0
      %s250 = sadd.s32 %s249, 1
      %s251 = scalar_select %p248, %s249, %s250
      %p254 = pneg %p248
      %p255 = scmp.eq.s32.totalorder %s29, 3
      %p256 = por %p254, %p255
      %p257 = scmp.ne.s32.totalorder %s249, %s252
      %p258 = scmp.eq.s32.totalorder %s29, 0
      %p259 = por %p257, %p258
      %p260 = scmp.ne.s32.totalorder %s249, %s252
      %p261 = scmp.eq.s32.totalorder %s34, 3
      %p262 = por %p260, %p261
      %p263 = scmp.ne.s32.totalorder %s252, %s253
      %p264 = scmp.eq.s32.totalorder %s34, 0
      %p265 = por %p263, %p264
      %p266 = scmp.ne.s32.totalorder %s252, %s253
      %p267 = scmp.eq.s32.totalorder %s35, 3
      %p268 = por %p266, %p267
      %p270 = scmp.ne.s32.totalorder %s253, %s269
      %p271 = scmp.eq.s32.totalorder %s35, 0
      %p272 = por %p270, %p271
      %s273 = sshra.s32 %s37, 7
      %s274 = sand.u32 %s37, 127
      %s275 = sadd.s32 %s273, %s36
      %s276 = smul.u32 %s275, 128
      %s277 = sshra.s32 %s37, 7
      %s278 = sand.u32 %s37, 127
      %s279 = sadd.s32 %s276, %s278
      %s280 = sld [smem:[#allocation6 + %s279]]
      %s281 = sshra.s32 %s51, 7
      %s282 = sand.u32 %s51, 127
      %s283 = sadd.s32 %s281, %s55
      %s284 = smul.u32 %s283, 128
      %s285 = sshra.s32 %s51, 7
      %s286 = sand.u32 %s51, 127
      %s287 = sadd.s32 %s284, %s286
      %s288 = sld [smem:[#allocation6 + %s287]]
      %s289 = ssub.s32 %s280, %s288
      %p290 = scmp.eq.s32.totalorder %s289, 0
      %s292 = sadd.s32 %s291, 1
      %s293 = scalar_select %p290, %s291, %s292
      %p296 = pneg %p290
      %p297 = scmp.eq.s32.totalorder %s29, 3
      %p298 = por %p296, %p297
      %p299 = scmp.ne.s32.totalorder %s291, %s294
      %p300 = scmp.eq.s32.totalorder %s29, 0
      %p301 = por %p299, %p300
      %p302 = scmp.ne.s32.totalorder %s291, %s294
      %p303 = scmp.eq.s32.totalorder %s34, 3
      %p304 = por %p302, %p303
      %p305 = scmp.ne.s32.totalorder %s294, %s295
      %p306 = scmp.eq.s32.totalorder %s34, 0
      %p307 = por %p305, %p306
      %p308 = scmp.ne.s32.totalorder %s294, %s295
      %p309 = scmp.eq.s32.totalorder %s35, 3
      %p310 = por %p308, %p309
      %p312 = scmp.ne.s32.totalorder %s295, %s311
      %p313 = scmp.eq.s32.totalorder %s35, 0
      %p314 = por %p312, %p313
      %s315 = ssub.s32 %s36, %s55
      %p316 = scmp.eq.s32.totalorder %s315, 0
      %s318 = sadd.s32 %s317, 1
      %s319 = scalar_select %p316, %s317, %s318
      %p322 = pneg %p316
      %p323 = scmp.eq.s32.totalorder %s29, 3
      %p324 = por %p322, %p323
      %p325 = scmp.ne.s32.totalorder %s317, %s320
      %p326 = scmp.eq.s32.totalorder %s29, 0
      %p327 = por %p325, %p326
      %p328 = scmp.ne.s32.totalorder %s317, %s320
      %p329 = scmp.eq.s32.totalorder %s34, 3
      %p330 = por %p328, %p329
      %p331 = scmp.ne.s32.totalorder %s320, %s321
      %p332 = scmp.eq.s32.totalorder %s34, 0
      %p333 = por %p331, %p332
      %p334 = scmp.ne.s32.totalorder %s320, %s321
      %p335 = scmp.eq.s32.totalorder %s35, 3
      %p336 = por %p334, %p335
      %p338 = scmp.ne.s32.totalorder %s321, %s337
      %p339 = scmp.eq.s32.totalorder %s35, 0
      %p340 = por %p338, %p339
      %p341 = scmp.le.s32.totalorder 1, %s29
      %p342 = scmp.lt.s32.totalorder %s29, 5
      %p343 = pnand %p341, %p342
      %p344 = pneg %p343
      // Predicated region
      $region9: #{llada_block_forward.5} parent=5 // pred_check
        _
      $region10: #{llada_block_forward.5} parent=5 // pred_check_branch
        %346 = sbr.rel (%p343) target = $region12
      $region11: #{llada_block_forward.5} parent=5 // pred_region
        %s347 = ssub.s32 %s29, 1
        // Predicated region
        $region13: #{llada_block_forward.5} parent=11 // pred_check
          %p348 = pneg %p74
        $region14: #{llada_block_forward.5} parent=11 // pred_check_branch
          %350 = sbr.rel (%p348) target = $region16
        $region15: #{llada_block_forward.5} parent=11 // pred_region
          %s351 = smul.u32 4, %s39
          %p352 = scmp.lt.s32.totalorder %s351, 3
          %s353 = scalar_select %p352, %s351, 3
          %s354 = smul.addr %s353, 8
          %s355 = scalar_lea.vmem %s2, %s354
          %s356 = smul.u32 4, %s39
        $region16: #{llada_block_forward.5} parent=11 // pred_fallthru
          _
        // Predicated region
        $region17: #{llada_block_forward.5} parent=11 // pred_check
          %p357 = pneg %p100
        $region18: #{llada_block_forward.5} parent=11 // pred_check_branch
          %359 = sbr.rel (%p357) target = $region20
        $region19: #{llada_block_forward.5} parent=11 // pred_region
          %s360 = smul.u32 4, %s39
          %p361 = scmp.lt.s32.totalorder %s360, 3
          %s362 = scalar_select %p361, %s360, 3
          %s363 = smul.addr %s362, 8
          %s364 = scalar_lea.vmem %s3, %s363
          %s365 = smul.u32 4, %s39
        $region20: #{llada_block_forward.5} parent=11 // pred_fallthru
          _
        // Predicated region
        $region21: #{llada_block_forward.5} parent=11 // pred_check
          %p366 = pneg %p121
        $region22: #{llada_block_forward.5} parent=11 // pred_check_branch
          %368 = sbr.rel (%p366) target = $region24
        $region23: #{llada_block_forward.5} parent=11 // pred_region
          _
        $region24: #{llada_block_forward.5} parent=11 // pred_fallthru
          _
      $region12: #{llada_block_forward.5} parent=5 // pred_fallthru
        _
      %p369 = scmp.lt.s32.totalorder %s29, 4
      // Predicated region
      $region25: #{llada_block_forward.5} parent=5 // pred_check
        %p370 = pneg %p369
      $region26: #{llada_block_forward.5} parent=5 // pred_check_branch
        %372 = sbr.rel (%p370) target = $region28
      $region27: #{llada_block_forward.5} parent=5 // pred_region
        // Predicated region
        $region29: #{llada_block_forward.5} parent=27 // pred_check
          %p373 = pneg %p163
        $region30: #{llada_block_forward.5} parent=27 // pred_check_branch
          %375 = sbr.rel (%p373) target = $region32
        $region31: #{llada_block_forward.5} parent=27 // pred_region
          %s376 = sshra.s32 %s37, 7
          %s377 = sand.u32 %s37, 127
          %s378 = sadd.s32 %s376, %s36
          %s379 = smul.u32 %s378, 128
          %s380 = sshra.s32 %s37, 7
          %s381 = sand.u32 %s37, 127
          %s382 = sadd.s32 %s379, %s381
          %s383 = sld [smem:[#allocation5 + %s382]]
          %s384 = sld [smem:[#allocation6 + %s382]]
          %s385 = smul.u32 %s38, %s383
          %s386 = smul.u32 2, %s385
          %p387 = scmp.lt.s32.totalorder %s384, 3
          %s388 = scalar_select %p387, %s384, 3
          %p389 = scmp.lt.s32.totalorder %s386, 1
          %s390 = scalar_select %p389, %s386, 1
          %s391 = smul.addr %s388, 32
          %s392 = sadd.s32 %s390, %s391
          %s393 = smul.addr %s392, 4
          %s394 = scalar_lea.vmem %s5, %s393
          %s395 = sshra.s32 %s37, 7
          %s396 = sand.u32 %s37, 127
          %s397 = sadd.s32 %s395, %s36
          %s398 = smul.u32 %s397, 128
          %s399 = sshra.s32 %s37, 7
          %s400 = sand.u32 %s37, 127
          %s401 = sadd.s32 %s398, %s400
          %s402 = sld [smem:[#allocation5 + %s401]]
          %s403 = sld [smem:[#allocation6 + %s401]]
          %s404 = smul.u32 %s38, %s402
          %s405 = smul.u32 2, %s404
        $region32: #{llada_block_forward.5} parent=27 // pred_fallthru
          _
        // Predicated region
        $region33: #{llada_block_forward.5} parent=27 // pred_check
          %p406 = pneg %p211
        $region34: #{llada_block_forward.5} parent=27 // pred_check_branch
          %408 = sbr.rel (%p406) target = $region36
        $region35: #{llada_block_forward.5} parent=27 // pred_region
          %s409 = sshra.s32 %s37, 7
          %s410 = sand.u32 %s37, 127
          %s411 = sadd.s32 %s409, %s36
          %s412 = smul.u32 %s411, 128
          %s413 = sshra.s32 %s37, 7
          %s414 = sand.u32 %s37, 127
          %s415 = sadd.s32 %s412, %s414
          %s416 = sld [smem:[#allocation5 + %s415]]
          %s417 = sld [smem:[#allocation6 + %s415]]
          %s418 = smul.u32 %s38, %s416
          %s419 = smul.u32 2, %s418
          %p420 = scmp.lt.s32.totalorder %s417, 3
          %s421 = scalar_select %p420, %s417, 3
          %p422 = scmp.lt.s32.totalorder %s419, 1
          %s423 = scalar_select %p422, %s419, 1
          %s424 = smul.addr %s421, 2
          %s425 = sadd.s32 %s423, %s424
          %s426 = scalar_lea.vmem %s6, %s425
          %s427 = sshra.s32 %s37, 7
          %s428 = sand.u32 %s37, 127
          %s429 = sadd.s32 %s427, %s36
          %s430 = smul.u32 %s429, 128
          %s431 = sshra.s32 %s37, 7
          %s432 = sand.u32 %s37, 127
          %s433 = sadd.s32 %s430, %s432
          %s434 = sld [smem:[#allocation5 + %s433]]
          %s435 = sld [smem:[#allocation6 + %s433]]
          %s436 = smul.u32 %s38, %s434
          %s437 = smul.u32 2, %s436
        $region36: #{llada_block_forward.5} parent=27 // pred_fallthru
          _
        // Predicated region
        $region37: #{llada_block_forward.5} parent=27 // pred_check
          %p438 = pneg %p259
        $region38: #{llada_block_forward.5} parent=27 // pred_check_branch
          %440 = sbr.rel (%p438) target = $region40
        $region39: #{llada_block_forward.5} parent=27 // pred_region
          %s441 = sshra.s32 %s37, 7
          %s442 = sand.u32 %s37, 127
          %s443 = sadd.s32 %s441, %s36
          %s444 = smul.u32 %s443, 128
          %s445 = sshra.s32 %s37, 7
          %s446 = sand.u32 %s37, 127
          %s447 = sadd.s32 %s444, %s446
          %s448 = sld [smem:[#allocation5 + %s447]]
          %s449 = sld [smem:[#allocation6 + %s447]]
          %s450 = smul.u32 %s38, %s448
          %s451 = smul.u32 32, %s450
          %p452 = scmp.lt.s32.totalorder %s449, 3
          %s453 = scalar_select %p452, %s449, 3
          %p454 = scmp.lt.s32.totalorder %s451, 31
          %s455 = scalar_select %p454, %s451, 31
          %s456 = smul.addr %s453, 32
          %s457 = sadd.s32 %s455, %s456
          %s458 = smul.addr %s457, 4
          %s459 = scalar_lea.vmem %s7, %s458
          %s460 = sshra.s32 %s37, 7
          %s461 = sand.u32 %s37, 127
          %s462 = sadd.s32 %s460, %s36
          %s463 = smul.u32 %s462, 128
          %s464 = sshra.s32 %s37, 7
          %s465 = sand.u32 %s37, 127
          %s466 = sadd.s32 %s463, %s465
          %s467 = sld [smem:[#allocation5 + %s466]]
          %s468 = sld [smem:[#allocation6 + %s466]]
          %s469 = smul.u32 %s38, %s467
          %s470 = smul.u32 32, %s469
        $region40: #{llada_block_forward.5} parent=27 // pred_fallthru
          _
        // Predicated region
        $region41: #{llada_block_forward.5} parent=27 // pred_check
          %p471 = pneg %p301
        $region42: #{llada_block_forward.5} parent=27 // pred_check_branch
          %473 = sbr.rel (%p471) target = $region44
        $region43: #{llada_block_forward.5} parent=27 // pred_region
          %s474 = sshra.s32 %s37, 7
          %s475 = sand.u32 %s37, 127
          %s476 = sadd.s32 %s474, %s36
          %s477 = smul.u32 %s476, 128
          %s478 = sshra.s32 %s37, 7
          %s479 = sand.u32 %s37, 127
          %s480 = sadd.s32 %s477, %s479
          %s481 = sld [smem:[#allocation6 + %s480]]
          %p482 = scmp.lt.s32.totalorder %s481, 3
          %s483 = scalar_select %p482, %s481, 3
          %s484 = scalar_lea.vmem %s8, %s483
          %s485 = sshra.s32 %s37, 7
          %s486 = sand.u32 %s37, 127
          %s487 = sadd.s32 %s485, %s36
          %s488 = smul.u32 %s487, 128
          %s489 = sshra.s32 %s37, 7
          %s490 = sand.u32 %s37, 127
          %s491 = sadd.s32 %s488, %s490
          %s492 = sld [smem:[#allocation6 + %s491]]
        $region44: #{llada_block_forward.5} parent=27 // pred_fallthru
          _
      $region28: #{llada_block_forward.5} parent=5 // pred_fallthru
        _
      %p493 = scmp.le.s32.totalorder 1, %s29
      %p494 = scmp.lt.s32.totalorder %s29, 5
      %p495 = pnand %p493, %p494
      %p496 = pneg %p495
      // Predicated region
      $region45: #{llada_block_forward.5} parent=5 // pred_check
        _
      $region46: #{llada_block_forward.5} parent=5 // pred_check_branch
        %498 = sbr.rel (%p495) target = $region48
      $region47: #{llada_block_forward.5} parent=5 // pred_region
        %s499 = ssub.s32 %s29, 1
        %s500 = smul.u32 4, %s39
        %p501 = scmp.lt.s32.totalorder %s500, 3
        %s502 = scalar_select %p501, %s500, 3
        %s503 = smul.addr %s502, 8
        %s504 = scalar_lea.vmem %s2, %s503
        %p505 = pneg %p74
        %p506 = pneg %p71
        %s507 = smul.u32 4, %s39
        %p508 = scmp.lt.s32.totalorder %s507, 3
        %s509 = scalar_select %p508, %s507, 3
        %s510 = smul.addr %s509, 8
        %s511 = scalar_lea.vmem %s3, %s510
        %p512 = pneg %p100
        %p513 = pneg %p97
        %p514 = pneg %p121
        %p515 = pneg %p118
        %s516 = sshra.s32 %s40, 7
        %s517 = sand.u32 %s40, 127
        %s518 = sadd.s32 %s516, %s39
        %s519 = smul.u32 %s518, 128
        %s520 = sshra.s32 %s40, 7
        %s521 = sand.u32 %s40, 127
        %s522 = sadd.s32 %s519, %s521
        %s523 = sld [smem:[#allocation5 + %s522]]
        %s524 = sld [smem:[#allocation6 + %s522]]
        %s525 = smul.u32 %s41, %s523
        %s526 = smul.u32 2, %s525
        %p527 = scmp.lt.s32.totalorder %s524, 3
        %s528 = scalar_select %p527, %s524, 3
        %p529 = scmp.lt.s32.totalorder %s526, 1
        %s530 = scalar_select %p529, %s526, 1
        %s531 = smul.addr %s528, 32
        %s532 = sadd.s32 %s530, %s531
        %s533 = smul.addr %s532, 4
        %s534 = scalar_lea.vmem %s5, %s533
        %p535 = pneg %p169
        %p536 = pneg %p166
        %s537 = sshra.s32 %s40, 7
        %s538 = sand.u32 %s40, 127
        %s539 = sadd.s32 %s537, %s39
        %s540 = smul.u32 %s539, 128
        %s541 = sshra.s32 %s40, 7
        %s542 = sand.u32 %s40, 127
        %s543 = sadd.s32 %s540, %s542
        %s544 = sld [smem:[#allocation5 + %s543]]
        %s545 = sld [smem:[#allocation6 + %s543]]
        %s546 = smul.u32 %s41, %s544
        %s547 = smul.u32 2, %s546
        %p548 = scmp.lt.s32.totalorder %s545, 3
        %s549 = scalar_select %p548, %s545, 3
        %p550 = scmp.lt.s32.totalorder %s547, 1
        %s551 = scalar_select %p550, %s547, 1
        %s552 = smul.addr %s549, 2
        %s553 = sadd.s32 %s551, %s552
        %s554 = scalar_lea.vmem %s6, %s553
        %p555 = pneg %p217
        %p556 = pneg %p214
        %s557 = sshra.s32 %s40, 7
        %s558 = sand.u32 %s40, 127
        %s559 = sadd.s32 %s557, %s39
        %s560 = smul.u32 %s559, 128
        %s561 = sshra.s32 %s40, 7
        %s562 = sand.u32 %s40, 127
        %s563 = sadd.s32 %s560, %s562
        %s564 = sld [smem:[#allocation5 + %s563]]
        %s565 = sld [smem:[#allocation6 + %s563]]
        %s566 = smul.u32 %s41, %s564
        %s567 = smul.u32 32, %s566
        %p568 = scmp.lt.s32.totalorder %s565, 3
        %s569 = scalar_select %p568, %s565, 3
        %p570 = scmp.lt.s32.totalorder %s567, 31
        %s571 = scalar_select %p570, %s567, 31
        %s572 = smul.addr %s569, 32
        %s573 = sadd.s32 %s571, %s572
        %s574 = smul.addr %s573, 4
        %s575 = scalar_lea.vmem %s7, %s574
        %p576 = pneg %p265
        %p577 = pneg %p262
        %s578 = sshra.s32 %s40, 7
        %s579 = sand.u32 %s40, 127
        %s580 = sadd.s32 %s578, %s39
        %s581 = smul.u32 %s580, 128
        %s582 = sshra.s32 %s40, 7
        %s583 = sand.u32 %s40, 127
        %s584 = sadd.s32 %s581, %s583
        %s585 = sld [smem:[#allocation6 + %s584]]
        %p586 = scmp.lt.s32.totalorder %s585, 3
        %s587 = scalar_select %p586, %s585, 3
        %s588 = scalar_lea.vmem %s8, %s587
        %p589 = pneg %p307
        %p590 = pneg %p304
        %p591 = pneg %p333
        %p592 = pneg %p330
        %s593 = smul.u32 4, %s39
        %p594 = scmp.lt.s32.totalorder %s593, 3
        %s595 = scalar_select %p594, %s593, 3
        %s596 = smul.addr %s595, 8
        %s597 = scalar_lea.vmem %s2, %s596
        %s598 = smul.u32 4, %s39
        %s599 = smul.u32 4, %s39
        %p600 = scmp.lt.s32.totalorder %s599, 3
        %s601 = scalar_select %p600, %s599, 3
        %s602 = smul.addr %s601, 8
        %s603 = scalar_lea.vmem %s3, %s602
        %s604 = smul.u32 4, %s39
        %s605 = sshra.s32 %s40, 7
        %s606 = sand.u32 %s40, 127
        %s607 = sadd.s32 %s605, %s39
        %s608 = smul.u32 %s607, 128
        %s609 = sshra.s32 %s40, 7
        %s610 = sand.u32 %s40, 127
        %s611 = sadd.s32 %s608, %s610
        %s612 = sld [smem:[#allocation5 + %s611]]
        %s613 = sld [smem:[#allocation6 + %s611]]
        %s614 = smul.u32 %s41, %s612
        %s615 = smul.u32 2, %s614
        %p616 = scmp.lt.s32.totalorder %s613, 3
        %s617 = scalar_select %p616, %s613, 3
        %p618 = scmp.lt.s32.totalorder %s615, 1
        %s619 = scalar_select %p618, %s615, 1
        %s620 = smul.addr %s617, 32
        %s621 = sadd.s32 %s619, %s620
        %s622 = smul.addr %s621, 4
        %s623 = scalar_lea.vmem %s5, %s622
        %s624 = sshra.s32 %s40, 7
        %s625 = sand.u32 %s40, 127
        %s626 = sadd.s32 %s624, %s39
        %s627 = smul.u32 %s626, 128
        %s628 = sshra.s32 %s40, 7
        %s629 = sand.u32 %s40, 127
        %s630 = sadd.s32 %s627, %s629
        %s631 = sld [smem:[#allocation5 + %s630]]
        %s632 = sld [smem:[#allocation6 + %s630]]
        %s633 = smul.u32 %s41, %s631
        %s634 = smul.u32 2, %s633
        %s635 = sshra.s32 %s40, 7
        %s636 = sand.u32 %s40, 127
        %s637 = sadd.s32 %s635, %s39
        %s638 = smul.u32 %s637, 128
        %s639 = sshra.s32 %s40, 7
        %s640 = sand.u32 %s40, 127
        %s641 = sadd.s32 %s638, %s640
        %s642 = sld [smem:[#allocation5 + %s641]]
        %s643 = sld [smem:[#allocation6 + %s641]]
        %s644 = smul.u32 %s41, %s642
        %s645 = smul.u32 2, %s644
        %p646 = scmp.lt.s32.totalorder %s643, 3
        %s647 = scalar_select %p646, %s643, 3
        %p648 = scmp.lt.s32.totalorder %s645, 1
        %s649 = scalar_select %p648, %s645, 1
        %s650 = smul.addr %s647, 2
        %s651 = sadd.s32 %s649, %s650
        %s652 = scalar_lea.vmem %s6, %s651
        %s653 = sshra.s32 %s40, 7
        %s654 = sand.u32 %s40, 127
        %s655 = sadd.s32 %s653, %s39
        %s656 = smul.u32 %s655, 128
        %s657 = sshra.s32 %s40, 7
        %s658 = sand.u32 %s40, 127
        %s659 = sadd.s32 %s656, %s658
        %s660 = sld [smem:[#allocation5 + %s659]]
        %s661 = sld [smem:[#allocation6 + %s659]]
        %s662 = smul.u32 %s41, %s660
        %s663 = smul.u32 2, %s662
        %s664 = sshra.s32 %s40, 7
        %s665 = sand.u32 %s40, 127
        %s666 = sadd.s32 %s664, %s39
        %s667 = smul.u32 %s666, 128
        %s668 = sshra.s32 %s40, 7
        %s669 = sand.u32 %s40, 127
        %s670 = sadd.s32 %s667, %s669
        %s671 = sld [smem:[#allocation5 + %s670]]
        %s672 = sld [smem:[#allocation6 + %s670]]
        %s673 = smul.u32 %s41, %s671
        %s674 = smul.u32 32, %s673
        %p675 = scmp.lt.s32.totalorder %s672, 3
        %s676 = scalar_select %p675, %s672, 3
        %p677 = scmp.lt.s32.totalorder %s674, 31
        %s678 = scalar_select %p677, %s674, 31
        %s679 = smul.addr %s676, 32
        %s680 = sadd.s32 %s678, %s679
        %s681 = smul.addr %s680, 4
        %s682 = scalar_lea.vmem %s7, %s681
        %s683 = sshra.s32 %s40, 7
        %s684 = sand.u32 %s40, 127
        %s685 = sadd.s32 %s683, %s39
        %s686 = smul.u32 %s685, 128
        %s687 = sshra.s32 %s40, 7
        %s688 = sand.u32 %s40, 127
        %s689 = sadd.s32 %s686, %s688
        %s690 = sld [smem:[#allocation5 + %s689]]
        %s691 = sld [smem:[#allocation6 + %s689]]
        %s692 = smul.u32 %s41, %s690
        %s693 = smul.u32 32, %s692
        %s694 = sshra.s32 %s40, 7
        %s695 = sand.u32 %s40, 127
        %s696 = sadd.s32 %s694, %s39
        %s697 = smul.u32 %s696, 128
        %s698 = sshra.s32 %s40, 7
        %s699 = sand.u32 %s40, 127
        %s700 = sadd.s32 %s697, %s699
        %s701 = sld [smem:[#allocation6 + %s700]]
        %p702 = scmp.lt.s32.totalorder %s701, 3
        %s703 = scalar_select %p702, %s701, 3
        %s704 = scalar_lea.vmem %s8, %s703
        %s705 = sshra.s32 %s40, 7
        %s706 = sand.u32 %s40, 127
        %s707 = sadd.s32 %s705, %s39
        %s708 = smul.u32 %s707, 128
        %s709 = sshra.s32 %s40, 7
        %s710 = sand.u32 %s40, 127
        %s711 = sadd.s32 %s708, %s710
        %s712 = sld [smem:[#allocation6 + %s711]]
        %s713 = smul.u32 4, %s39
        %p714 = scmp.eq.s32.totalorder %s40, 0
        %p715 = scmp.eq.s32.totalorder %s41, 0
        %p716 = pnand %p714, %p715
        %p717 = pneg %p716
        // Predicated region
        $region49: #{llada_block_forward.5} parent=47 // pred_check
          _
        $region50: #{llada_block_forward.5} parent=47 // pred_check_branch
          %719 = sbr.rel (%p716) target = $region52
        $region51: #{llada_block_forward.5} parent=47 // pred_region
          %720 = vst [vmem:[#allocation2] sm:$0xff] 0.0
          %721 = vst [vmem:[#allocation2 + $0x8] sm:$0xff] 0.0
          %722 = vst [vmem:[#allocation2 + $0x10] sm:$0xff] 0.0
          %723 = vst [vmem:[#allocation2 + $0x18] sm:$0xff] 0.0
          %v724 = vld [vmem:[%s597] sm:$0xff]
          %v725 = vld [vmem:[%s597 + $0x8] sm:$0xff]
          %v726 = vld [vmem:[%s597 + $0x10] sm:$0xff]
          %v727 = vld [vmem:[%s597 + $0x18] sm:$0xff]
          %v728 = vld [vmem:[%s4] sm:$0x1]
          %v729 = vmul.f32 %v724, %v724
          %v730 = vmul.f32 %v725, %v725
          %v731 = vmul.f32 %v726, %v726
          %v732 = vmul.f32 %v727, %v727
          %733 = vadd.xlane.f32.xlu0 %v729
          %v734 = vpop.xlane.xlu0 %733
          %735 = vadd.xlane.f32.xlu0 %v730
          %v736 = vpop.xlane.xlu0 %735
          %737 = vadd.xlane.f32.xlu0 %v731
          %v738 = vpop.xlane.xlu0 %737
          %739 = vadd.xlane.f32.xlu0 %v732
          %v740 = vpop.xlane.xlu0 %739
          %v741 = vrcp.pop 128.0
          %v742 = vmul.f32 128.0, %v741
          %v743 = vsub.f32 1.0, %v742
          %v744 = vmul.f32 %v741, %v743
          %v745 = vadd.f32 %v741, %v744
          %vm746 = vweird.f32 %v741
          %v747 = vsel %vm746, %v741, %v745
          %v748 = vmul.f32 %v734, %v747
          %v749 = vmul.f32 %v736, %v747
          %v750 = vmul.f32 %v738, %v747
          %v751 = vmul.f32 %v740, %v747
          %v752 = vadd.f32 %v748, 1e-06
          %v753 = vadd.f32 %v749, 1e-06
          %v754 = vadd.f32 %v750, 1e-06
          %v755 = vadd.f32 %v751, 1e-06
          %v756 = vrsqrt.pop %v752
          %v757 = vmul.f32 %v756, %v752
          %v758 = vmul.f32 %v757, %v756
          %v759 = vmul.f32 0.5, %v758
          %v760 = vsub.f32 1.5, %v759
          %v761 = vmul.f32 %v756, %v760
          %vm762 = vweird.f32 %v752
          %vm763 = vweird.f32 %v756
          %vm764 = vmor %vm762, %vm763
          %v765 = vsel %vm764, %v756, %v761
          %v766 = vrsqrt.pop %v753
          %v767 = vmul.f32 %v766, %v753
          %v768 = vmul.f32 %v767, %v766
          %v769 = vmul.f32 0.5, %v768
          %v770 = vsub.f32 1.5, %v769
          %v771 = vmul.f32 %v766, %v770
          %vm772 = vweird.f32 %v753
          %vm773 = vweird.f32 %v766
          %vm774 = vmor %vm772, %vm773
          %v775 = vsel %vm774, %v766, %v771
          %v776 = vrsqrt.pop %v754
          %v777 = vmul.f32 %v776, %v754
          %v778 = vmul.f32 %v777, %v776
          %v779 = vmul.f32 0.5, %v778
          %v780 = vsub.f32 1.5, %v779
          %v781 = vmul.f32 %v776, %v780
          %vm782 = vweird.f32 %v754
          %vm783 = vweird.f32 %v776
          %vm784 = vmor %vm782, %vm783
          %v785 = vsel %vm784, %v776, %v781
          %v786 = vrsqrt.pop %v755
          %v787 = vmul.f32 %v786, %v755
          %v788 = vmul.f32 %v787, %v786
          %v789 = vmul.f32 0.5, %v788
          %v790 = vsub.f32 1.5, %v789
          %v791 = vmul.f32 %v786, %v790
          %vm792 = vweird.f32 %v755
          %vm793 = vweird.f32 %v786
          %vm794 = vmor %vm792, %vm793
          %v795 = vsel %vm794, %v786, %v791
          %v796 = vmul.f32 %v724, %v765
          %v797 = vmul.f32 %v725, %v775
          %v798 = vmul.f32 %v726, %v785
          %v799 = vmul.f32 %v727, %v795
          %v801 = vperm.slane %v728, 0
          %v803 = vmul.f32 %v796, %v801
          %v804 = vmul.f32 %v797, %v801
          %v805 = vmul.f32 %v798, %v801
          %v806 = vmul.f32 %v799, %v801
          %v807 = vpack.c.bf16 %v803, %v803
          %v808 = vpack.c.bf16 %v804, %v804
          %v809 = vpack.c.bf16 %v805, %v805
          %v810 = vpack.c.bf16 %v806, %v806
          %811 = vst [vmem:[#allocation3] sm:$0xf] %v807
          %812 = vst [vmem:[#allocation3 + $0x4] sm:$0xf] %v808
          %813 = vst [vmem:[#allocation3 + $0x8] sm:$0xf] %v809
          %814 = vst [vmem:[#allocation3 + $0xc] sm:$0xf] %v810
        $region52: #{llada_block_forward.5} parent=47 // pred_fallthru
          _
        %s815 = sshra.s32 %s40, 7
        %s816 = sand.u32 %s40, 127
        %s817 = sadd.s32 %s815, %s39
        %s818 = smul.u32 %s817, 128
        %s819 = sshra.s32 %s40, 7
        %s820 = sand.u32 %s40, 127
        %s821 = sadd.s32 %s818, %s820
        %s822 = sld [smem:[#allocation5 + %s821]]
        %p823 = scmp.ne.s32.totalorder %s822, 0
        // Predicated region
        $region53: #{llada_block_forward.5} parent=47 // pred_check
          %p824 = pneg %p823
        $region54: #{llada_block_forward.5} parent=47 // pred_check_branch
          %826 = sbr.rel (%p824) target = $region56
        $region55: #{llada_block_forward.5} parent=47 // pred_region
          %v827 = vld [vmem:[#allocation3] sm:$0xf]
          %v828 = vld [vmem:[#allocation3 + $0x4] sm:$0xf]
          %v829 = vld [vmem:[#allocation3 + $0x8] sm:$0xf]
          %v830 = vld [vmem:[#allocation3 + $0xc] sm:$0xf]
          %v831 = vld [vmem:[%s623] sm:$0xff]
          %v832 = vld [vmem:[%s623 + $0x8] sm:$0xff]
          %v833 = vld [vmem:[%s623 + $0x10] sm:$0xff]
          %v834 = vld [vmem:[%s623 + $0x18] sm:$0xff]
          %v835 = vld [vmem:[%s623 + $0x20] sm:$0xff]
          %v836 = vld [vmem:[%s623 + $0x28] sm:$0xff]
          %v837 = vld [vmem:[%s623 + $0x30] sm:$0xff]
          %v838 = vld [vmem:[%s623 + $0x38] sm:$0xff]
          %v839 = vld [vmem:[%s623 + $0x40] sm:$0xff]
          %v840 = vld [vmem:[%s623 + $0x48] sm:$0xff]
          %v841 = vld [vmem:[%s623 + $0x50] sm:$0xff]
          %v842 = vld [vmem:[%s623 + $0x58] sm:$0xff]
          %v843 = vld [vmem:[%s623 + $0x60] sm:$0xff]
          %v844 = vld [vmem:[%s623 + $0x68] sm:$0xff]
          %v845 = vld [vmem:[%s623 + $0x70] sm:$0xff]
          %v846 = vld [vmem:[%s623 + $0x78] sm:$0xff]
          %v847 = vld [vmem:[%s652] sm:$0x3]
          %v849 = vperm.slane %v847, 0
          %v850 = vperm.slane %v847, 1
          %v857 = vunpack.c.l.b16 %v827
          %v858 = vunpack.c.l.b16 %v828
          %v859 = vunpack.c.l.b16 %v829
          %v860 = vunpack.c.l.b16 %v830
          %v861 = vpack.c.b16 %v858, %v857
          %v862 = vpack.c.b16 %v860, %v859
          %v881 = vunpack.c.l.b16 %v831
          %v882 = vunpack.c.h.b16 %v831
          %v883 = vunpack.c.l.b16 %v832
          %v884 = vunpack.c.h.b16 %v832
          %v885 = vunpack.c.l.b16 %v833
          %v886 = vunpack.c.h.b16 %v833
          %v887 = vunpack.c.l.b16 %v834
          %v888 = vunpack.c.h.b16 %v834
          %v889 = vunpack.c.l.b16 %v835
          %v890 = vunpack.c.h.b16 %v835
          %v891 = vunpack.c.l.b16 %v836
          %v892 = vunpack.c.h.b16 %v836
          %v893 = vunpack.c.l.b16 %v837
          %v894 = vunpack.c.h.b16 %v837
          %v895 = vunpack.c.l.b16 %v838
          %v896 = vunpack.c.h.b16 %v838
          %v897 = vunpack.c.l.b16 %v839
          %v898 = vunpack.c.h.b16 %v839
          %v899 = vunpack.c.l.b16 %v840
          %v900 = vunpack.c.h.b16 %v840
          %v901 = vunpack.c.l.b16 %v841
          %v902 = vunpack.c.h.b16 %v841
          %v903 = vunpack.c.l.b16 %v842
          %v904 = vunpack.c.h.b16 %v842
          %v905 = vunpack.c.l.b16 %v843
          %v906 = vunpack.c.h.b16 %v843
          %v907 = vunpack.c.l.b16 %v844
          %v908 = vunpack.c.h.b16 %v844
          %v909 = vunpack.c.l.b16 %v845
          %v910 = vunpack.c.h.b16 %v845
          %v911 = vunpack.c.l.b16 %v846
          %v912 = vunpack.c.h.b16 %v846
          %v913 = vpack.c.b16 %v883, %v881
          %v914 = vpack.c.b16 %v884, %v882
          %v915 = vpack.c.b16 %v887, %v885
          %v916 = vpack.c.b16 %v888, %v886
          %v917 = vpack.c.b16 %v891, %v889
          %v918 = vpack.c.b16 %v892, %v890
          %v919 = vpack.c.b16 %v895, %v893
          %v920 = vpack.c.b16 %v896, %v894
          %v921 = vpack.c.b16 %v899, %v897
          %v922 = vpack.c.b16 %v900, %v898
          %v923 = vpack.c.b16 %v903, %v901
          %v924 = vpack.c.b16 %v904, %v902
          %v925 = vpack.c.b16 %v907, %v905
          %v926 = vpack.c.b16 %v908, %v906
          %v927 = vpack.c.b16 %v911, %v909
          %v928 = vpack.c.b16 %v912, %v910
          %945 = vmatpush.bf16.msra.mxu0 %v927
          %946 = vmatpush.bf16.msra.mxu0 %v925
          %947 = vmatpush.bf16.msra.mxu0 %v923
          %948 = vmatpush.bf16.msra.mxu0 %v921
          %949 = vmatpush.bf16.msra.mxu0 %v919
          %950 = vmatpush.bf16.msra.mxu0 %v917
          %951 = vmatpush.bf16.msra.mxu0 %v915
          %952 = vmatpush.bf16.msra.mxu0 %v913
          %953 = vmatmul.bf16.gmra.mxu0 %v861
          %v954 = vpop.f32.mrf.mxu0
          %v955 = vadd.f32 %v849, %v954
          %v956 = vpop.f32.mrf.mxu0
          %v957 = vadd.f32 %v849, %v956
          %958 = vmatmul.bf16.gmra.mxu0 %v862
          %v959 = vpop.f32.mrf.mxu0
          %v960 = vadd.f32 %v849, %v959
          %v961 = vpop.f32.mrf.mxu0
          %v962 = vadd.f32 %v849, %v961
          %963 = vdwg.mxu0
          %964 = vmatpush.bf16.msra.mxu0 %v928
          %965 = vmatpush.bf16.msra.mxu0 %v926
          %966 = vmatpush.bf16.msra.mxu0 %v924
          %967 = vmatpush.bf16.msra.mxu0 %v922
          %968 = vmatpush.bf16.msra.mxu0 %v920
          %969 = vmatpush.bf16.msra.mxu0 %v918
          %970 = vmatpush.bf16.msra.mxu0 %v916
          %971 = vmatpush.bf16.msra.mxu0 %v914
          %972 = vmatmul.bf16.gmra.mxu0 %v861
          %v973 = vpop.f32.mrf.mxu0
          %v974 = vadd.f32 %v850, %v973
          %v975 = vpop.f32.mrf.mxu0
          %v976 = vadd.f32 %v850, %v975
          %977 = vmatmul.bf16.gmra.mxu0 %v862
          %v978 = vpop.f32.mrf.mxu0
          %v979 = vadd.f32 %v850, %v978
          %v980 = vpop.f32.mrf.mxu0
          %v981 = vadd.f32 %v850, %v980
          %982 = vdwg.mxu0
          %v983 = vmul.f32 %v955, %v955
          %v984 = vmul.f32 %v974, %v974
          %v985 = vmul.f32 %v957, %v957
          %v986 = vmul.f32 %v976, %v976
          %v987 = vmul.f32 %v960, %v960
          %v988 = vmul.f32 %v979, %v979
          %v989 = vmul.f32 %v962, %v962
          %v990 = vmul.f32 %v981, %v981
          %v991 = vmul.f32 %v955, %v983
          %v992 = vmul.f32 %v974, %v984
          %v993 = vmul.f32 %v957, %v985
          %v994 = vmul.f32 %v976, %v986
          %v995 = vmul.f32 %v960, %v987
          %v996 = vmul.f32 %v979, %v988
          %v997 = vmul.f32 %v962, %v989
          %v998 = vmul.f32 %v981, %v990
          %v999 = vmul.f32 %v991, 0.044715
          %v1000 = vmul.f32 %v992, 0.044715
          %v1001 = vmul.f32 %v993, 0.044715
          %v1002 = vmul.f32 %v994, 0.044715
          %v1003 = vmul.f32 %v995, 0.044715
          %v1004 = vmul.f32 %v996, 0.044715
          %v1005 = vmul.f32 %v997, 0.044715
          %v1006 = vmul.f32 %v998, 0.044715
          %v1007 = vadd.f32 %v955, %v999
          %v1008 = vadd.f32 %v974, %v1000
          %v1009 = vadd.f32 %v957, %v1001
          %v1010 = vadd.f32 %v976, %v1002
          %v1011 = vadd.f32 %v960, %v1003
          %v1012 = vadd.f32 %v979, %v1004
          %v1013 = vadd.f32 %v962, %v1005
          %v1014 = vadd.f32 %v981, %v1006
          %v1015 = vmul.f32 %v1007, 0.7978846
          %v1016 = vmul.f32 %v1008, 0.7978846
          %v1017 = vmul.f32 %v1009, 0.7978846
          %v1018 = vmul.f32 %v1010, 0.7978846
          %v1019 = vmul.f32 %v1011, 0.7978846
          %v1020 = vmul.f32 %v1012, 0.7978846
          %v1021 = vmul.f32 %v1013, 0.7978846
          %v1022 = vmul.f32 %v1014, 0.7978846
          %v1023 = vtanh.pop %v1015
          %v1024 = vtanh.pop %v1016
          %v1025 = vtanh.pop %v1017
          %v1026 = vtanh.pop %v1018
          %v1027 = vtanh.pop %v1019
          %v1028 = vtanh.pop %v1020
          %v1029 = vtanh.pop %v1021
          %v1030 = vtanh.pop %v1022
          %v1031 = vadd.f32 %v1023, 1.0
          %v1032 = vadd.f32 %v1024, 1.0
          %v1033 = vadd.f32 %v1025, 1.0
          %v1034 = vadd.f32 %v1026, 1.0
          %v1035 = vadd.f32 %v1027, 1.0
          %v1036 = vadd.f32 %v1028, 1.0
          %v1037 = vadd.f32 %v1029, 1.0
          %v1038 = vadd.f32 %v1030, 1.0
          %v1039 = vmul.f32 %v1031, 0.5
          %v1040 = vmul.f32 %v1032, 0.5
          %v1041 = vmul.f32 %v1033, 0.5
          %v1042 = vmul.f32 %v1034, 0.5
          %v1043 = vmul.f32 %v1035, 0.5
          %v1044 = vmul.f32 %v1036, 0.5
          %v1045 = vmul.f32 %v1037, 0.5
          %v1046 = vmul.f32 %v1038, 0.5
          %v1047 = vmul.f32 %v955, %v1039
          %v1048 = vmul.f32 %v974, %v1040
          %v1049 = vmul.f32 %v957, %v1041
          %v1050 = vmul.f32 %v976, %v1042
          %v1051 = vmul.f32 %v960, %v1043
          %v1052 = vmul.f32 %v979, %v1044
          %v1053 = vmul.f32 %v962, %v1045
          %v1054 = vmul.f32 %v981, %v1046
          %v1055 = vpack.c.bf16 %v1049, %v1047
          %v1056 = vpack.c.bf16 %v1050, %v1048
          %v1057 = vpack.c.bf16 %v1053, %v1051
          %v1058 = vpack.c.bf16 %v1054, %v1052
          %v1059 = vld [vmem:[%s682] sm:$0xf]
          %v1060 = vld [vmem:[%s682 + $0x4] sm:$0xf]
          %v1061 = vld [vmem:[%s682 + $0x8] sm:$0xf]
          %v1062 = vld [vmem:[%s682 + $0xc] sm:$0xf]
          %v1063 = vld [vmem:[%s682 + $0x10] sm:$0xf]
          %v1064 = vld [vmem:[%s682 + $0x14] sm:$0xf]
          %v1065 = vld [vmem:[%s682 + $0x18] sm:$0xf]
          %v1066 = vld [vmem:[%s682 + $0x1c] sm:$0xf]
          %v1067 = vld [vmem:[%s682 + $0x20] sm:$0xf]
          %v1068 = vld [vmem:[%s682 + $0x24] sm:$0xf]
          %v1069 = vld [vmem:[%s682 + $0x28] sm:$0xf]
          %v1070 = vld [vmem:[%s682 + $0x2c] sm:$0xf]
          %v1071 = vld [vmem:[%s682 + $0x30] sm:$0xf]
          %v1072 = vld [vmem:[%s682 + $0x34] sm:$0xf]
          %v1073 = vld [vmem:[%s682 + $0x38] sm:$0xf]
          %v1074 = vld [vmem:[%s682 + $0x3c] sm:$0xf]
          %v1075 = vld [vmem:[%s682 + $0x40] sm:$0xf]
          %v1076 = vld [vmem:[%s682 + $0x44] sm:$0xf]
          %v1077 = vld [vmem:[%s682 + $0x48] sm:$0xf]
          %v1078 = vld [vmem:[%s682 + $0x4c] sm:$0xf]
          %v1079 = vld [vmem:[%s682 + $0x50] sm:$0xf]
          %v1080 = vld [vmem:[%s682 + $0x54] sm:$0xf]
          %v1081 = vld [vmem:[%s682 + $0x58] sm:$0xf]
          %v1082 = vld [vmem:[%s682 + $0x5c] sm:$0xf]
          %v1083 = vld [vmem:[%s682 + $0x60] sm:$0xf]
          %v1084 = vld [vmem:[%s682 + $0x64] sm:$0xf]
          %v1085 = vld [vmem:[%s682 + $0x68] sm:$0xf]
          %v1086 = vld [vmem:[%s682 + $0x6c] sm:$0xf]
          %v1087 = vld [vmem:[%s682 + $0x70] sm:$0xf]
          %v1088 = vld [vmem:[%s682 + $0x74] sm:$0xf]
          %v1089 = vld [vmem:[%s682 + $0x78] sm:$0xf]
          %v1090 = vld [vmem:[%s682 + $0x7c] sm:$0xf]
          %s1091 = scalar_select %p715, 1, 0
          %s1092 = scvt.s32.f32 %s1091
          %v1093 = vld [vmem:[%s704] sm:$0x1]
          %v1094 = vstv %s1092
          %v1095 = vmul.f32 %v1094, %v1093
          %v1097 = vperm.slane %v1095, 0
          %v1131 = vunpack.c.l.b16 %v1059
          %v1132 = vunpack.c.l.b16 %v1060
          %v1133 = vunpack.c.l.b16 %v1061
          %v1134 = vunpack.c.l.b16 %v1062
          %v1135 = vunpack.c.l.b16 %v1063
          %v1136 = vunpack.c.l.b16 %v1064
          %v1137 = vunpack.c.l.b16 %v1065
          %v1138 = vunpack.c.l.b16 %v1066
          %v1139 = vunpack.c.l.b16 %v1067
          %v1140 = vunpack.c.l.b16 %v1068
          %v1141 = vunpack.c.l.b16 %v1069
          %v1142 = vunpack.c.l.b16 %v1070
          %v1143 = vunpack.c.l.b16 %v1071
          %v1144 = vunpack.c.l.b16 %v1072
          %v1145 = vunpack.c.l.b16 %v1073
          %v1146 = vunpack.c.l.b16 %v1074
          %v1147 = vunpack.c.l.b16 %v1075
          %v1148 = vunpack.c.l.b16 %v1076
          %v1149 = vunpack.c.l.b16 %v1077
          %v1150 = vunpack.c.l.b16 %v1078
          %v1151 = vunpack.c.l.b16 %v1079
          %v1152 = vunpack.c.l.b16 %v1080
          %v1153 = vunpack.c.l.b16 %v1081
          %v1154 = vunpack.c.l.b16 %v1082
          %v1155 = vunpack.c.l.b16 %v1083
          %v1156 = vunpack.c.l.b16 %v1084
          %v1157 = vunpack.c.l.b16 %v1085
          %v1158 = vunpack.c.l.b16 %v1086
          %v1159 = vunpack.c.l.b16 %v1087
          %v1160 = vunpack.c.l.b16 %v1088
          %v1161 = vunpack.c.l.b16 %v1089
          %v1162 = vunpack.c.l.b16 %v1090
          %v1163 = vpack.c.b16 %v1132, %v1131
          %v1164 = vpack.c.b16 %v1134, %v1133
          %v1165 = vpack.c.b16 %v1136, %v1135
          %v1166 = vpack.c.b16 %v1138, %v1137
          %v1167 = vpack.c.b16 %v1140, %v1139
          %v1168 = vpack.c.b16 %v1142, %v1141
          %v1169 = vpack.c.b16 %v1144, %v1143
          %v1170 = vpack.c.b16 %v1146, %v1145
          %v1171 = vpack.c.b16 %v1148, %v1147
          %v1172 = vpack.c.b16 %v1150, %v1149
          %v1173 = vpack.c.b16 %v1152, %v1151
          %v1174 = vpack.c.b16 %v1154, %v1153
          %v1175 = vpack.c.b16 %v1156, %v1155
          %v1176 = vpack.c.b16 %v1158, %v1157
          %v1177 = vpack.c.b16 %v1160, %v1159
          %v1178 = vpack.c.b16 %v1162, %v1161
          %1195 = vmatpush.bf16.msra.mxu0 %v1170
          %1196 = vmatpush.bf16.msra.mxu0 %v1169
          %1197 = vmatpush.bf16.msra.mxu0 %v1168
          %1198 = vmatpush.bf16.msra.mxu0 %v1167
          %1199 = vmatpush.bf16.msra.mxu0 %v1166
          %1200 = vmatpush.bf16.msra.mxu0 %v1165
          %1201 = vmatpush.bf16.msra.mxu0 %v1164
          %1202 = vmatpush.bf16.msra.mxu0 %v1163
          %1203 = vmatmul.bf16.gmra.mxu0 %v1055
          %v1204 = vpop.f32.mrf.mxu0
          %v1205 = vadd.f32 %v1097, %v1204
          %v1206 = vpop.f32.mrf.mxu0
          %v1207 = vadd.f32 %v1097, %v1206
          %1208 = vmatmul.bf16.gmra.mxu0 %v1057
          %v1209 = vpop.f32.mrf.mxu0
          %v1210 = vadd.f32 %v1097, %v1209
          %v1211 = vpop.f32.mrf.mxu0
          %v1212 = vadd.f32 %v1097, %v1211
          %1213 = vdwg.mxu0
          %1214 = vmatpush.bf16.msra.mxu0 %v1178
          %1215 = vmatpush.bf16.msra.mxu0 %v1177
          %1216 = vmatpush.bf16.msra.mxu0 %v1176
          %1217 = vmatpush.bf16.msra.mxu0 %v1175
          %1218 = vmatpush.bf16.msra.mxu0 %v1174
          %1219 = vmatpush.bf16.msra.mxu0 %v1173
          %1220 = vmatpush.bf16.msra.mxu0 %v1172
          %1221 = vmatpush.bf16.msra.mxu0 %v1171
          %1222 = vmatmul.bf16.gmra.mxu0 %v1056
          %v1223 = vpop.f32.mrf.mxu0
          %v1224 = vadd.f32 %v1205, %v1223
          %v1225 = vpop.f32.mrf.mxu0
          %v1226 = vadd.f32 %v1207, %v1225
          %1227 = vmatmul.bf16.gmra.mxu0 %v1058
          %v1228 = vpop.f32.mrf.mxu0
          %v1229 = vadd.f32 %v1210, %v1228
          %v1230 = vpop.f32.mrf.mxu0
          %v1231 = vadd.f32 %v1212, %v1230
          %1232 = vdwg.mxu0
          %v1233 = vld [vmem:[%s603] sm:$0xff]
          %v1234 = vld [vmem:[%s603 + $0x8] sm:$0xff]
          %v1235 = vld [vmem:[%s603 + $0x10] sm:$0xff]
          %v1236 = vld [vmem:[%s603 + $0x18] sm:$0xff]
          %v1237 = vlaneseq
          %v1238 = vand.u32 %v1237, 127
          %v1239 = vstv %s40
          %vm1240 = vcmp.eq.s32.totalorder %v1238, %v1239
          %v1241 = vsel %vm1240, %v1233, 0.0
          %v1242 = vsel %vm1240, %v1234, 0.0
          %v1243 = vsel %vm1240, %v1235, 0.0
          %v1244 = vsel %vm1240, %v1236, 0.0
          %vm1245 = vcmask 31744
          %v1246 = vsel %vm1245, %v1241, 0.0
          %1247 = vadd.xlane.f32.xlu0 %v1246
          %v1248 = vpop.xlane.xlu0 %1247
          %v1249 = vsel %vm1245, %v1242, 0.0
          %1250 = vadd.xlane.f32.xlu0 %v1249
          %v1251 = vpop.xlane.xlu0 %1250
          %v1252 = vsel %vm1245, %v1243, 0.0
          %1253 = vadd.xlane.f32.xlu0 %v1252
          %v1254 = vpop.xlane.xlu0 %1253
          %v1255 = vsel %vm1245, %v1244, 0.0
          %1256 = vadd.xlane.f32.xlu0 %v1255
          %v1257 = vpop.xlane.xlu0 %1256
          %v1258 = vld [vmem:[#allocation2] sm:$0xff]
          %v1259 = vld [vmem:[#allocation2 + $0x8] sm:$0xff]
          %v1260 = vld [vmem:[#allocation2 + $0x10] sm:$0xff]
          %v1261 = vld [vmem:[#allocation2 + $0x18] sm:$0xff]
          %v1262 = vmul.f32 %v1248, %v1224
          %v1263 = vmul.f32 %v1251, %v1226
          %v1264 = vmul.f32 %v1254, %v1229
          %v1265 = vmul.f32 %v1257, %v1231
          %v1266 = vadd.f32 %v1258, %v1262
          %v1267 = vadd.f32 %v1259, %v1263
          %v1268 = vadd.f32 %v1260, %v1264
          %v1269 = vadd.f32 %v1261, %v1265
          %1270 = vst [vmem:[#allocation2] sm:$0xff] %v1266
          %1271 = vst [vmem:[#allocation2 + $0x8] sm:$0xff] %v1267
          %1272 = vst [vmem:[#allocation2 + $0x10] sm:$0xff] %v1268
          %1273 = vst [vmem:[#allocation2 + $0x18] sm:$0xff] %v1269
        $region56: #{llada_block_forward.5} parent=47 // pred_fallthru
          _
        %p1274 = scmp.eq.s32.totalorder %s40, 3
        %p1275 = pnand %p1274, %p715
        %p1276 = pneg %p1275
        // Predicated region
        $region57: #{llada_block_forward.5} parent=47 // pred_check
          _
        $region58: #{llada_block_forward.5} parent=47 // pred_check_branch
          %1278 = sbr.rel (%p1275) target = $region60
        $region59: #{llada_block_forward.5} parent=47 // pred_region
          %v1279 = vld [vmem:[%s597] sm:$0xff]
          %v1280 = vld [vmem:[%s597 + $0x8] sm:$0xff]
          %v1281 = vld [vmem:[%s597 + $0x10] sm:$0xff]
          %v1282 = vld [vmem:[%s597 + $0x18] sm:$0xff]
          %v1283 = vld [vmem:[#allocation2] sm:$0xff]
          %v1284 = vld [vmem:[#allocation2 + $0x8] sm:$0xff]
          %v1285 = vld [vmem:[#allocation2 + $0x10] sm:$0xff]
          %v1286 = vld [vmem:[#allocation2 + $0x18] sm:$0xff]
          %v1287 = vadd.f32 %v1279, %v1283
          %v1288 = vadd.f32 %v1280, %v1284
          %v1289 = vadd.f32 %v1281, %v1285
          %v1290 = vadd.f32 %v1282, %v1286
          %1291 = vst [vmem:[#allocation7] sm:$0xff] %v1287
          %1292 = vst [vmem:[#allocation7 + $0x8] sm:$0xff] %v1288
          %1293 = vst [vmem:[#allocation7 + $0x10] sm:$0xff] %v1289
          %1294 = vst [vmem:[#allocation7 + $0x18] sm:$0xff] %v1290
        $region60: #{llada_block_forward.5} parent=47 // pred_fallthru
          _
        // Predicated region
        $region61: #{llada_block_forward.5} parent=47 // pred_check
          %p1295 = pneg %p330
        $region62: #{llada_block_forward.5} parent=47 // pred_check_branch
          %1297 = sbr.rel (%p1295) target = $region64
        $region63: #{llada_block_forward.5} parent=47 // pred_region
          %s1298 = smul.u32 4, %s39
          %1300 = vsyncadd [#allocation8], 0
          %s1301 = smul.addr %s1298, 8
          %s1302 = scalar_lea.hbm %s9, %s1301
          %s1303 = sshll.u32 [#allocation7], 4
          %s1304 = int_to_ptr.vmem [resolvable:$true] %s1303
          %s1305 = sshll.u32 %s1302, 4
          %s1306 = int_to_ptr.hbm [resolvable:$true] %s1305
          %1311 = dma.vmem_to_hbm [thread:$0]  %s1304, 512, %s1306, [#allocation8], 128, 128, 8
        $region64: #{llada_block_forward.5} parent=47 // pred_fallthru
          _
        // Predicated region
        $region65: #{llada_block_forward.5} parent=47 // pred_check
          %p1312 = pneg %p330
        $region66: #{llada_block_forward.5} parent=47 // pred_check_branch
          %1314 = sbr.rel (%p1312) target = $region68
        $region67: #{llada_block_forward.5} parent=47 // pred_region
          %1316 = dma.done [#allocation8], 512
        $region68: #{llada_block_forward.5} parent=47 // pred_fallthru
          _
      $region48: #{llada_block_forward.5} parent=5 // pred_fallthru
        _
      %p1317 = scmp.le.s32.totalorder 2, %s29
      // Predicated region
      $region69: #{llada_block_forward.5} parent=5 // pred_check
        %p1318 = pneg %p1317
      $region70: #{llada_block_forward.5} parent=5 // pred_check_branch
        %1320 = sbr.rel (%p1318) target = $region72
      $region71: #{llada_block_forward.5} parent=5 // pred_region
        %s1321 = ssub.s32 %s29, 2
      $region72: #{llada_block_forward.5} parent=5 // pred_fallthru
        _
    $region6: #{llada_block_forward.5} parent=1 // loop_footer
      %s33 = sadd.s32 1, %s29
    $region7: #{llada_block_forward.5} parent=1 // loop_footer_branch
      %28 = sbr.rel target = $region3
    $region8: #{llada_block_forward.5} parent=1 // loop_exit
      _
    %1322 = vsyncpa [#allocation8], 1
    %s1323 = scalar_lea.sflag [#allocation8], 1
    %1324 = vsyncpa %s1323, 1

</llo_original>
